<compile_context>
chip_gen: v5e
topology: v5e:2x2
jax: 0.10.0
libtpu: 0.0.40
codegen_flags: <defaults>
</compile_context>

<pallas_src>
import functools

import jax
import jax.numpy as jnp
from jax import lax
from jax.experimental import pallas as pl
from jax.experimental.pallas import tpu as pltpu


# ------------------------------- Pallas kernel -------------------------------

def _repconvn_kernel(xflat_ref, w_ref, b_ref, out_ref, *, W, TM):
    """Fused (reparameterized) RepConvN: 3x3 conv + bias + SiLU on one M-tile.

    xflat_ref : (1, PE, C1)  VMEM  zero-padded image, flattened row-major
                                   (row stride = W+2), channels-last
    w_ref     : (9, C1, C2)  VMEM  fused 3x3 weights, tap-major (ky*3+kx)
    b_ref     : (1, C2)      VMEM  fused bias
    out_ref   : (1, TM, C2)  VMEM  flattened output rows for this tile
    """
    m = pl.program_id(1)
    base = pl.multiple_of(m * TM, 8)          # TM is a multiple of 8
    row = W + 2                               # flattened row stride
    C2 = out_ref.shape[-1]

    # One partial accumulator per kernel row (shorter serial add chain);
    # each tap is a single MXU matmul reused across all output channels.
    accs = [jnp.zeros((TM, C2), jnp.float32) for _ in range(3)]
    for ky in range(3):
        for kx in range(3):
            off = ky * row + kx
            slab = xflat_ref[0, pl.ds(base + off, TM), :]          # (TM, C1)
            accs[ky] = accs[ky] + jnp.dot(
                slab, w_ref[ky * 3 + kx],
                preferred_element_type=jnp.float32)                # MXU

    y = (accs[0] + accs[1]) + (accs[2] + b_ref[...])               # (TM, C2)
    y = y * jax.nn.sigmoid(y)                                      # SiLU (EUP)
    out_ref[0] = y.astype(out_ref.dtype)


# --------------------------------- wrapper ------------------------------------

def rep_conv_n(x, w_fused, b_fused, *, m_tile=512):
    """RepConvN forward (eval mode) with branches pre-fused into one 3x3 conv.

    x       : (N, C1, H, W) float32  (NCHW, like PyTorch)
    w_fused : (3, 3, C1, C2) HWIO, BN + 1x1 branch already folded in
    b_fused : (C2,)
    returns : (N, C2, H, W)
    """
    N, C1, H, W = x.shape
    C2 = w_fused.shape[-1]

    # Lane-dense layout: channels-last, spatial flattened onto the sublane axis.
    xt = jnp.transpose(x, (0, 2, 3, 1))                      # NHWC
    xpad = jnp.pad(xt, ((0, 0), (1, 1), (1, 1), (0, 0)))     # 'same' pad for 3x3
    P = (H + 2) * (W + 2)
    xflat = xpad.reshape(N, P, C1)

    # Flattened-output rows: r = h*(W+2) + w ; columns w >= W are discarded.
    L = H * (W + 2)
    TM = min(int(m_tile), ((L + 7) // 8) * 8)
    TM = max(8, (TM // 8) * 8)                               # multiple of 8
    Lpad = ((L + TM - 1) // TM) * TM
    MT = Lpad // TM
    PE = Lpad + 2 * (W + 2) + 2                              # rows read by last tile
    xflat = jnp.pad(xflat, ((0, 0), (0, PE - P), (0, 0)))

    w_taps = w_fused.reshape(9, C1, C2).astype(jnp.float32)  # (tap, Cin, Cout)
    b_row = b_fused.reshape(1, C2).astype(jnp.float32)

    kernel = functools.partial(_repconvn_kernel, W=W, TM=TM)

    # Rough VMEM budget (double-buffered blocks) -> scoped limit, capped for v7x.
    blk_bytes = (PE * C1 + TM * C2 + 9 * C1 * C2 + C2) * 4
    vmem_limit = int(min(max(4 * blk_bytes + (2 << 20), 16 << 20), 64 << 20))

    out_flat = pl.pallas_call(
        kernel,
        out_shape=jax.ShapeDtypeStruct((N, Lpad, C2), x.dtype),
        grid_spec=pltpu.PrefetchScalarGridSpec(
            num_scalar_prefetch=0,
            grid=(N, MT),
            in_specs=[
                # full padded image per batch element (re-used across M-tiles)
                pl.BlockSpec((1, PE, C1), lambda n, m: (n, 0, 0)),
                # fused weights / bias: whole arrays resident in VMEM
                pl.BlockSpec((9, C1, C2), lambda n, m: (0, 0, 0)),
                pl.BlockSpec((1, C2), lambda n, m: (0, 0)),
            ],
            out_specs=pl.BlockSpec((1, TM, C2), lambda n, m: (n, m, 0)),
        ),
        compiler_params=pltpu.CompilerParams(
            dimension_semantics=("parallel", "parallel"),
            vmem_limit_bytes=vmem_limit),
    )(xflat, w_taps, b_row)

    # Drop the two garbage columns per row and the Lpad padding, back to NCHW.
    out = out_flat[:, :L, :].reshape(N, H, W + 2, C2)[:, :, :W, :]
    return jnp.transpose(out, (0, 3, 1, 2))


# --------------------------- parameter construction ---------------------------

def _bn_params(key, c):
    k1, k2, k3, k4 = jax.random.split(key, 4)
    gamma = 1.0 + 0.1 * jax.random.normal(k1, (c,), jnp.float32)
    beta = 0.1 * jax.random.normal(k2, (c,), jnp.float32)
    mean = 0.1 * jax.random.normal(k3, (c,), jnp.float32)
    var = jax.random.uniform(k4, (c,), jnp.float32, minval=0.5, maxval=1.5)
    return gamma, beta, mean, var


def _fold_bn(w_hwio, gamma, beta, mean, var, eps=1e-5):
    s = gamma / jnp.sqrt(var + eps)               # (Cout,)
    return w_hwio * s, beta - mean * s            # broadcast on out-channel dim


def fuse_repconvn(w3, bn3, w1, bn1):
    """Fold eval-mode BN into each branch, then fold the 1x1 branch into the
    center tap of the 3x3 kernel (exact reparameterization)."""
    w3f, b3 = _fold_bn(w3, *bn3)
    w1f, b1 = _fold_bn(w1, *bn1)
    w = w3f.at[1, 1].add(w1f[0, 0])
    b = b3 + b1
    return w, b


def make_params(key, c1, c2):
    ks = jax.random.split(key, 4)
    w3 = 0.2 * jax.random.normal(ks[0], (3, 3, c1, c2), jnp.float32)  # conv1 (3x3), HWIO
    w1 = 0.2 * jax.random.normal(ks[1], (1, 1, c1, c2), jnp.float32)  # conv2 (1x1), HWIO
    bn3 = _bn_params(ks[2], c2)
    bn1 = _bn_params(ks[3], c2)
    return w3, bn3, w1, bn1


# ----------------------------- pure-JAX reference ------------------------------

def _conv_nchw(x, w_hwio, pad):
    return lax.conv_general_dilated(
        x, jnp.transpose(w_hwio, (3, 2, 0, 1)), (1, 1),
        [(pad, pad), (pad, pad)],
        dimension_numbers=('NCHW', 'OIHW', 'NCHW'))


def rep_conv_n_ref(x, w3, bn3, w1, bn1):
    """Two-branch reference: SiLU(BN3(conv3x3(x)) + BN1(conv1x1(x)))."""
    w3f, b3 = _fold_bn(w3, *bn3)
    w1f, b1 = _fold_bn(w1, *bn1)
    y = (_conv_nchw(x, w3f, 1) + b3[None, :, None, None]
         + _conv_nchw(x, w1f, 0) + b1[None, :, None, None])
    return y * jax.nn.sigmoid(y)


if __name__ == "__main__":
    key = jax.random.PRNGKey(0)
    kx, kp = jax.random.split(key)

    N, C1, H, W = 2, 4, 16, 16
    C2 = 8
    x = jax.random.normal(kx, (N, C1, H, W), jnp.float32)

    w3, bn3, w1, bn1 = make_params(kp, C1, C2)
    w_fused, b_fused = fuse_repconvn(w3, bn3, w1, bn1)

    out = rep_conv_n(x, w_fused, b_fused)
    out = jax.block_until_ready(out)

    ref = rep_conv_n_ref(x, w3, bn3, w1, bn1)
    assert out.shape == (N, C2, H, W)
    err = float(jnp.max(jnp.abs(out - ref)))
    assert jnp.allclose(out, ref, atol=1e-3, rtol=1e-3), err

    print("KERNEL_OK")
</pallas_src>

<mosaic_0001>
module attributes {stable_mosaic.version = 11 : i64} {
  func.func @_repconvn_kernel(%arg0: i32, %arg1: i32, %arg2: memref<1x326x4xf32, #tpu.memory_space<vmem>>, %arg3: memref<9x4x8xf32, #tpu.memory_space<vmem>>, %arg4: memref<1x8xf32, #tpu.memory_space<vmem>>, %arg5: memref<1x288x8xf32, #tpu.memory_space<vmem>>) attributes {dimension_semantics = [#tpu.dimension_semantics<parallel>, #tpu.dimension_semantics<parallel>], iteration_bounds = array<i64: 2, 1>, scalar_prefetch = 0 : i64, scratch_operands = 0 : i64, tpu.core_type = #tpu.core_type<tc>, window_params = [{transform_indices = @transform_0, window_bounds = array<i64: 1, 326, 4>}, {pipeline_mode = #tpu.pipeline_mode<synchronous>, transform_indices = @transform_1, window_bounds = array<i64: 9, 4, 8>}, {pipeline_mode = #tpu.pipeline_mode<synchronous>, transform_indices = @transform_2, window_bounds = array<i64: 1, 8>}, {transform_indices = @transform_3, window_bounds = array<i64: 1, 288, 8>}]} {
    %c288_i32 = arith.constant 288 : i32
    %0 = arith.muli %arg1, %c288_i32 : i32
    %1 = tpu.assume_multiple %0, 8 : i32
    %cst = arith.constant 0.000000e+00 : f32
    %2 = vector.broadcast %cst : f32 to vector<288x8xf32>
    %cst_0 = arith.constant 0.000000e+00 : f32
    %3 = vector.broadcast %cst_0 : f32 to vector<288x8xf32>
    %cst_1 = arith.constant 0.000000e+00 : f32
    %4 = vector.broadcast %cst_1 : f32 to vector<288x8xf32>
    %c0_i32 = arith.constant 0 : i32
    %5 = arith.addi %1, %c0_i32 : i32
    %c0 = arith.constant 0 : index
    %6 = arith.index_cast %5 : i32 to index
    %c0_2 = arith.constant 0 : index
    %7 = vector.load %arg2[%c0, %6, %c0_2] : memref<1x326x4xf32, #tpu.memory_space<vmem>>, vector<1x288x4xf32>
    %8 = vector.shape_cast %7 : vector<1x288x4xf32> to vector<288x4xf32>
    %c0_3 = arith.constant 0 : index
    %c0_4 = arith.constant 0 : index
    %c0_5 = arith.constant 0 : index
    %9 = vector.load %arg3[%c0_3, %c0_4, %c0_5] : memref<9x4x8xf32, #tpu.memory_space<vmem>>, vector<1x4x8xf32>
    %10 = vector.shape_cast %9 : vector<1x4x8xf32> to vector<4x8xf32>
    %cst_6 = arith.constant dense<0.000000e+00> : vector<288x8xf32>
    %11 = tpu.matmul %8, %10, %cst_6 {dimension_numbers = #tpu.dot_dimension_numbers<[1], [0], [0], [1], [0, 0, 1, 1], [], []>} : vector<288x4xf32>, vector<4x8xf32>, vector<288x8xf32> -> vector<288x8xf32>
    %12 = arith.addf %2, %11 : vector<288x8xf32>
    %c1_i32 = arith.constant 1 : i32
    %13 = arith.addi %1, %c1_i32 : i32
    %c0_7 = arith.constant 0 : index
    %14 = arith.index_cast %13 : i32 to index
    %c0_8 = arith.constant 0 : index
    %15 = vector.load %arg2[%c0_7, %14, %c0_8] : memref<1x326x4xf32, #tpu.memory_space<vmem>>, vector<1x288x4xf32>
    %16 = vector.shape_cast %15 : vector<1x288x4xf32> to vector<288x4xf32>
    %c1 = arith.constant 1 : index
    %c0_9 = arith.constant 0 : index
    %c0_10 = arith.constant 0 : index
    %17 = vector.load %arg3[%c1, %c0_9, %c0_10] : memref<9x4x8xf32, #tpu.memory_space<vmem>>, vector<1x4x8xf32>
    %18 = vector.shape_cast %17 : vector<1x4x8xf32> to vector<4x8xf32>
    %cst_11 = arith.constant dense<0.000000e+00> : vector<288x8xf32>
    %19 = tpu.matmul %16, %18, %cst_11 {dimension_numbers = #tpu.dot_dimension_numbers<[1], [0], [0], [1], [0, 0, 1, 1], [], []>} : vector<288x4xf32>, vector<4x8xf32>, vector<288x8xf32> -> vector<288x8xf32>
    %20 = arith.addf %12, %19 : vector<288x8xf32>
    %c2_i32 = arith.constant 2 : i32
    %21 = arith.addi %1, %c2_i32 : i32
    %c0_12 = arith.constant 0 : index
    %22 = arith.index_cast %21 : i32 to index
    %c0_13 = arith.constant 0 : index
    %23 = vector.load %arg2[%c0_12, %22, %c0_13] : memref<1x326x4xf32, #tpu.memory_space<vmem>>, vector<1x288x4xf32>
    %24 = vector.shape_cast %23 : vector<1x288x4xf32> to vector<288x4xf32>
    %c2 = arith.constant 2 : index
    %c0_14 = arith.constant 0 : index
    %c0_15 = arith.constant 0 : index
    %25 = vector.load %arg3[%c2, %c0_14, %c0_15] : memref<9x4x8xf32, #tpu.memory_space<vmem>>, vector<1x4x8xf32>
    %26 = vector.shape_cast %25 : vector<1x4x8xf32> to vector<4x8xf32>
    %cst_16 = arith.constant dense<0.000000e+00> : vector<288x8xf32>
    %27 = tpu.matmul %24, %26, %cst_16 {dimension_numbers = #tpu.dot_dimension_numbers<[1], [0], [0], [1], [0, 0, 1, 1], [], []>} : vector<288x4xf32>, vector<4x8xf32>, vector<288x8xf32> -> vector<288x8xf32>
    %28 = arith.addf %20, %27 : vector<288x8xf32>
    %c18_i32 = arith.constant 18 : i32
    %29 = arith.addi %1, %c18_i32 : i32
    %c0_17 = arith.constant 0 : index
    %30 = arith.index_cast %29 : i32 to index
    %c0_18 = arith.constant 0 : index
    %31 = vector.load %arg2[%c0_17, %30, %c0_18] : memref<1x326x4xf32, #tpu.memory_space<vmem>>, vector<1x288x4xf32>
    %32 = vector.shape_cast %31 : vector<1x288x4xf32> to vector<288x4xf32>
    %c3 = arith.constant 3 : index
    %c0_19 = arith.constant 0 : index
    %c0_20 = arith.constant 0 : index
    %33 = vector.load %arg3[%c3, %c0_19, %c0_20] : memref<9x4x8xf32, #tpu.memory_space<vmem>>, vector<1x4x8xf32>
    %34 = vector.shape_cast %33 : vector<1x4x8xf32> to vector<4x8xf32>
    %cst_21 = arith.constant dense<0.000000e+00> : vector<288x8xf32>
    %35 = tpu.matmul %32, %34, %cst_21 {dimension_numbers = #tpu.dot_dimension_numbers<[1], [0], [0], [1], [0, 0, 1, 1], [], []>} : vector<288x4xf32>, vector<4x8xf32>, vector<288x8xf32> -> vector<288x8xf32>
    %36 = arith.addf %3, %35 : vector<288x8xf32>
    %c19_i32 = arith.constant 19 : i32
    %37 = arith.addi %1, %c19_i32 : i32
    %c0_22 = arith.constant 0 : index
    %38 = arith.index_cast %37 : i32 to index
    %c0_23 = arith.constant 0 : index
    %39 = vector.load %arg2[%c0_22, %38, %c0_23] : memref<1x326x4xf32, #tpu.memory_space<vmem>>, vector<1x288x4xf32>
    %40 = vector.shape_cast %39 : vector<1x288x4xf32> to vector<288x4xf32>
    %c4 = arith.constant 4 : index
    %c0_24 = arith.constant 0 : index
    %c0_25 = arith.constant 0 : index
    %41 = vector.load %arg3[%c4, %c0_24, %c0_25] : memref<9x4x8xf32, #tpu.memory_space<vmem>>, vector<1x4x8xf32>
    %42 = vector.shape_cast %41 : vector<1x4x8xf32> to vector<4x8xf32>
    %cst_26 = arith.constant dense<0.000000e+00> : vector<288x8xf32>
    %43 = tpu.matmul %40, %42, %cst_26 {dimension_numbers = #tpu.dot_dimension_numbers<[1], [0], [0], [1], [0, 0, 1, 1], [], []>} : vector<288x4xf32>, vector<4x8xf32>, vector<288x8xf32> -> vector<288x8xf32>
    %44 = arith.addf %36, %43 : vector<288x8xf32>
    %c20_i32 = arith.constant 20 : i32
    %45 = arith.addi %1, %c20_i32 : i32
    %c0_27 = arith.constant 0 : index
    %46 = arith.index_cast %45 : i32 to index
    %c0_28 = arith.constant 0 : index
    %47 = vector.load %arg2[%c0_27, %46, %c0_28] : memref<1x326x4xf32, #tpu.memory_space<vmem>>, vector<1x288x4xf32>
    %48 = vector.shape_cast %47 : vector<1x288x4xf32> to vector<288x4xf32>
    %c5 = arith.constant 5 : index
    %c0_29 = arith.constant 0 : index
    %c0_30 = arith.constant 0 : index
    %49 = vector.load %arg3[%c5, %c0_29, %c0_30] : memref<9x4x8xf32, #tpu.memory_space<vmem>>, vector<1x4x8xf32>
    %50 = vector.shape_cast %49 : vector<1x4x8xf32> to vector<4x8xf32>
    %cst_31 = arith.constant dense<0.000000e+00> : vector<288x8xf32>
    %51 = tpu.matmul %48, %50, %cst_31 {dimension_numbers = #tpu.dot_dimension_numbers<[1], [0], [0], [1], [0, 0, 1, 1], [], []>} : vector<288x4xf32>, vector<4x8xf32>, vector<288x8xf32> -> vector<288x8xf32>
    %52 = arith.addf %44, %51 : vector<288x8xf32>
    %c36_i32 = arith.constant 36 : i32
    %53 = arith.addi %1, %c36_i32 : i32
    %c0_32 = arith.constant 0 : index
    %54 = arith.index_cast %53 : i32 to index
    %c0_33 = arith.constant 0 : index
    %55 = vector.load %arg2[%c0_32, %54, %c0_33] : memref<1x326x4xf32, #tpu.memory_space<vmem>>, vector<1x288x4xf32>
    %56 = vector.shape_cast %55 : vector<1x288x4xf32> to vector<288x4xf32>
    %c6 = arith.constant 6 : index
    %c0_34 = arith.constant 0 : index
    %c0_35 = arith.constant 0 : index
    %57 = vector.load %arg3[%c6, %c0_34, %c0_35] : memref<9x4x8xf32, #tpu.memory_space<vmem>>, vector<1x4x8xf32>
    %58 = vector.shape_cast %57 : vector<1x4x8xf32> to vector<4x8xf32>
    %cst_36 = arith.constant dense<0.000000e+00> : vector<288x8xf32>
    %59 = tpu.matmul %56, %58, %cst_36 {dimension_numbers = #tpu.dot_dimension_numbers<[1], [0], [0], [1], [0, 0, 1, 1], [], []>} : vector<288x4xf32>, vector<4x8xf32>, vector<288x8xf32> -> vector<288x8xf32>
    %60 = arith.addf %4, %59 : vector<288x8xf32>
    %c37_i32 = arith.constant 37 : i32
    %61 = arith.addi %1, %c37_i32 : i32
    %c0_37 = arith.constant 0 : index
    %62 = arith.index_cast %61 : i32 to index
    %c0_38 = arith.constant 0 : index
    %63 = vector.load %arg2[%c0_37, %62, %c0_38] : memref<1x326x4xf32, #tpu.memory_space<vmem>>, vector<1x288x4xf32>
    %64 = vector.shape_cast %63 : vector<1x288x4xf32> to vector<288x4xf32>
    %c7 = arith.constant 7 : index
    %c0_39 = arith.constant 0 : index
    %c0_40 = arith.constant 0 : index
    %65 = vector.load %arg3[%c7, %c0_39, %c0_40] : memref<9x4x8xf32, #tpu.memory_space<vmem>>, vector<1x4x8xf32>
    %66 = vector.shape_cast %65 : vector<1x4x8xf32> to vector<4x8xf32>
    %cst_41 = arith.constant dense<0.000000e+00> : vector<288x8xf32>
    %67 = tpu.matmul %64, %66, %cst_41 {dimension_numbers = #tpu.dot_dimension_numbers<[1], [0], [0], [1], [0, 0, 1, 1], [], []>} : vector<288x4xf32>, vector<4x8xf32>, vector<288x8xf32> -> vector<288x8xf32>
    %68 = arith.addf %60, %67 : vector<288x8xf32>
    %c38_i32 = arith.constant 38 : i32
    %69 = arith.addi %1, %c38_i32 : i32
    %c0_42 = arith.constant 0 : index
    %70 = arith.index_cast %69 : i32 to index
    %c0_43 = arith.constant 0 : index
    %71 = vector.load %arg2[%c0_42, %70, %c0_43] : memref<1x326x4xf32, #tpu.memory_space<vmem>>, vector<1x288x4xf32>
    %72 = vector.shape_cast %71 : vector<1x288x4xf32> to vector<288x4xf32>
    %c8 = arith.constant 8 : index
    %c0_44 = arith.constant 0 : index
    %c0_45 = arith.constant 0 : index
    %73 = vector.load %arg3[%c8, %c0_44, %c0_45] : memref<9x4x8xf32, #tpu.memory_space<vmem>>, vector<1x4x8xf32>
    %74 = vector.shape_cast %73 : vector<1x4x8xf32> to vector<4x8xf32>
    %cst_46 = arith.constant dense<0.000000e+00> : vector<288x8xf32>
    %75 = tpu.matmul %72, %74, %cst_46 {dimension_numbers = #tpu.dot_dimension_numbers<[1], [0], [0], [1], [0, 0, 1, 1], [], []>} : vector<288x4xf32>, vector<4x8xf32>, vector<288x8xf32> -> vector<288x8xf32>
    %76 = arith.addf %68, %75 : vector<288x8xf32>
    %77 = arith.addf %28, %52 : vector<288x8xf32>
    %c0_47 = arith.constant 0 : index
    %c0_48 = arith.constant 0 : index
    %78 = vector.load %arg4[%c0_47, %c0_48] : memref<1x8xf32, #tpu.memory_space<vmem>>, vector<1x8xf32>
    %79 = vector.broadcast %78 : vector<1x8xf32> to vector<288x8xf32>
    %80 = arith.addf %76, %79 : vector<288x8xf32>
    %81 = arith.addf %77, %80 : vector<288x8xf32>
    %82 = arith.negf %81 : vector<288x8xf32>
    %83 = math.exp %82 : vector<288x8xf32>
    %cst_49 = arith.constant 1.000000e+00 : f32
    %84 = vector.broadcast %cst_49 : f32 to vector<288x8xf32>
    %85 = arith.addf %84, %83 : vector<288x8xf32>
    %86 = arith.divf %84, %85 : vector<288x8xf32>
    %87 = arith.mulf %81, %86 : vector<288x8xf32>
    %c0_50 = arith.constant 0 : index
    %c0_51 = arith.constant 0 : index
    %c0_52 = arith.constant 0 : index
    %88 = vector.load %arg5[%c0_50, %c0_51, %c0_52] : memref<1x288x8xf32, #tpu.memory_space<vmem>>, vector<1x288x8xf32>
    %89 = vector.shape_cast %88 : vector<1x288x8xf32> to vector<288x8xf32>
    %90 = vector.shape_cast %87 : vector<288x8xf32> to vector<1x288x8xf32>
    tpu.vector_store %arg5[%c0_50, %c0_51, %c0_52], %90 {strides = array<i32>} : memref<1x288x8xf32, #tpu.memory_space<vmem>>, vector<1x288x8xf32>,
    return
  }
  func.func @transform_0(%arg0: i32, %arg1: i32) -> (i32, i32, i32) {
    %c0_i32 = arith.constant 0 : i32
    %c0_i32_0 = arith.constant 0 : i32
    %c0_i32_1 = arith.constant 0 : i32
    return %arg0, %c0_i32, %c0_i32_0 : i32, i32, i32
  }
  func.func @transform_1(%arg0: i32, %arg1: i32) -> (i32, i32, i32) {
    %c0_i32 = arith.constant 0 : i32
    %c0_i32_0 = arith.constant 0 : i32
    %c0_i32_1 = arith.constant 0 : i32
    %c0_i32_2 = arith.constant 0 : i32
    return %c0_i32, %c0_i32_0, %c0_i32_1 : i32, i32, i32
  }
  func.func @transform_2(%arg0: i32, %arg1: i32) -> (i32, i32) {
    %c0_i32 = arith.constant 0 : i32
    %c0_i32_0 = arith.constant 0 : i32
    %c0_i32_1 = arith.constant 0 : i32
    return %c0_i32, %c0_i32_0 : i32, i32
  }
  func.func @transform_3(%arg0: i32, %arg1: i32) -> (i32, i32, i32) {
    %c0_i32 = arith.constant 0 : i32
    %c0_i32_0 = arith.constant 0 : i32
    return %arg0, %arg1, %c0_i32 : i32, i32, i32
  }
}

</mosaic_0001>

<llo_original>
// kernel: tpu_custom_call.1
$region0: #{tpu_custom_call.1}
  #allocation0 [shape = 'u32[]', space=smem, size = 0x4, offset = 0x4, fixed_abs, tag = 'smem constant byte address 0x4 - core index']
  #allocation1 [shape = 'u32[72,128]{1,0:T(1,128)}', space=vmem, size = 0x9000, scoped, tag = 'internal scratch']
  %s0 = inlined_call_operand.vmem [shape: f32[2,326,4], index: 0, kind: input, shape index: {}]
  %s1 = inlined_call_operand.vmem [shape: f32[9,4,8], index: 1, kind: input, shape index: {}]
  %s2 = inlined_call_operand.vmem [shape: f32[1,8], index: 2, kind: input, shape index: {}]
  %s3 = inlined_call_operand.vmem [shape: f32[2,288,8], index: 3, kind: output, shape index: {}]
  %s4 = sld [smem:[#allocation0]]
  $region45: #{tpu_custom_call.1} parent=0
    _
  %s6 = ssub.s32 1, %s4
  %s7 = scalar_select 0, %s6, %s4
  loop: start=0, step=1, limit=4
  $region2: #{tpu_custom_call.1} parent=0 // loop_pre_header
    _
  $region3: #{tpu_custom_call.1} parent=0 // loop_header
    %s9 = sphi 0, %s13
    %p10 = scmp.ge.s32.totalorder %s9, 4
    %s16 = sphi 0, %s28
    %s17 = sphi 0, %s24
    %s18 = sphi 0, %s16
    %s19 = sphi 0, %s17
    %s20 = sphi 0, %s18
    %s21 = sphi 0, %s19
    %s31 = sphi 0, %s33
    %s34 = sphi 0, %s31
    %s35 = sphi 0, %s34
    %s51 = sphi 0, %s35
    %s55 = sphi 0, %s55
    %s57 = sphi 0, %s55
    %s58 = sphi 0, %s57
    %s72 = sphi 0, %s58
    %s76 = sphi 0, %s76
    %s78 = sphi 0, %s76
    %s79 = sphi 0, %s78
    %s93 = sphi 0, %s79
    %s101 = sphi 0, %s103
    %s104 = sphi 0, %s101
    %s105 = sphi 0, %s104
    %s121 = sphi 0, %s105
  $region4: #{tpu_custom_call.1} parent=0 // loop_header_branch
    %12 = sbr.rel (%p10) target = $region8
  $region5: #{tpu_custom_call.1} parent=0 // loop_body
    %s14 = ssub.s32 %s9, 1
    %s15 = ssub.s32 %s9, 2
    %s22 = sadd.s32 1, %s17
    %p23 = scmp.ge.s32.totalorder %s22, 1
    %s24 = scalar_select %p23, 0, %s22
    %s25 = sadd.s32 1, %s16
    %s26 = scalar_select %p23, %s25, %s16
    %p27 = scmp.ge.s32.totalorder %s26, 2
    %s28 = scalar_select %p27, 0, %s26
    %s29 = ssub.s32 %s16, %s28
    %p30 = scmp.eq.s32.totalorder %s29, 0
    %s32 = sadd.s32 %s31, 1
    %s33 = scalar_select %p30, %s31, %s32
    %p36 = pneg %p30
    %p37 = scmp.eq.s32.totalorder %s9, 1
    %p38 = por %p36, %p37
    %p39 = scmp.ne.s32.totalorder %s31, %s34
    %p40 = scmp.eq.s32.totalorder %s9, 0
    %p41 = por %p39, %p40
    %p42 = scmp.ne.s32.totalorder %s31, %s34
    %p43 = scmp.eq.s32.totalorder %s14, 1
    %p44 = por %p42, %p43
    %p45 = scmp.ne.s32.totalorder %s34, %s35
    %p46 = scmp.eq.s32.totalorder %s14, 0
    %p47 = por %p45, %p46
    %p48 = scmp.ne.s32.totalorder %s34, %s35
    %p49 = scmp.eq.s32.totalorder %s15, 1
    %p50 = por %p48, %p49
    %p52 = scmp.ne.s32.totalorder %s35, %s51
    %p53 = scmp.eq.s32.totalorder %s15, 0
    %p54 = por %p52, %p53
    %s56 = sadd.s32 %s55, 1
    %p59 = scmp.eq.s32.totalorder %s9, 1
    %p60 = scmp.ne.s32.totalorder %s55, %s57
    %p61 = scmp.eq.s32.totalorder %s9, 0
    %p62 = por %p60, %p61
    %p63 = scmp.ne.s32.totalorder %s55, %s57
    %p64 = scmp.eq.s32.totalorder %s14, 1
    %p65 = por %p63, %p64
    %p66 = scmp.ne.s32.totalorder %s57, %s58
    %p67 = scmp.eq.s32.totalorder %s14, 0
    %p68 = por %p66, %p67
    %p69 = scmp.ne.s32.totalorder %s57, %s58
    %p70 = scmp.eq.s32.totalorder %s15, 1
    %p71 = por %p69, %p70
    %p73 = scmp.ne.s32.totalorder %s58, %s72
    %p74 = scmp.eq.s32.totalorder %s15, 0
    %p75 = por %p73, %p74
    %s77 = sadd.s32 %s76, 1
    %p80 = scmp.eq.s32.totalorder %s9, 1
    %p81 = scmp.ne.s32.totalorder %s76, %s78
    %p82 = scmp.eq.s32.totalorder %s9, 0
    %p83 = por %p81, %p82
    %p84 = scmp.ne.s32.totalorder %s76, %s78
    %p85 = scmp.eq.s32.totalorder %s14, 1
    %p86 = por %p84, %p85
    %p87 = scmp.ne.s32.totalorder %s78, %s79
    %p88 = scmp.eq.s32.totalorder %s14, 0
    %p89 = por %p87, %p88
    %p90 = scmp.ne.s32.totalorder %s78, %s79
    %p91 = scmp.eq.s32.totalorder %s15, 1
    %p92 = por %p90, %p91
    %p94 = scmp.ne.s32.totalorder %s79, %s93
    %p95 = scmp.eq.s32.totalorder %s15, 0
    %p96 = por %p94, %p95
    %s97 = ssub.s32 %s16, %s28
    %s98 = ssub.s32 %s17, %s24
    %s99 = sor.u32 %s97, %s98
    %p100 = scmp.eq.s32.totalorder %s99, 0
    %s102 = sadd.s32 %s101, 1
    %s103 = scalar_select %p100, %s101, %s102
    %p106 = pneg %p100
    %p107 = scmp.eq.s32.totalorder %s9, 1
    %p108 = por %p106, %p107
    %p109 = scmp.ne.s32.totalorder %s101, %s104
    %p110 = scmp.eq.s32.totalorder %s9, 0
    %p111 = por %p109, %p110
    %p112 = scmp.ne.s32.totalorder %s101, %s104
    %p113 = scmp.eq.s32.totalorder %s14, 1
    %p114 = por %p112, %p113
    %p115 = scmp.ne.s32.totalorder %s104, %s105
    %p116 = scmp.eq.s32.totalorder %s14, 0
    %p117 = por %p115, %p116
    %p118 = scmp.ne.s32.totalorder %s104, %s105
    %p119 = scmp.eq.s32.totalorder %s15, 1
    %p120 = por %p118, %p119
    %p122 = scmp.ne.s32.totalorder %s105, %s121
    %p123 = scmp.eq.s32.totalorder %s15, 0
    %p124 = por %p122, %p123
    %p125 = scmp.le.s32.totalorder 1, %s9
    %p126 = scmp.lt.s32.totalorder %s9, 3
    %p127 = pnand %p125, %p126
    %p128 = pneg %p127
    // Predicated region
    $region9: #{tpu_custom_call.1} parent=5 // pred_check
      _
    $region10: #{tpu_custom_call.1} parent=5 // pred_check_branch
      %130 = sbr.rel (%p127) target = $region12
    $region11: #{tpu_custom_call.1} parent=5 // pred_region
      %s131 = ssub.s32 %s9, 1
      // Predicated region
      $region13: #{tpu_custom_call.1} parent=11 // pred_check
        %p132 = pneg %p68
      $region14: #{tpu_custom_call.1} parent=11 // pred_check_branch
        %134 = sbr.rel (%p132) target = $region16
      $region15: #{tpu_custom_call.1} parent=11 // pred_region
        _
      $region16: #{tpu_custom_call.1} parent=11 // pred_fallthru
        _
      // Predicated region
      $region17: #{tpu_custom_call.1} parent=11 // pred_check
        %p135 = pneg %p89
      $region18: #{tpu_custom_call.1} parent=11 // pred_check_branch
        %137 = sbr.rel (%p135) target = $region20
      $region19: #{tpu_custom_call.1} parent=11 // pred_region
        _
      $region20: #{tpu_custom_call.1} parent=11 // pred_fallthru
        _
    $region12: #{tpu_custom_call.1} parent=5 // pred_fallthru
      _
    %p138 = scmp.lt.s32.totalorder %s9, 2
    // Predicated region
    $region21: #{tpu_custom_call.1} parent=5 // pred_check
      %p139 = pneg %p138
    $region22: #{tpu_custom_call.1} parent=5 // pred_check_branch
      %141 = sbr.rel (%p139) target = $region24
    $region23: #{tpu_custom_call.1} parent=5 // pred_region
      // Predicated region
      $region25: #{tpu_custom_call.1} parent=23 // pred_check
        %p142 = pneg %p41
      $region26: #{tpu_custom_call.1} parent=23 // pred_check_branch
        %144 = sbr.rel (%p142) target = $region28
      $region27: #{tpu_custom_call.1} parent=23 // pred_region
        %p145 = scmp.lt.s32.totalorder %s16, 1
        %s146 = scalar_select %p145, %s16, 1
        %s147 = smul.addr %s146, 41
        %s148 = smul.addr %s147, 8
        %s149 = scalar_lea.vmem %s0, %s148
      $region28: #{tpu_custom_call.1} parent=23 // pred_fallthru
        _
    $region24: #{tpu_custom_call.1} parent=5 // pred_fallthru
      _
    %p150 = scmp.le.s32.totalorder 1, %s9
    %p151 = scmp.lt.s32.totalorder %s9, 3
    %p152 = pnand %p150, %p151
    %p153 = pneg %p152
    // Predicated region
    $region29: #{tpu_custom_call.1} parent=5 // pred_check
      _
    $region30: #{tpu_custom_call.1} parent=5 // pred_check_branch
      %155 = sbr.rel (%p152) target = $region32
    $region31: #{tpu_custom_call.1} parent=5 // pred_region
      %s156 = ssub.s32 %s9, 1
      %p157 = scmp.lt.s32.totalorder %s18, 1
      %s158 = scalar_select %p157, %s18, 1
      %s159 = smul.addr %s158, 41
      %s160 = smul.addr %s159, 8
      %s161 = scalar_lea.vmem %s0, %s160
      %p162 = pneg %p47
      %p163 = pneg %p44
      %p164 = pneg %p68
      %p165 = pneg %p65
      %p166 = pneg %p89
      %p167 = pneg %p86
      %p168 = pneg %p117
      %p169 = pneg %p114
      %s170 = smul.u32 36, %s19
      %p171 = scmp.lt.s32.totalorder %s18, 1
      %s172 = scalar_select %p171, %s18, 1
      %p173 = scmp.lt.s32.totalorder %s170, 35
      %s174 = scalar_select %p173, %s170, 35
      %s175 = smul.addr %s172, 36
      %s176 = sadd.s32 %s174, %s175
      %s177 = smul.addr %s176, 8
      %s178 = scalar_lea.vmem %s3, %s177
      %p179 = scmp.lt.s32.totalorder %s18, 1
      %s180 = scalar_select %p179, %s18, 1
      %s181 = smul.addr %s180, 41
      %s182 = smul.addr %s181, 8
      %s183 = scalar_lea.vmem %s0, %s182
      %s184 = smul.u32 36, %s19
      %p185 = scmp.lt.s32.totalorder %s18, 1
      %s186 = scalar_select %p185, %s18, 1
      %p187 = scmp.lt.s32.totalorder %s184, 35
      %s188 = scalar_select %p187, %s184, 35
      %s189 = smul.addr %s186, 36
      %s190 = sadd.s32 %s188, %s189
      %s191 = smul.addr %s190, 8
      %s192 = scalar_lea.vmem %s3, %s191
      %s193 = smul.u32 36, %s19
      %s194 = smul.u32 %s19, 288
      %s195 = scalar_lea.vmem %s183, %s194
      %v196 = vld [vmem:[%s195] sm:$0xff]
      %v197 = vld [vmem:[%s195 + $0x8] sm:$0xff]
      %v198 = vld [vmem:[%s195 + $0x10] sm:$0xff]
      %v199 = vld [vmem:[%s195 + $0x18] sm:$0xff]
      %v200 = vld [vmem:[%s195 + $0x20] sm:$0xff]
      %v201 = vld [vmem:[%s195 + $0x28] sm:$0xff]
      %v202 = vld [vmem:[%s195 + $0x30] sm:$0xff]
      %v203 = vld [vmem:[%s195 + $0x38] sm:$0xff]
      %v204 = vld [vmem:[%s195 + $0x40] sm:$0xff]
      %v205 = vld [vmem:[%s195 + $0x48] sm:$0xff]
      %v206 = vld [vmem:[%s195 + $0x50] sm:$0xff]
      %v207 = vld [vmem:[%s195 + $0x58] sm:$0xff]
      %v208 = vld [vmem:[%s195 + $0x60] sm:$0xff]
      %v209 = vld [vmem:[%s195 + $0x68] sm:$0xff]
      %v210 = vld [vmem:[%s195 + $0x70] sm:$0xff]
      %v211 = vld [vmem:[%s195 + $0x78] sm:$0xff]
      %v212 = vld [vmem:[%s195 + $0x80] sm:$0xff]
      %v213 = vld [vmem:[%s195 + $0x88] sm:$0xff]
      %v214 = vld [vmem:[%s195 + $0x90] sm:$0xff]
      %v215 = vld [vmem:[%s195 + $0x98] sm:$0xff]
      %v216 = vld [vmem:[%s195 + $0xa0] sm:$0xff]
      %v217 = vld [vmem:[%s195 + $0xa8] sm:$0xff]
      %v218 = vld [vmem:[%s195 + $0xb0] sm:$0xff]
      %v219 = vld [vmem:[%s195 + $0xb8] sm:$0xff]
      %v220 = vld [vmem:[%s195 + $0xc0] sm:$0xff]
      %v221 = vld [vmem:[%s195 + $0xc8] sm:$0xff]
      %v222 = vld [vmem:[%s195 + $0xd0] sm:$0xff]
      %v223 = vld [vmem:[%s195 + $0xd8] sm:$0xff]
      %v224 = vld [vmem:[%s195 + $0xe0] sm:$0xff]
      %v225 = vld [vmem:[%s195 + $0xe8] sm:$0xff]
      %v226 = vld [vmem:[%s195 + $0xf0] sm:$0xff]
      %v227 = vld [vmem:[%s195 + $0xf8] sm:$0xff]
      %v228 = vld [vmem:[%s195 + $0x100] sm:$0xff]
      %v229 = vld [vmem:[%s195 + $0x108] sm:$0xff]
      %v230 = vld [vmem:[%s195 + $0x110] sm:$0xff]
      %v231 = vld [vmem:[%s195 + $0x118] sm:$0xff]
      %v232 = vld [vmem:[%s1] sm:$0xf]
      %s233 = sadd.s32 %s194, 1
      %s234 = scalar_lea.vmem %s183, %s233
      %v235 = vld [vmem:[%s234] sm:$0xff]
      %v236 = vld [vmem:[%s234 + $0x8] sm:$0xff]
      %v237 = vld [vmem:[%s234 + $0x10] sm:$0xff]
      %v238 = vld [vmem:[%s234 + $0x18] sm:$0xff]
      %v239 = vld [vmem:[%s234 + $0x20] sm:$0xff]
      %v240 = vld [vmem:[%s234 + $0x28] sm:$0xff]
      %v241 = vld [vmem:[%s234 + $0x30] sm:$0xff]
      %v242 = vld [vmem:[%s234 + $0x38] sm:$0xff]
      %v243 = vld [vmem:[%s234 + $0x40] sm:$0xff]
      %v244 = vld [vmem:[%s234 + $0x48] sm:$0xff]
      %v245 = vld [vmem:[%s234 + $0x50] sm:$0xff]
      %v246 = vld [vmem:[%s234 + $0x58] sm:$0xff]
      %v247 = vld [vmem:[%s234 + $0x60] sm:$0xff]
      %v248 = vld [vmem:[%s234 + $0x68] sm:$0xff]
      %v249 = vld [vmem:[%s234 + $0x70] sm:$0xff]
      %v250 = vld [vmem:[%s234 + $0x78] sm:$0xff]
      %v251 = vld [vmem:[%s234 + $0x80] sm:$0xff]
      %v252 = vld [vmem:[%s234 + $0x88] sm:$0xff]
      %v253 = vld [vmem:[%s234 + $0x90] sm:$0xff]
      %v254 = vld [vmem:[%s234 + $0x98] sm:$0xff]
      %v255 = vld [vmem:[%s234 + $0xa0] sm:$0xff]
      %v256 = vld [vmem:[%s234 + $0xa8] sm:$0xff]
      %v257 = vld [vmem:[%s234 + $0xb0] sm:$0xff]
      %v258 = vld [vmem:[%s234 + $0xb8] sm:$0xff]
      %v259 = vld [vmem:[%s234 + $0xc0] sm:$0xff]
      %v260 = vld [vmem:[%s234 + $0xc8] sm:$0xff]
      %v261 = vld [vmem:[%s234 + $0xd0] sm:$0xff]
      %v262 = vld [vmem:[%s234 + $0xd8] sm:$0xff]
      %v263 = vld [vmem:[%s234 + $0xe0] sm:$0xff]
      %v264 = vld [vmem:[%s234 + $0xe8] sm:$0xff]
      %v265 = vld [vmem:[%s234 + $0xf0] sm:$0xff]
      %v266 = vld [vmem:[%s234 + $0xf8] sm:$0xff]
      %v267 = vld [vmem:[%s234 + $0x100] sm:$0xff]
      %v268 = vld [vmem:[%s234 + $0x108] sm:$0xff]
      %v269 = vld [vmem:[%s234 + $0x110] sm:$0xff]
      %v270 = vld [vmem:[%s234 + $0x118] sm:$0xff]
      %s271 = scalar_lea.vmem %s1, 4
      %v272 = vld [vmem:[%s271] sm:$0xf]
      %vm273 = vcmask 31744
      %v275 = vsel %vm273, %v235, 0
      %v278 = vsel %vm273, %v236, 0
      %v281 = vsel %vm273, %v237, 0
      %v284 = vsel %vm273, %v238, 0
      %v287 = vsel %vm273, %v239, 0
      %v290 = vsel %vm273, %v240, 0
      %v293 = vsel %vm273, %v241, 0
      %v296 = vsel %vm273, %v242, 0
      %v299 = vsel %vm273, %v243, 0
      %v302 = vsel %vm273, %v244, 0
      %v305 = vsel %vm273, %v245, 0
      %v308 = vsel %vm273, %v246, 0
      %v311 = vsel %vm273, %v247, 0
      %v314 = vsel %vm273, %v248, 0
      %v317 = vsel %vm273, %v249, 0
      %v320 = vsel %vm273, %v250, 0
      %v323 = vsel %vm273, %v251, 0
      %v326 = vsel %vm273, %v252, 0
      %v329 = vsel %vm273, %v253, 0
      %v332 = vsel %vm273, %v254, 0
      %v335 = vsel %vm273, %v255, 0
      %v338 = vsel %vm273, %v256, 0
      %v341 = vsel %vm273, %v257, 0
      %v344 = vsel %vm273, %v258, 0
      %v347 = vsel %vm273, %v259, 0
      %v350 = vsel %vm273, %v260, 0
      %v353 = vsel %vm273, %v261, 0
      %v356 = vsel %vm273, %v262, 0
      %v359 = vsel %vm273, %v263, 0
      %v362 = vsel %vm273, %v264, 0
      %v365 = vsel %vm273, %v265, 0
      %v368 = vsel %vm273, %v266, 0
      %v371 = vsel %vm273, %v267, 0
      %v374 = vsel %vm273, %v268, 0
      %v377 = vsel %vm273, %v269, 0
      %v380 = vsel %vm273, %v270, 0
      %vm382 = vcmask 1043456
      %v384 = vsel %vm382, %v272, 0
      %386 = vmatpush.msra.mxu0 0.0
      %387 = vmatpush.msra.mxu0 0.0
      %388 = vmatpush.msra.mxu0 0.0
      %389 = vmatpush.msra.mxu0 0.0
      %390 = vmatpush.msra.mxu0 0.0
      %391 = vmatpush.msra.mxu0 0.0
      %392 = vmatpush.msra.mxu0 0.0
      %393 = vmatpush.msra.mxu0 0.0
      %394 = vmatpush.msra.mxu0 0.0
      %395 = vmatpush.msra.mxu0 0.0
      %396 = vmatpush.msra.mxu0 0.0
      %397 = vmatpush.msra.mxu0 0.0
      %398 = vmatpush.msra.mxu0 0.0
      %399 = vmatpush.msra.mxu0 0.0
      %400 = vmatpush.msra.mxu0 0.0
      %401 = vmatpush.msra.mxu0 %v384
      %402 = vmatmul.f32.gmra.mxu0 %v275
      %v403 = vpop.f32.mrf.mxu0
      %v404 = vadd.f32 0.0, %v403
      %405 = vmatmul.f32.gmra.mxu0 %v278
      %v406 = vpop.f32.mrf.mxu0
      %v407 = vadd.f32 0.0, %v406
      %408 = vmatmul.f32.gmra.mxu0 %v281
      %v409 = vpop.f32.mrf.mxu0
      %v410 = vadd.f32 0.0, %v409
      %411 = vmatmul.f32.gmra.mxu0 %v284
      %v412 = vpop.f32.mrf.mxu0
      %v413 = vadd.f32 0.0, %v412
      %414 = vmatmul.f32.gmra.mxu0 %v287
      %v415 = vpop.f32.mrf.mxu0
      %v416 = vadd.f32 0.0, %v415
      %417 = vmatmul.f32.gmra.mxu0 %v290
      %v418 = vpop.f32.mrf.mxu0
      %v419 = vadd.f32 0.0, %v418
      %420 = vmatmul.f32.gmra.mxu0 %v293
      %v421 = vpop.f32.mrf.mxu0
      %v422 = vadd.f32 0.0, %v421
      %423 = vmatmul.f32.gmra.mxu0 %v296
      %v424 = vpop.f32.mrf.mxu0
      %v425 = vadd.f32 0.0, %v424
      %426 = vmatmul.f32.gmra.mxu0 %v299
      %v427 = vpop.f32.mrf.mxu0
      %v428 = vadd.f32 0.0, %v427
      %429 = vmatmul.f32.gmra.mxu0 %v302
      %v430 = vpop.f32.mrf.mxu0
      %v431 = vadd.f32 0.0, %v430
      %432 = vmatmul.f32.gmra.mxu0 %v305
      %v433 = vpop.f32.mrf.mxu0
      %v434 = vadd.f32 0.0, %v433
      %435 = vmatmul.f32.gmra.mxu0 %v308
      %v436 = vpop.f32.mrf.mxu0
      %v437 = vadd.f32 0.0, %v436
      %438 = vmatmul.f32.gmra.mxu0 %v311
      %v439 = vpop.f32.mrf.mxu0
      %v440 = vadd.f32 0.0, %v439
      %441 = vmatmul.f32.gmra.mxu0 %v314
      %v442 = vpop.f32.mrf.mxu0
      %v443 = vadd.f32 0.0, %v442
      %444 = vmatmul.f32.gmra.mxu0 %v317
      %v445 = vpop.f32.mrf.mxu0
      %v446 = vadd.f32 0.0, %v445
      %447 = vmatmul.f32.gmra.mxu0 %v320
      %v448 = vpop.f32.mrf.mxu0
      %v449 = vadd.f32 0.0, %v448
      %450 = vmatmul.f32.gmra.mxu0 %v323
      %v451 = vpop.f32.mrf.mxu0
      %v452 = vadd.f32 0.0, %v451
      %453 = vmatmul.f32.gmra.mxu0 %v326
      %v454 = vpop.f32.mrf.mxu0
      %v455 = vadd.f32 0.0, %v454
      %456 = vmatmul.f32.gmra.mxu0 %v329
      %v457 = vpop.f32.mrf.mxu0
      %v458 = vadd.f32 0.0, %v457
      %459 = vmatmul.f32.gmra.mxu0 %v332
      %v460 = vpop.f32.mrf.mxu0
      %v461 = vadd.f32 0.0, %v460
      %462 = vmatmul.f32.gmra.mxu0 %v335
      %v463 = vpop.f32.mrf.mxu0
      %v464 = vadd.f32 0.0, %v463
      %465 = vmatmul.f32.gmra.mxu0 %v338
      %v466 = vpop.f32.mrf.mxu0
      %v467 = vadd.f32 0.0, %v466
      %468 = vmatmul.f32.gmra.mxu0 %v341
      %v469 = vpop.f32.mrf.mxu0
      %v470 = vadd.f32 0.0, %v469
      %471 = vmatmul.f32.gmra.mxu0 %v344
      %v472 = vpop.f32.mrf.mxu0
      %v473 = vadd.f32 0.0, %v472
      %474 = vmatmul.f32.gmra.mxu0 %v347
      %v475 = vpop.f32.mrf.mxu0
      %v476 = vadd.f32 0.0, %v475
      %477 = vmatmul.f32.gmra.mxu0 %v350
      %v478 = vpop.f32.mrf.mxu0
      %v479 = vadd.f32 0.0, %v478
      %480 = vmatmul.f32.gmra.mxu0 %v353
      %v481 = vpop.f32.mrf.mxu0
      %v482 = vadd.f32 0.0, %v481
      %483 = vmatmul.f32.gmra.mxu0 %v356
      %v484 = vpop.f32.mrf.mxu0
      %v485 = vadd.f32 0.0, %v484
      %486 = vmatmul.f32.gmra.mxu0 %v359
      %v487 = vpop.f32.mrf.mxu0
      %v488 = vadd.f32 0.0, %v487
      %489 = vmatmul.f32.gmra.mxu0 %v362
      %v490 = vpop.f32.mrf.mxu0
      %v491 = vadd.f32 0.0, %v490
      %492 = vmatmul.f32.gmra.mxu0 %v365
      %v493 = vpop.f32.mrf.mxu0
      %v494 = vadd.f32 0.0, %v493
      %495 = vmatmul.f32.gmra.mxu0 %v368
      %v496 = vpop.f32.mrf.mxu0
      %v497 = vadd.f32 0.0, %v496
      %498 = vmatmul.f32.gmra.mxu0 %v371
      %v499 = vpop.f32.mrf.mxu0
      %v500 = vadd.f32 0.0, %v499
      %501 = vmatmul.f32.gmra.mxu0 %v374
      %v502 = vpop.f32.mrf.mxu0
      %v503 = vadd.f32 0.0, %v502
      %504 = vmatmul.f32.gmra.mxu0 %v377
      %v505 = vpop.f32.mrf.mxu0
      %v506 = vadd.f32 0.0, %v505
      %507 = vmatmul.f32.gmra.mxu0 %v380
      %v508 = vpop.f32.mrf.mxu0
      %v509 = vadd.f32 0.0, %v508
      %510 = vdwg.mxu0
      %v512 = vsel %vm273, %v196, 0
      %v515 = vsel %vm273, %v197, 0
      %v518 = vsel %vm273, %v198, 0
      %v521 = vsel %vm273, %v199, 0
      %v524 = vsel %vm273, %v200, 0
      %v527 = vsel %vm273, %v201, 0
      %v530 = vsel %vm273, %v202, 0
      %v533 = vsel %vm273, %v203, 0
      %v536 = vsel %vm273, %v204, 0
      %v539 = vsel %vm273, %v205, 0
      %v542 = vsel %vm273, %v206, 0
      %v545 = vsel %vm273, %v207, 0
      %v548 = vsel %vm273, %v208, 0
      %v551 = vsel %vm273, %v209, 0
      %v554 = vsel %vm273, %v210, 0
      %v557 = vsel %vm273, %v211, 0
      %v560 = vsel %vm273, %v212, 0
      %v563 = vsel %vm273, %v213, 0
      %v566 = vsel %vm273, %v214, 0
      %v569 = vsel %vm273, %v215, 0
      %v572 = vsel %vm273, %v216, 0
      %v575 = vsel %vm273, %v217, 0
      %v578 = vsel %vm273, %v218, 0
      %v581 = vsel %vm273, %v219, 0
      %v584 = vsel %vm273, %v220, 0
      %v587 = vsel %vm273, %v221, 0
      %v590 = vsel %vm273, %v222, 0
      %v593 = vsel %vm273, %v223, 0
      %v596 = vsel %vm273, %v224, 0
      %v599 = vsel %vm273, %v225, 0
      %v602 = vsel %vm273, %v226, 0
      %v605 = vsel %vm273, %v227, 0
      %v608 = vsel %vm273, %v228, 0
      %v611 = vsel %vm273, %v229, 0
      %v614 = vsel %vm273, %v230, 0
      %v617 = vsel %vm273, %v231, 0
      %v620 = vsel %vm382, %v232, 0
      %622 = vmatpush.msra.mxu0 0.0
      %623 = vmatpush.msra.mxu0 0.0
      %624 = vmatpush.msra.mxu0 0.0
      %625 = vmatpush.msra.mxu0 0.0
      %626 = vmatpush.msra.mxu0 0.0
      %627 = vmatpush.msra.mxu0 0.0
      %628 = vmatpush.msra.mxu0 0.0
      %629 = vmatpush.msra.mxu0 0.0
      %630 = vmatpush.msra.mxu0 0.0
      %631 = vmatpush.msra.mxu0 0.0
      %632 = vmatpush.msra.mxu0 0.0
      %633 = vmatpush.msra.mxu0 0.0
      %634 = vmatpush.msra.mxu0 0.0
      %635 = vmatpush.msra.mxu0 0.0
      %636 = vmatpush.msra.mxu0 0.0
      %637 = vmatpush.msra.mxu0 %v620
      %638 = vmatmul.f32.gmra.mxu0 %v512
      %v639 = vpop.f32.mrf.mxu0
      %v640 = vadd.f32 %v404, %v639
      %641 = vmatmul.f32.gmra.mxu0 %v515
      %v642 = vpop.f32.mrf.mxu0
      %v643 = vadd.f32 %v407, %v642
      %644 = vmatmul.f32.gmra.mxu0 %v518
      %v645 = vpop.f32.mrf.mxu0
      %v646 = vadd.f32 %v410, %v645
      %647 = vmatmul.f32.gmra.mxu0 %v521
      %v648 = vpop.f32.mrf.mxu0
      %v649 = vadd.f32 %v413, %v648
      %650 = vmatmul.f32.gmra.mxu0 %v524
      %v651 = vpop.f32.mrf.mxu0
      %v652 = vadd.f32 %v416, %v651
      %653 = vmatmul.f32.gmra.mxu0 %v527
      %v654 = vpop.f32.mrf.mxu0
      %v655 = vadd.f32 %v419, %v654
      %656 = vmatmul.f32.gmra.mxu0 %v530
      %v657 = vpop.f32.mrf.mxu0
      %v658 = vadd.f32 %v422, %v657
      %659 = vmatmul.f32.gmra.mxu0 %v533
      %v660 = vpop.f32.mrf.mxu0
      %v661 = vadd.f32 %v425, %v660
      %662 = vmatmul.f32.gmra.mxu0 %v536
      %v663 = vpop.f32.mrf.mxu0
      %v664 = vadd.f32 %v428, %v663
      %665 = vmatmul.f32.gmra.mxu0 %v539
      %v666 = vpop.f32.mrf.mxu0
      %v667 = vadd.f32 %v431, %v666
      %668 = vmatmul.f32.gmra.mxu0 %v542
      %v669 = vpop.f32.mrf.mxu0
      %v670 = vadd.f32 %v434, %v669
      %671 = vmatmul.f32.gmra.mxu0 %v545
      %v672 = vpop.f32.mrf.mxu0
      %v673 = vadd.f32 %v437, %v672
      %674 = vmatmul.f32.gmra.mxu0 %v548
      %v675 = vpop.f32.mrf.mxu0
      %v676 = vadd.f32 %v440, %v675
      %677 = vmatmul.f32.gmra.mxu0 %v551
      %v678 = vpop.f32.mrf.mxu0
      %v679 = vadd.f32 %v443, %v678
      %680 = vmatmul.f32.gmra.mxu0 %v554
      %v681 = vpop.f32.mrf.mxu0
      %v682 = vadd.f32 %v446, %v681
      %683 = vmatmul.f32.gmra.mxu0 %v557
      %v684 = vpop.f32.mrf.mxu0
      %v685 = vadd.f32 %v449, %v684
      %686 = vmatmul.f32.gmra.mxu0 %v560
      %v687 = vpop.f32.mrf.mxu0
      %v688 = vadd.f32 %v452, %v687
      %689 = vmatmul.f32.gmra.mxu0 %v563
      %v690 = vpop.f32.mrf.mxu0
      %v691 = vadd.f32 %v455, %v690
      %692 = vmatmul.f32.gmra.mxu0 %v566
      %v693 = vpop.f32.mrf.mxu0
      %v694 = vadd.f32 %v458, %v693
      %695 = vmatmul.f32.gmra.mxu0 %v569
      %v696 = vpop.f32.mrf.mxu0
      %v697 = vadd.f32 %v461, %v696
      %698 = vmatmul.f32.gmra.mxu0 %v572
      %v699 = vpop.f32.mrf.mxu0
      %v700 = vadd.f32 %v464, %v699
      %701 = vmatmul.f32.gmra.mxu0 %v575
      %v702 = vpop.f32.mrf.mxu0
      %v703 = vadd.f32 %v467, %v702
      %704 = vmatmul.f32.gmra.mxu0 %v578
      %v705 = vpop.f32.mrf.mxu0
      %v706 = vadd.f32 %v470, %v705
      %707 = vmatmul.f32.gmra.mxu0 %v581
      %v708 = vpop.f32.mrf.mxu0
      %v709 = vadd.f32 %v473, %v708
      %710 = vmatmul.f32.gmra.mxu0 %v584
      %v711 = vpop.f32.mrf.mxu0
      %v712 = vadd.f32 %v476, %v711
      %713 = vmatmul.f32.gmra.mxu0 %v587
      %v714 = vpop.f32.mrf.mxu0
      %v715 = vadd.f32 %v479, %v714
      %716 = vmatmul.f32.gmra.mxu0 %v590
      %v717 = vpop.f32.mrf.mxu0
      %v718 = vadd.f32 %v482, %v717
      %719 = vmatmul.f32.gmra.mxu0 %v593
      %v720 = vpop.f32.mrf.mxu0
      %v721 = vadd.f32 %v485, %v720
      %722 = vmatmul.f32.gmra.mxu0 %v596
      %v723 = vpop.f32.mrf.mxu0
      %v724 = vadd.f32 %v488, %v723
      %725 = vmatmul.f32.gmra.mxu0 %v599
      %v726 = vpop.f32.mrf.mxu0
      %v727 = vadd.f32 %v491, %v726
      %728 = vmatmul.f32.gmra.mxu0 %v602
      %v729 = vpop.f32.mrf.mxu0
      %v730 = vadd.f32 %v494, %v729
      %731 = vmatmul.f32.gmra.mxu0 %v605
      %v732 = vpop.f32.mrf.mxu0
      %v733 = vadd.f32 %v497, %v732
      %734 = vmatmul.f32.gmra.mxu0 %v608
      %v735 = vpop.f32.mrf.mxu0
      %v736 = vadd.f32 %v500, %v735
      %737 = vmatmul.f32.gmra.mxu0 %v611
      %v738 = vpop.f32.mrf.mxu0
      %v739 = vadd.f32 %v503, %v738
      %740 = vmatmul.f32.gmra.mxu0 %v614
      %v741 = vpop.f32.mrf.mxu0
      %v742 = vadd.f32 %v506, %v741
      %743 = vmatmul.f32.gmra.mxu0 %v617
      %v744 = vpop.f32.mrf.mxu0
      %v745 = vadd.f32 %v509, %v744
      %746 = vdwg.mxu0
      %s747 = sadd.s32 %s194, 2
      %s748 = scalar_lea.vmem %s183, %s747
      %v749 = vld [vmem:[%s748] sm:$0xff]
      %v750 = vld [vmem:[%s748 + $0x8] sm:$0xff]
      %v751 = vld [vmem:[%s748 + $0x10] sm:$0xff]
      %v752 = vld [vmem:[%s748 + $0x18] sm:$0xff]
      %v753 = vld [vmem:[%s748 + $0x20] sm:$0xff]
      %v754 = vld [vmem:[%s748 + $0x28] sm:$0xff]
      %v755 = vld [vmem:[%s748 + $0x30] sm:$0xff]
      %v756 = vld [vmem:[%s748 + $0x38] sm:$0xff]
      %v757 = vld [vmem:[%s748 + $0x40] sm:$0xff]
      %v758 = vld [vmem:[%s748 + $0x48] sm:$0xff]
      %v759 = vld [vmem:[%s748 + $0x50] sm:$0xff]
      %v760 = vld [vmem:[%s748 + $0x58] sm:$0xff]
      %v761 = vld [vmem:[%s748 + $0x60] sm:$0xff]
      %v762 = vld [vmem:[%s748 + $0x68] sm:$0xff]
      %v763 = vld [vmem:[%s748 + $0x70] sm:$0xff]
      %v764 = vld [vmem:[%s748 + $0x78] sm:$0xff]
      %v765 = vld [vmem:[%s748 + $0x80] sm:$0xff]
      %v766 = vld [vmem:[%s748 + $0x88] sm:$0xff]
      %v767 = vld [vmem:[%s748 + $0x90] sm:$0xff]
      %v768 = vld [vmem:[%s748 + $0x98] sm:$0xff]
      %v769 = vld [vmem:[%s748 + $0xa0] sm:$0xff]
      %v770 = vld [vmem:[%s748 + $0xa8] sm:$0xff]
      %v771 = vld [vmem:[%s748 + $0xb0] sm:$0xff]
      %v772 = vld [vmem:[%s748 + $0xb8] sm:$0xff]
      %v773 = vld [vmem:[%s748 + $0xc0] sm:$0xff]
      %v774 = vld [vmem:[%s748 + $0xc8] sm:$0xff]
      %v775 = vld [vmem:[%s748 + $0xd0] sm:$0xff]
      %v776 = vld [vmem:[%s748 + $0xd8] sm:$0xff]
      %v777 = vld [vmem:[%s748 + $0xe0] sm:$0xff]
      %v778 = vld [vmem:[%s748 + $0xe8] sm:$0xff]
      %v779 = vld [vmem:[%s748 + $0xf0] sm:$0xff]
      %v780 = vld [vmem:[%s748 + $0xf8] sm:$0xff]
      %v781 = vld [vmem:[%s748 + $0x100] sm:$0xff]
      %v782 = vld [vmem:[%s748 + $0x108] sm:$0xff]
      %v783 = vld [vmem:[%s748 + $0x110] sm:$0xff]
      %v784 = vld [vmem:[%s748 + $0x118] sm:$0xff]
      %s785 = scalar_lea.vmem %s1, 8
      %v786 = vld [vmem:[%s785] sm:$0xf]
      %v788 = vsel %vm273, %v749, 0
      %v791 = vsel %vm273, %v750, 0
      %v794 = vsel %vm273, %v751, 0
      %v797 = vsel %vm273, %v752, 0
      %v800 = vsel %vm273, %v753, 0
      %v803 = vsel %vm273, %v754, 0
      %v806 = vsel %vm273, %v755, 0
      %v809 = vsel %vm273, %v756, 0
      %v812 = vsel %vm273, %v757, 0
      %v815 = vsel %vm273, %v758, 0
      %v818 = vsel %vm273, %v759, 0
      %v821 = vsel %vm273, %v760, 0
      %v824 = vsel %vm273, %v761, 0
      %v827 = vsel %vm273, %v762, 0
      %v830 = vsel %vm273, %v763, 0
      %v833 = vsel %vm273, %v764, 0
      %v836 = vsel %vm273, %v765, 0
      %v839 = vsel %vm273, %v766, 0
      %v842 = vsel %vm273, %v767, 0
      %v845 = vsel %vm273, %v768, 0
      %v848 = vsel %vm273, %v769, 0
      %v851 = vsel %vm273, %v770, 0
      %v854 = vsel %vm273, %v771, 0
      %v857 = vsel %vm273, %v772, 0
      %v860 = vsel %vm273, %v773, 0
      %v863 = vsel %vm273, %v774, 0
      %v866 = vsel %vm273, %v775, 0
      %v869 = vsel %vm273, %v776, 0
      %v872 = vsel %vm273, %v777, 0
      %v875 = vsel %vm273, %v778, 0
      %v878 = vsel %vm273, %v779, 0
      %v881 = vsel %vm273, %v780, 0
      %v884 = vsel %vm273, %v781, 0
      %v887 = vsel %vm273, %v782, 0
      %v890 = vsel %vm273, %v783, 0
      %v893 = vsel %vm273, %v784, 0
      %v896 = vsel %vm382, %v786, 0
      %898 = vmatpush.msra.mxu0 0.0
      %899 = vmatpush.msra.mxu0 0.0
      %900 = vmatpush.msra.mxu0 0.0
      %901 = vmatpush.msra.mxu0 0.0
      %902 = vmatpush.msra.mxu0 0.0
      %903 = vmatpush.msra.mxu0 0.0
      %904 = vmatpush.msra.mxu0 0.0
      %905 = vmatpush.msra.mxu0 0.0
      %906 = vmatpush.msra.mxu0 0.0
      %907 = vmatpush.msra.mxu0 0.0
      %908 = vmatpush.msra.mxu0 0.0
      %909 = vmatpush.msra.mxu0 0.0
      %910 = vmatpush.msra.mxu0 0.0
      %911 = vmatpush.msra.mxu0 0.0
      %912 = vmatpush.msra.mxu0 0.0
      %913 = vmatpush.msra.mxu0 %v896
      %914 = vmatmul.f32.gmra.mxu0 %v788
      %v915 = vpop.f32.mrf.mxu0
      %v916 = vadd.f32 0.0, %v915
      %917 = vmatmul.f32.gmra.mxu0 %v791
      %v918 = vpop.f32.mrf.mxu0
      %v919 = vadd.f32 0.0, %v918
      %920 = vmatmul.f32.gmra.mxu0 %v794
      %v921 = vpop.f32.mrf.mxu0
      %v922 = vadd.f32 0.0, %v921
      %923 = vmatmul.f32.gmra.mxu0 %v797
      %v924 = vpop.f32.mrf.mxu0
      %v925 = vadd.f32 0.0, %v924
      %926 = vmatmul.f32.gmra.mxu0 %v800
      %v927 = vpop.f32.mrf.mxu0
      %v928 = vadd.f32 0.0, %v927
      %929 = vmatmul.f32.gmra.mxu0 %v803
      %v930 = vpop.f32.mrf.mxu0
      %v931 = vadd.f32 0.0, %v930
      %932 = vmatmul.f32.gmra.mxu0 %v806
      %v933 = vpop.f32.mrf.mxu0
      %v934 = vadd.f32 0.0, %v933
      %935 = vmatmul.f32.gmra.mxu0 %v809
      %v936 = vpop.f32.mrf.mxu0
      %v937 = vadd.f32 0.0, %v936
      %938 = vmatmul.f32.gmra.mxu0 %v812
      %v939 = vpop.f32.mrf.mxu0
      %v940 = vadd.f32 0.0, %v939
      %941 = vmatmul.f32.gmra.mxu0 %v815
      %v942 = vpop.f32.mrf.mxu0
      %v943 = vadd.f32 0.0, %v942
      %944 = vmatmul.f32.gmra.mxu0 %v818
      %v945 = vpop.f32.mrf.mxu0
      %v946 = vadd.f32 0.0, %v945
      %947 = vmatmul.f32.gmra.mxu0 %v821
      %v948 = vpop.f32.mrf.mxu0
      %v949 = vadd.f32 0.0, %v948
      %950 = vmatmul.f32.gmra.mxu0 %v824
      %v951 = vpop.f32.mrf.mxu0
      %v952 = vadd.f32 0.0, %v951
      %953 = vmatmul.f32.gmra.mxu0 %v827
      %v954 = vpop.f32.mrf.mxu0
      %v955 = vadd.f32 0.0, %v954
      %956 = vmatmul.f32.gmra.mxu0 %v830
      %v957 = vpop.f32.mrf.mxu0
      %v958 = vadd.f32 0.0, %v957
      %959 = vmatmul.f32.gmra.mxu0 %v833
      %v960 = vpop.f32.mrf.mxu0
      %v961 = vadd.f32 0.0, %v960
      %962 = vmatmul.f32.gmra.mxu0 %v836
      %v963 = vpop.f32.mrf.mxu0
      %v964 = vadd.f32 0.0, %v963
      %965 = vmatmul.f32.gmra.mxu0 %v839
      %v966 = vpop.f32.mrf.mxu0
      %v967 = vadd.f32 0.0, %v966
      %968 = vmatmul.f32.gmra.mxu0 %v842
      %v969 = vpop.f32.mrf.mxu0
      %v970 = vadd.f32 0.0, %v969
      %971 = vmatmul.f32.gmra.mxu0 %v845
      %v972 = vpop.f32.mrf.mxu0
      %v973 = vadd.f32 0.0, %v972
      %974 = vmatmul.f32.gmra.mxu0 %v848
      %v975 = vpop.f32.mrf.mxu0
      %v976 = vadd.f32 0.0, %v975
      %977 = vmatmul.f32.gmra.mxu0 %v851
      %v978 = vpop.f32.mrf.mxu0
      %v979 = vadd.f32 0.0, %v978
      %980 = vmatmul.f32.gmra.mxu0 %v854
      %v981 = vpop.f32.mrf.mxu0
      %v982 = vadd.f32 0.0, %v981
      %983 = vmatmul.f32.gmra.mxu0 %v857
      %v984 = vpop.f32.mrf.mxu0
      %v985 = vadd.f32 0.0, %v984
      %986 = vmatmul.f32.gmra.mxu0 %v860
      %v987 = vpop.f32.mrf.mxu0
      %v988 = vadd.f32 0.0, %v987
      %989 = vmatmul.f32.gmra.mxu0 %v863
      %v990 = vpop.f32.mrf.mxu0
      %v991 = vadd.f32 0.0, %v990
      %992 = vmatmul.f32.gmra.mxu0 %v866
      %v993 = vpop.f32.mrf.mxu0
      %v994 = vadd.f32 0.0, %v993
      %995 = vmatmul.f32.gmra.mxu0 %v869
      %v996 = vpop.f32.mrf.mxu0
      %v997 = vadd.f32 0.0, %v996
      %998 = vmatmul.f32.gmra.mxu0 %v872
      %v999 = vpop.f32.mrf.mxu0
      %v1000 = vadd.f32 0.0, %v999
      %1001 = vmatmul.f32.gmra.mxu0 %v875
      %v1002 = vpop.f32.mrf.mxu0
      %v1003 = vadd.f32 0.0, %v1002
      %1004 = vmatmul.f32.gmra.mxu0 %v878
      %v1005 = vpop.f32.mrf.mxu0
      %v1006 = vadd.f32 0.0, %v1005
      %1007 = vmatmul.f32.gmra.mxu0 %v881
      %v1008 = vpop.f32.mrf.mxu0
      %v1009 = vadd.f32 0.0, %v1008
      %1010 = vmatmul.f32.gmra.mxu0 %v884
      %v1011 = vpop.f32.mrf.mxu0
      %v1012 = vadd.f32 0.0, %v1011
      %1013 = vmatmul.f32.gmra.mxu0 %v887
      %v1014 = vpop.f32.mrf.mxu0
      %v1015 = vadd.f32 0.0, %v1014
      %1016 = vmatmul.f32.gmra.mxu0 %v890
      %v1017 = vpop.f32.mrf.mxu0
      %v1018 = vadd.f32 0.0, %v1017
      %1019 = vmatmul.f32.gmra.mxu0 %v893
      %v1020 = vpop.f32.mrf.mxu0
      %v1021 = vadd.f32 0.0, %v1020
      %1022 = vdwg.mxu0
      %v1023 = vadd.f32 %v640, %v916
      %v1024 = vadd.f32 %v643, %v919
      %v1025 = vadd.f32 %v646, %v922
      %v1026 = vadd.f32 %v649, %v925
      %v1027 = vadd.f32 %v652, %v928
      %v1028 = vadd.f32 %v655, %v931
      %v1029 = vadd.f32 %v658, %v934
      %v1030 = vadd.f32 %v661, %v937
      %v1031 = vadd.f32 %v664, %v940
      %v1032 = vadd.f32 %v667, %v943
      %v1033 = vadd.f32 %v670, %v946
      %v1034 = vadd.f32 %v673, %v949
      %v1035 = vadd.f32 %v676, %v952
      %v1036 = vadd.f32 %v679, %v955
      %v1037 = vadd.f32 %v682, %v958
      %v1038 = vadd.f32 %v685, %v961
      %v1039 = vadd.f32 %v688, %v964
      %v1040 = vadd.f32 %v691, %v967
      %v1041 = vadd.f32 %v694, %v970
      %v1042 = vadd.f32 %v697, %v973
      %v1043 = vadd.f32 %v700, %v976
      %v1044 = vadd.f32 %v703, %v979
      %v1045 = vadd.f32 %v706, %v982
      %v1046 = vadd.f32 %v709, %v985
      %v1047 = vadd.f32 %v712, %v988
      %v1048 = vadd.f32 %v715, %v991
      %v1049 = vadd.f32 %v718, %v994
      %v1050 = vadd.f32 %v721, %v997
      %v1051 = vadd.f32 %v724, %v1000
      %v1052 = vadd.f32 %v727, %v1003
      %v1053 = vadd.f32 %v730, %v1006
      %v1054 = vadd.f32 %v733, %v1009
      %v1055 = vadd.f32 %v736, %v1012
      %v1056 = vadd.f32 %v739, %v1015
      %v1057 = vadd.f32 %v742, %v1018
      %v1058 = vadd.f32 %v745, %v1021
      %s1059 = sadd.s32 %s194, 18
      %s1060 = scalar_lea.vmem %s183, %s1059
      %v1061 = vld [vmem:[%s1060] sm:$0xff]
      %v1062 = vld [vmem:[%s1060 + $0x8] sm:$0xff]
      %v1063 = vld [vmem:[%s1060 + $0x10] sm:$0xff]
      %v1064 = vld [vmem:[%s1060 + $0x18] sm:$0xff]
      %v1065 = vld [vmem:[%s1060 + $0x20] sm:$0xff]
      %v1066 = vld [vmem:[%s1060 + $0x28] sm:$0xff]
      %v1067 = vld [vmem:[%s1060 + $0x30] sm:$0xff]
      %v1068 = vld [vmem:[%s1060 + $0x38] sm:$0xff]
      %v1069 = vld [vmem:[%s1060 + $0x40] sm:$0xff]
      %v1070 = vld [vmem:[%s1060 + $0x48] sm:$0xff]
      %v1071 = vld [vmem:[%s1060 + $0x50] sm:$0xff]
      %v1072 = vld [vmem:[%s1060 + $0x58] sm:$0xff]
      %v1073 = vld [vmem:[%s1060 + $0x60] sm:$0xff]
      %v1074 = vld [vmem:[%s1060 + $0x68] sm:$0xff]
      %v1075 = vld [vmem:[%s1060 + $0x70] sm:$0xff]
      %v1076 = vld [vmem:[%s1060 + $0x78] sm:$0xff]
      %v1077 = vld [vmem:[%s1060 + $0x80] sm:$0xff]
      %v1078 = vld [vmem:[%s1060 + $0x88] sm:$0xff]
      %v1079 = vld [vmem:[%s1060 + $0x90] sm:$0xff]
      %v1080 = vld [vmem:[%s1060 + $0x98] sm:$0xff]
      %v1081 = vld [vmem:[%s1060 + $0xa0] sm:$0xff]
      %v1082 = vld [vmem:[%s1060 + $0xa8] sm:$0xff]
      %v1083 = vld [vmem:[%s1060 + $0xb0] sm:$0xff]
      %v1084 = vld [vmem:[%s1060 + $0xb8] sm:$0xff]
      %v1085 = vld [vmem:[%s1060 + $0xc0] sm:$0xff]
      %v1086 = vld [vmem:[%s1060 + $0xc8] sm:$0xff]
      %v1087 = vld [vmem:[%s1060 + $0xd0] sm:$0xff]
      %v1088 = vld [vmem:[%s1060 + $0xd8] sm:$0xff]
      %v1089 = vld [vmem:[%s1060 + $0xe0] sm:$0xff]
      %v1090 = vld [vmem:[%s1060 + $0xe8] sm:$0xff]
      %v1091 = vld [vmem:[%s1060 + $0xf0] sm:$0xff]
      %v1092 = vld [vmem:[%s1060 + $0xf8] sm:$0xff]
      %v1093 = vld [vmem:[%s1060 + $0x100] sm:$0xff]
      %v1094 = vld [vmem:[%s1060 + $0x108] sm:$0xff]
      %v1095 = vld [vmem:[%s1060 + $0x110] sm:$0xff]
      %v1096 = vld [vmem:[%s1060 + $0x118] sm:$0xff]
      %s1097 = scalar_lea.vmem %s1, 12
      %v1098 = vld [vmem:[%s1097] sm:$0xf]
      %s1099 = sadd.s32 %s194, 19
      %s1100 = scalar_lea.vmem %s183, %s1099
      %v1101 = vld [vmem:[%s1100] sm:$0xff]
      %v1102 = vld [vmem:[%s1100 + $0x8] sm:$0xff]
      %v1103 = vld [vmem:[%s1100 + $0x10] sm:$0xff]
      %v1104 = vld [vmem:[%s1100 + $0x18] sm:$0xff]
      %v1105 = vld [vmem:[%s1100 + $0x20] sm:$0xff]
      %v1106 = vld [vmem:[%s1100 + $0x28] sm:$0xff]
      %v1107 = vld [vmem:[%s1100 + $0x30] sm:$0xff]
      %v1108 = vld [vmem:[%s1100 + $0x38] sm:$0xff]
      %v1109 = vld [vmem:[%s1100 + $0x40] sm:$0xff]
      %v1110 = vld [vmem:[%s1100 + $0x48] sm:$0xff]
      %v1111 = vld [vmem:[%s1100 + $0x50] sm:$0xff]
      %v1112 = vld [vmem:[%s1100 + $0x58] sm:$0xff]
      %v1113 = vld [vmem:[%s1100 + $0x60] sm:$0xff]
      %v1114 = vld [vmem:[%s1100 + $0x68] sm:$0xff]
      %v1115 = vld [vmem:[%s1100 + $0x70] sm:$0xff]
      %v1116 = vld [vmem:[%s1100 + $0x78] sm:$0xff]
      %v1117 = vld [vmem:[%s1100 + $0x80] sm:$0xff]
      %v1118 = vld [vmem:[%s1100 + $0x88] sm:$0xff]
      %v1119 = vld [vmem:[%s1100 + $0x90] sm:$0xff]
      %v1120 = vld [vmem:[%s1100 + $0x98] sm:$0xff]
      %v1121 = vld [vmem:[%s1100 + $0xa0] sm:$0xff]
      %v1122 = vld [vmem:[%s1100 + $0xa8] sm:$0xff]
      %v1123 = vld [vmem:[%s1100 + $0xb0] sm:$0xff]
      %v1124 = vld [vmem:[%s1100 + $0xb8] sm:$0xff]
      %v1125 = vld [vmem:[%s1100 + $0xc0] sm:$0xff]
      %v1126 = vld [vmem:[%s1100 + $0xc8] sm:$0xff]
      %v1127 = vld [vmem:[%s1100 + $0xd0] sm:$0xff]
      %v1128 = vld [vmem:[%s1100 + $0xd8] sm:$0xff]
      %v1129 = vld [vmem:[%s1100 + $0xe0] sm:$0xff]
      %v1130 = vld [vmem:[%s1100 + $0xe8] sm:$0xff]
      %v1131 = vld [vmem:[%s1100 + $0xf0] sm:$0xff]
      %v1132 = vld [vmem:[%s1100 + $0xf8] sm:$0xff]
      %v1133 = vld [vmem:[%s1100 + $0x100] sm:$0xff]
      %v1134 = vld [vmem:[%s1100 + $0x108] sm:$0xff]
      %v1135 = vld [vmem:[%s1100 + $0x110] sm:$0xff]
      %v1136 = vld [vmem:[%s1100 + $0x118] sm:$0xff]
      %s1137 = scalar_lea.vmem %s1, 16
      %v1138 = vld [vmem:[%s1137] sm:$0xf]
      %v1140 = vsel %vm273, %v1101, 0
      %v1143 = vsel %vm273, %v1102, 0
      %v1146 = vsel %vm273, %v1103, 0
      %v1149 = vsel %vm273, %v1104, 0
      %v1152 = vsel %vm273, %v1105, 0
      %v1155 = vsel %vm273, %v1106, 0
      %v1158 = vsel %vm273, %v1107, 0
      %v1161 = vsel %vm273, %v1108, 0
      %v1164 = vsel %vm273, %v1109, 0
      %v1167 = vsel %vm273, %v1110, 0
      %v1170 = vsel %vm273, %v1111, 0
      %v1173 = vsel %vm273, %v1112, 0
      %v1176 = vsel %vm273, %v1113, 0
      %v1179 = vsel %vm273, %v1114, 0
      %v1182 = vsel %vm273, %v1115, 0
      %v1185 = vsel %vm273, %v1116, 0
      %v1188 = vsel %vm273, %v1117, 0
      %v1191 = vsel %vm273, %v1118, 0
      %v1194 = vsel %vm273, %v1119, 0
      %v1197 = vsel %vm273, %v1120, 0
      %v1200 = vsel %vm273, %v1121, 0
      %v1203 = vsel %vm273, %v1122, 0
      %v1206 = vsel %vm273, %v1123, 0
      %v1209 = vsel %vm273, %v1124, 0
      %v1212 = vsel %vm273, %v1125, 0
      %v1215 = vsel %vm273, %v1126, 0
      %v1218 = vsel %vm273, %v1127, 0
      %v1221 = vsel %vm273, %v1128, 0
      %v1224 = vsel %vm273, %v1129, 0
      %v1227 = vsel %vm273, %v1130, 0
      %v1230 = vsel %vm273, %v1131, 0
      %v1233 = vsel %vm273, %v1132, 0
      %v1236 = vsel %vm273, %v1133, 0
      %v1239 = vsel %vm273, %v1134, 0
      %v1242 = vsel %vm273, %v1135, 0
      %v1245 = vsel %vm273, %v1136, 0
      %v1248 = vsel %vm382, %v1138, 0
      %1250 = vmatpush.msra.mxu0 0.0
      %1251 = vmatpush.msra.mxu0 0.0
      %1252 = vmatpush.msra.mxu0 0.0
      %1253 = vmatpush.msra.mxu0 0.0
      %1254 = vmatpush.msra.mxu0 0.0
      %1255 = vmatpush.msra.mxu0 0.0
      %1256 = vmatpush.msra.mxu0 0.0
      %1257 = vmatpush.msra.mxu0 0.0
      %1258 = vmatpush.msra.mxu0 0.0
      %1259 = vmatpush.msra.mxu0 0.0
      %1260 = vmatpush.msra.mxu0 0.0
      %1261 = vmatpush.msra.mxu0 0.0
      %1262 = vmatpush.msra.mxu0 0.0
      %1263 = vmatpush.msra.mxu0 0.0
      %1264 = vmatpush.msra.mxu0 0.0
      %1265 = vmatpush.msra.mxu0 %v1248
      %1266 = vmatmul.f32.gmra.mxu0 %v1140
      %v1267 = vpop.f32.mrf.mxu0
      %v1268 = vadd.f32 0.0, %v1267
      %1269 = vmatmul.f32.gmra.mxu0 %v1143
      %v1270 = vpop.f32.mrf.mxu0
      %v1271 = vadd.f32 0.0, %v1270
      %1272 = vmatmul.f32.gmra.mxu0 %v1146
      %v1273 = vpop.f32.mrf.mxu0
      %v1274 = vadd.f32 0.0, %v1273
      %1275 = vmatmul.f32.gmra.mxu0 %v1149
      %v1276 = vpop.f32.mrf.mxu0
      %v1277 = vadd.f32 0.0, %v1276
      %1278 = vmatmul.f32.gmra.mxu0 %v1152
      %v1279 = vpop.f32.mrf.mxu0
      %v1280 = vadd.f32 0.0, %v1279
      %1281 = vmatmul.f32.gmra.mxu0 %v1155
      %v1282 = vpop.f32.mrf.mxu0
      %v1283 = vadd.f32 0.0, %v1282
      %1284 = vmatmul.f32.gmra.mxu0 %v1158
      %v1285 = vpop.f32.mrf.mxu0
      %v1286 = vadd.f32 0.0, %v1285
      %1287 = vmatmul.f32.gmra.mxu0 %v1161
      %v1288 = vpop.f32.mrf.mxu0
      %v1289 = vadd.f32 0.0, %v1288
      %1290 = vmatmul.f32.gmra.mxu0 %v1164
      %v1291 = vpop.f32.mrf.mxu0
      %v1292 = vadd.f32 0.0, %v1291
      %1293 = vmatmul.f32.gmra.mxu0 %v1167
      %v1294 = vpop.f32.mrf.mxu0
      %v1295 = vadd.f32 0.0, %v1294
      %1296 = vmatmul.f32.gmra.mxu0 %v1170
      %v1297 = vpop.f32.mrf.mxu0
      %v1298 = vadd.f32 0.0, %v1297
      %1299 = vmatmul.f32.gmra.mxu0 %v1173
      %v1300 = vpop.f32.mrf.mxu0
      %v1301 = vadd.f32 0.0, %v1300
      %1302 = vmatmul.f32.gmra.mxu0 %v1176
      %v1303 = vpop.f32.mrf.mxu0
      %v1304 = vadd.f32 0.0, %v1303
      %1305 = vmatmul.f32.gmra.mxu0 %v1179
      %v1306 = vpop.f32.mrf.mxu0
      %v1307 = vadd.f32 0.0, %v1306
      %1308 = vmatmul.f32.gmra.mxu0 %v1182
      %v1309 = vpop.f32.mrf.mxu0
      %v1310 = vadd.f32 0.0, %v1309
      %1311 = vmatmul.f32.gmra.mxu0 %v1185
      %v1312 = vpop.f32.mrf.mxu0
      %v1313 = vadd.f32 0.0, %v1312
      %1314 = vmatmul.f32.gmra.mxu0 %v1188
      %v1315 = vpop.f32.mrf.mxu0
      %v1316 = vadd.f32 0.0, %v1315
      %1317 = vmatmul.f32.gmra.mxu0 %v1191
      %v1318 = vpop.f32.mrf.mxu0
      %v1319 = vadd.f32 0.0, %v1318
      %1320 = vmatmul.f32.gmra.mxu0 %v1194
      %v1321 = vpop.f32.mrf.mxu0
      %v1322 = vadd.f32 0.0, %v1321
      %1323 = vmatmul.f32.gmra.mxu0 %v1197
      %v1324 = vpop.f32.mrf.mxu0
      %v1325 = vadd.f32 0.0, %v1324
      %1326 = vmatmul.f32.gmra.mxu0 %v1200
      %v1327 = vpop.f32.mrf.mxu0
      %v1328 = vadd.f32 0.0, %v1327
      %1329 = vmatmul.f32.gmra.mxu0 %v1203
      %v1330 = vpop.f32.mrf.mxu0
      %v1331 = vadd.f32 0.0, %v1330
      %1332 = vmatmul.f32.gmra.mxu0 %v1206
      %v1333 = vpop.f32.mrf.mxu0
      %v1334 = vadd.f32 0.0, %v1333
      %1335 = vmatmul.f32.gmra.mxu0 %v1209
      %v1336 = vpop.f32.mrf.mxu0
      %v1337 = vadd.f32 0.0, %v1336
      %1338 = vmatmul.f32.gmra.mxu0 %v1212
      %v1339 = vpop.f32.mrf.mxu0
      %v1340 = vadd.f32 0.0, %v1339
      %1341 = vmatmul.f32.gmra.mxu0 %v1215
      %v1342 = vpop.f32.mrf.mxu0
      %v1343 = vadd.f32 0.0, %v1342
      %1344 = vmatmul.f32.gmra.mxu0 %v1218
      %v1345 = vpop.f32.mrf.mxu0
      %v1346 = vadd.f32 0.0, %v1345
      %1347 = vmatmul.f32.gmra.mxu0 %v1221
      %v1348 = vpop.f32.mrf.mxu0
      %v1349 = vadd.f32 0.0, %v1348
      %1350 = vmatmul.f32.gmra.mxu0 %v1224
      %v1351 = vpop.f32.mrf.mxu0
      %v1352 = vadd.f32 0.0, %v1351
      %1353 = vmatmul.f32.gmra.mxu0 %v1227
      %v1354 = vpop.f32.mrf.mxu0
      %v1355 = vadd.f32 0.0, %v1354
      %1356 = vmatmul.f32.gmra.mxu0 %v1230
      %v1357 = vpop.f32.mrf.mxu0
      %v1358 = vadd.f32 0.0, %v1357
      %1359 = vmatmul.f32.gmra.mxu0 %v1233
      %v1360 = vpop.f32.mrf.mxu0
      %v1361 = vadd.f32 0.0, %v1360
      %1362 = vmatmul.f32.gmra.mxu0 %v1236
      %v1363 = vpop.f32.mrf.mxu0
      %v1364 = vadd.f32 0.0, %v1363
      %1365 = vmatmul.f32.gmra.mxu0 %v1239
      %v1366 = vpop.f32.mrf.mxu0
      %v1367 = vadd.f32 0.0, %v1366
      %1368 = vmatmul.f32.gmra.mxu0 %v1242
      %v1369 = vpop.f32.mrf.mxu0
      %v1370 = vadd.f32 0.0, %v1369
      %1371 = vmatmul.f32.gmra.mxu0 %v1245
      %v1372 = vpop.f32.mrf.mxu0
      %v1373 = vadd.f32 0.0, %v1372
      %1374 = vdwg.mxu0
      %v1376 = vsel %vm273, %v1061, 0
      %v1379 = vsel %vm273, %v1062, 0
      %v1382 = vsel %vm273, %v1063, 0
      %v1385 = vsel %vm273, %v1064, 0
      %v1388 = vsel %vm273, %v1065, 0
      %v1391 = vsel %vm273, %v1066, 0
      %v1394 = vsel %vm273, %v1067, 0
      %v1397 = vsel %vm273, %v1068, 0
      %v1400 = vsel %vm273, %v1069, 0
      %v1403 = vsel %vm273, %v1070, 0
      %v1406 = vsel %vm273, %v1071, 0
      %v1409 = vsel %vm273, %v1072, 0
      %v1412 = vsel %vm273, %v1073, 0
      %v1415 = vsel %vm273, %v1074, 0
      %v1418 = vsel %vm273, %v1075, 0
      %v1421 = vsel %vm273, %v1076, 0
      %v1424 = vsel %vm273, %v1077, 0
      %v1427 = vsel %vm273, %v1078, 0
      %v1430 = vsel %vm273, %v1079, 0
      %v1433 = vsel %vm273, %v1080, 0
      %v1436 = vsel %vm273, %v1081, 0
      %v1439 = vsel %vm273, %v1082, 0
      %v1442 = vsel %vm273, %v1083, 0
      %v1445 = vsel %vm273, %v1084, 0
      %v1448 = vsel %vm273, %v1085, 0
      %v1451 = vsel %vm273, %v1086, 0
      %v1454 = vsel %vm273, %v1087, 0
      %v1457 = vsel %vm273, %v1088, 0
      %v1460 = vsel %vm273, %v1089, 0
      %v1463 = vsel %vm273, %v1090, 0
      %v1466 = vsel %vm273, %v1091, 0
      %v1469 = vsel %vm273, %v1092, 0
      %v1472 = vsel %vm273, %v1093, 0
      %v1475 = vsel %vm273, %v1094, 0
      %v1478 = vsel %vm273, %v1095, 0
      %v1481 = vsel %vm273, %v1096, 0
      %v1484 = vsel %vm382, %v1098, 0
      %1486 = vmatpush.msra.mxu0 0.0
      %1487 = vmatpush.msra.mxu0 0.0
      %1488 = vmatpush.msra.mxu0 0.0
      %1489 = vmatpush.msra.mxu0 0.0
      %1490 = vmatpush.msra.mxu0 0.0
      %1491 = vmatpush.msra.mxu0 0.0
      %1492 = vmatpush.msra.mxu0 0.0
      %1493 = vmatpush.msra.mxu0 0.0
      %1494 = vmatpush.msra.mxu0 0.0
      %1495 = vmatpush.msra.mxu0 0.0
      %1496 = vmatpush.msra.mxu0 0.0
      %1497 = vmatpush.msra.mxu0 0.0
      %1498 = vmatpush.msra.mxu0 0.0
      %1499 = vmatpush.msra.mxu0 0.0
      %1500 = vmatpush.msra.mxu0 0.0
      %1501 = vmatpush.msra.mxu0 %v1484
      %1502 = vmatmul.f32.gmra.mxu0 %v1376
      %v1503 = vpop.f32.mrf.mxu0
      %v1504 = vadd.f32 %v1268, %v1503
      %1505 = vmatmul.f32.gmra.mxu0 %v1379
      %v1506 = vpop.f32.mrf.mxu0
      %v1507 = vadd.f32 %v1271, %v1506
      %1508 = vmatmul.f32.gmra.mxu0 %v1382
      %v1509 = vpop.f32.mrf.mxu0
      %v1510 = vadd.f32 %v1274, %v1509
      %1511 = vmatmul.f32.gmra.mxu0 %v1385
      %v1512 = vpop.f32.mrf.mxu0
      %v1513 = vadd.f32 %v1277, %v1512
      %1514 = vmatmul.f32.gmra.mxu0 %v1388
      %v1515 = vpop.f32.mrf.mxu0
      %v1516 = vadd.f32 %v1280, %v1515
      %1517 = vmatmul.f32.gmra.mxu0 %v1391
      %v1518 = vpop.f32.mrf.mxu0
      %v1519 = vadd.f32 %v1283, %v1518
      %1520 = vmatmul.f32.gmra.mxu0 %v1394
      %v1521 = vpop.f32.mrf.mxu0
      %v1522 = vadd.f32 %v1286, %v1521
      %1523 = vmatmul.f32.gmra.mxu0 %v1397
      %v1524 = vpop.f32.mrf.mxu0
      %v1525 = vadd.f32 %v1289, %v1524
      %1526 = vmatmul.f32.gmra.mxu0 %v1400
      %v1527 = vpop.f32.mrf.mxu0
      %v1528 = vadd.f32 %v1292, %v1527
      %1529 = vmatmul.f32.gmra.mxu0 %v1403
      %v1530 = vpop.f32.mrf.mxu0
      %v1531 = vadd.f32 %v1295, %v1530
      %1532 = vmatmul.f32.gmra.mxu0 %v1406
      %v1533 = vpop.f32.mrf.mxu0
      %v1534 = vadd.f32 %v1298, %v1533
      %1535 = vmatmul.f32.gmra.mxu0 %v1409
      %v1536 = vpop.f32.mrf.mxu0
      %v1537 = vadd.f32 %v1301, %v1536
      %1538 = vmatmul.f32.gmra.mxu0 %v1412
      %v1539 = vpop.f32.mrf.mxu0
      %v1540 = vadd.f32 %v1304, %v1539
      %1541 = vmatmul.f32.gmra.mxu0 %v1415
      %v1542 = vpop.f32.mrf.mxu0
      %v1543 = vadd.f32 %v1307, %v1542
      %1544 = vmatmul.f32.gmra.mxu0 %v1418
      %v1545 = vpop.f32.mrf.mxu0
      %v1546 = vadd.f32 %v1310, %v1545
      %1547 = vmatmul.f32.gmra.mxu0 %v1421
      %v1548 = vpop.f32.mrf.mxu0
      %v1549 = vadd.f32 %v1313, %v1548
      %1550 = vmatmul.f32.gmra.mxu0 %v1424
      %v1551 = vpop.f32.mrf.mxu0
      %v1552 = vadd.f32 %v1316, %v1551
      %1553 = vmatmul.f32.gmra.mxu0 %v1427
      %v1554 = vpop.f32.mrf.mxu0
      %v1555 = vadd.f32 %v1319, %v1554
      %1556 = vmatmul.f32.gmra.mxu0 %v1430
      %v1557 = vpop.f32.mrf.mxu0
      %v1558 = vadd.f32 %v1322, %v1557
      %1559 = vmatmul.f32.gmra.mxu0 %v1433
      %v1560 = vpop.f32.mrf.mxu0
      %v1561 = vadd.f32 %v1325, %v1560
      %1562 = vmatmul.f32.gmra.mxu0 %v1436
      %v1563 = vpop.f32.mrf.mxu0
      %v1564 = vadd.f32 %v1328, %v1563
      %1565 = vmatmul.f32.gmra.mxu0 %v1439
      %v1566 = vpop.f32.mrf.mxu0
      %v1567 = vadd.f32 %v1331, %v1566
      %1568 = vmatmul.f32.gmra.mxu0 %v1442
      %v1569 = vpop.f32.mrf.mxu0
      %v1570 = vadd.f32 %v1334, %v1569
      %1571 = vmatmul.f32.gmra.mxu0 %v1445
      %v1572 = vpop.f32.mrf.mxu0
      %v1573 = vadd.f32 %v1337, %v1572
      %1574 = vmatmul.f32.gmra.mxu0 %v1448
      %v1575 = vpop.f32.mrf.mxu0
      %v1576 = vadd.f32 %v1340, %v1575
      %1577 = vmatmul.f32.gmra.mxu0 %v1451
      %v1578 = vpop.f32.mrf.mxu0
      %v1579 = vadd.f32 %v1343, %v1578
      %1580 = vmatmul.f32.gmra.mxu0 %v1454
      %v1581 = vpop.f32.mrf.mxu0
      %v1582 = vadd.f32 %v1346, %v1581
      %1583 = vmatmul.f32.gmra.mxu0 %v1457
      %v1584 = vpop.f32.mrf.mxu0
      %v1585 = vadd.f32 %v1349, %v1584
      %1586 = vmatmul.f32.gmra.mxu0 %v1460
      %v1587 = vpop.f32.mrf.mxu0
      %v1588 = vadd.f32 %v1352, %v1587
      %1589 = vmatmul.f32.gmra.mxu0 %v1463
      %v1590 = vpop.f32.mrf.mxu0
      %v1591 = vadd.f32 %v1355, %v1590
      %1592 = vmatmul.f32.gmra.mxu0 %v1466
      %v1593 = vpop.f32.mrf.mxu0
      %v1594 = vadd.f32 %v1358, %v1593
      %1595 = vmatmul.f32.gmra.mxu0 %v1469
      %v1596 = vpop.f32.mrf.mxu0
      %v1597 = vadd.f32 %v1361, %v1596
      %1598 = vmatmul.f32.gmra.mxu0 %v1472
      %v1599 = vpop.f32.mrf.mxu0
      %v1600 = vadd.f32 %v1364, %v1599
      %1601 = vmatmul.f32.gmra.mxu0 %v1475
      %v1602 = vpop.f32.mrf.mxu0
      %v1603 = vadd.f32 %v1367, %v1602
      %1604 = vmatmul.f32.gmra.mxu0 %v1478
      %v1605 = vpop.f32.mrf.mxu0
      %v1606 = vadd.f32 %v1370, %v1605
      %1607 = vmatmul.f32.gmra.mxu0 %v1481
      %v1608 = vpop.f32.mrf.mxu0
      %v1609 = vadd.f32 %v1373, %v1608
      %1610 = vdwg.mxu0
      %s1611 = sadd.s32 %s194, 20
      %s1612 = scalar_lea.vmem %s183, %s1611
      %v1613 = vld [vmem:[%s1612] sm:$0xff]
      %v1614 = vld [vmem:[%s1612 + $0x8] sm:$0xff]
      %v1615 = vld [vmem:[%s1612 + $0x10] sm:$0xff]
      %v1616 = vld [vmem:[%s1612 + $0x18] sm:$0xff]
      %v1617 = vld [vmem:[%s1612 + $0x20] sm:$0xff]
      %v1618 = vld [vmem:[%s1612 + $0x28] sm:$0xff]
      %v1619 = vld [vmem:[%s1612 + $0x30] sm:$0xff]
      %v1620 = vld [vmem:[%s1612 + $0x38] sm:$0xff]
      %v1621 = vld [vmem:[%s1612 + $0x40] sm:$0xff]
      %v1622 = vld [vmem:[%s1612 + $0x48] sm:$0xff]
      %v1623 = vld [vmem:[%s1612 + $0x50] sm:$0xff]
      %v1624 = vld [vmem:[%s1612 + $0x58] sm:$0xff]
      %v1625 = vld [vmem:[%s1612 + $0x60] sm:$0xff]
      %v1626 = vld [vmem:[%s1612 + $0x68] sm:$0xff]
      %v1627 = vld [vmem:[%s1612 + $0x70] sm:$0xff]
      %v1628 = vld [vmem:[%s1612 + $0x78] sm:$0xff]
      %v1629 = vld [vmem:[%s1612 + $0x80] sm:$0xff]
      %v1630 = vld [vmem:[%s1612 + $0x88] sm:$0xff]
      %v1631 = vld [vmem:[%s1612 + $0x90] sm:$0xff]
      %v1632 = vld [vmem:[%s1612 + $0x98] sm:$0xff]
      %v1633 = vld [vmem:[%s1612 + $0xa0] sm:$0xff]
      %v1634 = vld [vmem:[%s1612 + $0xa8] sm:$0xff]
      %v1635 = vld [vmem:[%s1612 + $0xb0] sm:$0xff]
      %v1636 = vld [vmem:[%s1612 + $0xb8] sm:$0xff]
      %v1637 = vld [vmem:[%s1612 + $0xc0] sm:$0xff]
      %v1638 = vld [vmem:[%s1612 + $0xc8] sm:$0xff]
      %v1639 = vld [vmem:[%s1612 + $0xd0] sm:$0xff]
      %v1640 = vld [vmem:[%s1612 + $0xd8] sm:$0xff]
      %v1641 = vld [vmem:[%s1612 + $0xe0] sm:$0xff]
      %v1642 = vld [vmem:[%s1612 + $0xe8] sm:$0xff]
      %v1643 = vld [vmem:[%s1612 + $0xf0] sm:$0xff]
      %v1644 = vld [vmem:[%s1612 + $0xf8] sm:$0xff]
      %v1645 = vld [vmem:[%s1612 + $0x100] sm:$0xff]
      %v1646 = vld [vmem:[%s1612 + $0x108] sm:$0xff]
      %v1647 = vld [vmem:[%s1612 + $0x110] sm:$0xff]
      %v1648 = vld [vmem:[%s1612 + $0x118] sm:$0xff]
      %s1649 = scalar_lea.vmem %s1, 20
      %v1650 = vld [vmem:[%s1649] sm:$0xf]
      %v1652 = vsel %vm273, %v1613, 0
      %v1655 = vsel %vm273, %v1614, 0
      %v1658 = vsel %vm273, %v1615, 0
      %v1661 = vsel %vm273, %v1616, 0
      %v1664 = vsel %vm273, %v1617, 0
      %v1667 = vsel %vm273, %v1618, 0
      %v1670 = vsel %vm273, %v1619, 0
      %v1673 = vsel %vm273, %v1620, 0
      %v1676 = vsel %vm273, %v1621, 0
      %v1679 = vsel %vm273, %v1622, 0
      %v1682 = vsel %vm273, %v1623, 0
      %v1685 = vsel %vm273, %v1624, 0
      %v1688 = vsel %vm273, %v1625, 0
      %v1691 = vsel %vm273, %v1626, 0
      %v1694 = vsel %vm273, %v1627, 0
      %v1697 = vsel %vm273, %v1628, 0
      %v1700 = vsel %vm273, %v1629, 0
      %v1703 = vsel %vm273, %v1630, 0
      %v1706 = vsel %vm273, %v1631, 0
      %v1709 = vsel %vm273, %v1632, 0
      %v1712 = vsel %vm273, %v1633, 0
      %v1715 = vsel %vm273, %v1634, 0
      %v1718 = vsel %vm273, %v1635, 0
      %v1721 = vsel %vm273, %v1636, 0
      %v1724 = vsel %vm273, %v1637, 0
      %v1727 = vsel %vm273, %v1638, 0
      %v1730 = vsel %vm273, %v1639, 0
      %v1733 = vsel %vm273, %v1640, 0
      %v1736 = vsel %vm273, %v1641, 0
      %v1739 = vsel %vm273, %v1642, 0
      %v1742 = vsel %vm273, %v1643, 0
      %v1745 = vsel %vm273, %v1644, 0
      %v1748 = vsel %vm273, %v1645, 0
      %v1751 = vsel %vm273, %v1646, 0
      %v1754 = vsel %vm273, %v1647, 0
      %v1757 = vsel %vm273, %v1648, 0
      %v1760 = vsel %vm382, %v1650, 0
      %1762 = vmatpush.msra.mxu0 0.0
      %1763 = vmatpush.msra.mxu0 0.0
      %1764 = vmatpush.msra.mxu0 0.0
      %1765 = vmatpush.msra.mxu0 0.0
      %1766 = vmatpush.msra.mxu0 0.0
      %1767 = vmatpush.msra.mxu0 0.0
      %1768 = vmatpush.msra.mxu0 0.0
      %1769 = vmatpush.msra.mxu0 0.0
      %1770 = vmatpush.msra.mxu0 0.0
      %1771 = vmatpush.msra.mxu0 0.0
      %1772 = vmatpush.msra.mxu0 0.0
      %1773 = vmatpush.msra.mxu0 0.0
      %1774 = vmatpush.msra.mxu0 0.0
      %1775 = vmatpush.msra.mxu0 0.0
      %1776 = vmatpush.msra.mxu0 0.0
      %1777 = vmatpush.msra.mxu0 %v1760
      %1778 = vmatmul.f32.gmra.mxu0 %v1652
      %v1779 = vpop.f32.mrf.mxu0
      %v1780 = vadd.f32 0.0, %v1779
      %1781 = vmatmul.f32.gmra.mxu0 %v1655
      %v1782 = vpop.f32.mrf.mxu0
      %v1783 = vadd.f32 0.0, %v1782
      %1784 = vmatmul.f32.gmra.mxu0 %v1658
      %v1785 = vpop.f32.mrf.mxu0
      %v1786 = vadd.f32 0.0, %v1785
      %1787 = vmatmul.f32.gmra.mxu0 %v1661
      %v1788 = vpop.f32.mrf.mxu0
      %v1789 = vadd.f32 0.0, %v1788
      %1790 = vmatmul.f32.gmra.mxu0 %v1664
      %v1791 = vpop.f32.mrf.mxu0
      %v1792 = vadd.f32 0.0, %v1791
      %1793 = vmatmul.f32.gmra.mxu0 %v1667
      %v1794 = vpop.f32.mrf.mxu0
      %v1795 = vadd.f32 0.0, %v1794
      %1796 = vmatmul.f32.gmra.mxu0 %v1670
      %v1797 = vpop.f32.mrf.mxu0
      %v1798 = vadd.f32 0.0, %v1797
      %1799 = vmatmul.f32.gmra.mxu0 %v1673
      %v1800 = vpop.f32.mrf.mxu0
      %v1801 = vadd.f32 0.0, %v1800
      %1802 = vmatmul.f32.gmra.mxu0 %v1676
      %v1803 = vpop.f32.mrf.mxu0
      %v1804 = vadd.f32 0.0, %v1803
      %1805 = vmatmul.f32.gmra.mxu0 %v1679
      %v1806 = vpop.f32.mrf.mxu0
      %v1807 = vadd.f32 0.0, %v1806
      %1808 = vmatmul.f32.gmra.mxu0 %v1682
      %v1809 = vpop.f32.mrf.mxu0
      %v1810 = vadd.f32 0.0, %v1809
      %1811 = vmatmul.f32.gmra.mxu0 %v1685
      %v1812 = vpop.f32.mrf.mxu0
      %v1813 = vadd.f32 0.0, %v1812
      %1814 = vmatmul.f32.gmra.mxu0 %v1688
      %v1815 = vpop.f32.mrf.mxu0
      %v1816 = vadd.f32 0.0, %v1815
      %1817 = vmatmul.f32.gmra.mxu0 %v1691
      %v1818 = vpop.f32.mrf.mxu0
      %v1819 = vadd.f32 0.0, %v1818
      %1820 = vmatmul.f32.gmra.mxu0 %v1694
      %v1821 = vpop.f32.mrf.mxu0
      %v1822 = vadd.f32 0.0, %v1821
      %1823 = vmatmul.f32.gmra.mxu0 %v1697
      %v1824 = vpop.f32.mrf.mxu0
      %v1825 = vadd.f32 0.0, %v1824
      %1826 = vmatmul.f32.gmra.mxu0 %v1700
      %v1827 = vpop.f32.mrf.mxu0
      %v1828 = vadd.f32 0.0, %v1827
      %1829 = vmatmul.f32.gmra.mxu0 %v1703
      %v1830 = vpop.f32.mrf.mxu0
      %v1831 = vadd.f32 0.0, %v1830
      %1832 = vmatmul.f32.gmra.mxu0 %v1706
      %v1833 = vpop.f32.mrf.mxu0
      %v1834 = vadd.f32 0.0, %v1833
      %1835 = vmatmul.f32.gmra.mxu0 %v1709
      %v1836 = vpop.f32.mrf.mxu0
      %v1837 = vadd.f32 0.0, %v1836
      %1838 = vmatmul.f32.gmra.mxu0 %v1712
      %v1839 = vpop.f32.mrf.mxu0
      %v1840 = vadd.f32 0.0, %v1839
      %1841 = vmatmul.f32.gmra.mxu0 %v1715
      %v1842 = vpop.f32.mrf.mxu0
      %v1843 = vadd.f32 0.0, %v1842
      %1844 = vmatmul.f32.gmra.mxu0 %v1718
      %v1845 = vpop.f32.mrf.mxu0
      %v1846 = vadd.f32 0.0, %v1845
      %1847 = vmatmul.f32.gmra.mxu0 %v1721
      %v1848 = vpop.f32.mrf.mxu0
      %v1849 = vadd.f32 0.0, %v1848
      %1850 = vmatmul.f32.gmra.mxu0 %v1724
      %v1851 = vpop.f32.mrf.mxu0
      %v1852 = vadd.f32 0.0, %v1851
      %1853 = vmatmul.f32.gmra.mxu0 %v1727
      %v1854 = vpop.f32.mrf.mxu0
      %v1855 = vadd.f32 0.0, %v1854
      %1856 = vmatmul.f32.gmra.mxu0 %v1730
      %v1857 = vpop.f32.mrf.mxu0
      %v1858 = vadd.f32 0.0, %v1857
      %1859 = vmatmul.f32.gmra.mxu0 %v1733
      %v1860 = vpop.f32.mrf.mxu0
      %v1861 = vadd.f32 0.0, %v1860
      %1862 = vmatmul.f32.gmra.mxu0 %v1736
      %v1863 = vpop.f32.mrf.mxu0
      %v1864 = vadd.f32 0.0, %v1863
      %1865 = vmatmul.f32.gmra.mxu0 %v1739
      %v1866 = vpop.f32.mrf.mxu0
      %v1867 = vadd.f32 0.0, %v1866
      %1868 = vmatmul.f32.gmra.mxu0 %v1742
      %v1869 = vpop.f32.mrf.mxu0
      %v1870 = vadd.f32 0.0, %v1869
      %1871 = vmatmul.f32.gmra.mxu0 %v1745
      %v1872 = vpop.f32.mrf.mxu0
      %v1873 = vadd.f32 0.0, %v1872
      %1874 = vmatmul.f32.gmra.mxu0 %v1748
      %v1875 = vpop.f32.mrf.mxu0
      %v1876 = vadd.f32 0.0, %v1875
      %1877 = vmatmul.f32.gmra.mxu0 %v1751
      %v1878 = vpop.f32.mrf.mxu0
      %v1879 = vadd.f32 0.0, %v1878
      %1880 = vmatmul.f32.gmra.mxu0 %v1754
      %v1881 = vpop.f32.mrf.mxu0
      %v1882 = vadd.f32 0.0, %v1881
      %1883 = vmatmul.f32.gmra.mxu0 %v1757
      %v1884 = vpop.f32.mrf.mxu0
      %v1885 = vadd.f32 0.0, %v1884
      %1886 = vdwg.mxu0
      %v1887 = vadd.f32 %v1504, %v1780
      %v1888 = vadd.f32 %v1507, %v1783
      %v1889 = vadd.f32 %v1510, %v1786
      %v1890 = vadd.f32 %v1513, %v1789
      %v1891 = vadd.f32 %v1516, %v1792
      %v1892 = vadd.f32 %v1519, %v1795
      %v1893 = vadd.f32 %v1522, %v1798
      %v1894 = vadd.f32 %v1525, %v1801
      %v1895 = vadd.f32 %v1528, %v1804
      %v1896 = vadd.f32 %v1531, %v1807
      %v1897 = vadd.f32 %v1534, %v1810
      %v1898 = vadd.f32 %v1537, %v1813
      %v1899 = vadd.f32 %v1540, %v1816
      %v1900 = vadd.f32 %v1543, %v1819
      %v1901 = vadd.f32 %v1546, %v1822
      %v1902 = vadd.f32 %v1549, %v1825
      %v1903 = vadd.f32 %v1552, %v1828
      %v1904 = vadd.f32 %v1555, %v1831
      %v1905 = vadd.f32 %v1558, %v1834
      %v1906 = vadd.f32 %v1561, %v1837
      %v1907 = vadd.f32 %v1564, %v1840
      %v1908 = vadd.f32 %v1567, %v1843
      %v1909 = vadd.f32 %v1570, %v1846
      %v1910 = vadd.f32 %v1573, %v1849
      %v1911 = vadd.f32 %v1576, %v1852
      %v1912 = vadd.f32 %v1579, %v1855
      %v1913 = vadd.f32 %v1582, %v1858
      %v1914 = vadd.f32 %v1585, %v1861
      %v1915 = vadd.f32 %v1588, %v1864
      %v1916 = vadd.f32 %v1591, %v1867
      %v1917 = vadd.f32 %v1594, %v1870
      %v1918 = vadd.f32 %v1597, %v1873
      %v1919 = vadd.f32 %v1600, %v1876
      %v1920 = vadd.f32 %v1603, %v1879
      %v1921 = vadd.f32 %v1606, %v1882
      %v1922 = vadd.f32 %v1609, %v1885
      %s1923 = sadd.s32 %s194, 36
      %s1924 = scalar_lea.vmem %s183, %s1923
      %v1925 = vld [vmem:[%s1924] sm:$0xff]
      %v1926 = vld [vmem:[%s1924 + $0x8] sm:$0xff]
      %v1927 = vld [vmem:[%s1924 + $0x10] sm:$0xff]
      %v1928 = vld [vmem:[%s1924 + $0x18] sm:$0xff]
      %v1929 = vld [vmem:[%s1924 + $0x20] sm:$0xff]
      %v1930 = vld [vmem:[%s1924 + $0x28] sm:$0xff]
      %v1931 = vld [vmem:[%s1924 + $0x30] sm:$0xff]
      %v1932 = vld [vmem:[%s1924 + $0x38] sm:$0xff]
      %v1933 = vld [vmem:[%s1924 + $0x40] sm:$0xff]
      %v1934 = vld [vmem:[%s1924 + $0x48] sm:$0xff]
      %v1935 = vld [vmem:[%s1924 + $0x50] sm:$0xff]
      %v1936 = vld [vmem:[%s1924 + $0x58] sm:$0xff]
      %v1937 = vld [vmem:[%s1924 + $0x60] sm:$0xff]
      %v1938 = vld [vmem:[%s1924 + $0x68] sm:$0xff]
      %v1939 = vld [vmem:[%s1924 + $0x70] sm:$0xff]
      %v1940 = vld [vmem:[%s1924 + $0x78] sm:$0xff]
      %v1941 = vld [vmem:[%s1924 + $0x80] sm:$0xff]
      %v1942 = vld [vmem:[%s1924 + $0x88] sm:$0xff]
      %v1943 = vld [vmem:[%s1924 + $0x90] sm:$0xff]
      %v1944 = vld [vmem:[%s1924 + $0x98] sm:$0xff]
      %v1945 = vld [vmem:[%s1924 + $0xa0] sm:$0xff]
      %v1946 = vld [vmem:[%s1924 + $0xa8] sm:$0xff]
      %v1947 = vld [vmem:[%s1924 + $0xb0] sm:$0xff]
      %v1948 = vld [vmem:[%s1924 + $0xb8] sm:$0xff]
      %v1949 = vld [vmem:[%s1924 + $0xc0] sm:$0xff]
      %v1950 = vld [vmem:[%s1924 + $0xc8] sm:$0xff]
      %v1951 = vld [vmem:[%s1924 + $0xd0] sm:$0xff]
      %v1952 = vld [vmem:[%s1924 + $0xd8] sm:$0xff]
      %v1953 = vld [vmem:[%s1924 + $0xe0] sm:$0xff]
      %v1954 = vld [vmem:[%s1924 + $0xe8] sm:$0xff]
      %v1955 = vld [vmem:[%s1924 + $0xf0] sm:$0xff]
      %v1956 = vld [vmem:[%s1924 + $0xf8] sm:$0xff]
      %v1957 = vld [vmem:[%s1924 + $0x100] sm:$0xff]
      %v1958 = vld [vmem:[%s1924 + $0x108] sm:$0xff]
      %v1959 = vld [vmem:[%s1924 + $0x110] sm:$0xff]
      %v1960 = vld [vmem:[%s1924 + $0x118] sm:$0xff]
      %s1961 = scalar_lea.vmem %s1, 24
      %v1962 = vld [vmem:[%s1961] sm:$0xf]
      %s1963 = sadd.s32 %s194, 37
      %s1964 = scalar_lea.vmem %s183, %s1963
      %v1965 = vld [vmem:[%s1964] sm:$0xff]
      %v1966 = vld [vmem:[%s1964 + $0x8] sm:$0xff]
      %v1967 = vld [vmem:[%s1964 + $0x10] sm:$0xff]
      %v1968 = vld [vmem:[%s1964 + $0x18] sm:$0xff]
      %v1969 = vld [vmem:[%s1964 + $0x20] sm:$0xff]
      %v1970 = vld [vmem:[%s1964 + $0x28] sm:$0xff]
      %v1971 = vld [vmem:[%s1964 + $0x30] sm:$0xff]
      %v1972 = vld [vmem:[%s1964 + $0x38] sm:$0xff]
      %v1973 = vld [vmem:[%s1964 + $0x40] sm:$0xff]
      %v1974 = vld [vmem:[%s1964 + $0x48] sm:$0xff]
      %v1975 = vld [vmem:[%s1964 + $0x50] sm:$0xff]
      %v1976 = vld [vmem:[%s1964 + $0x58] sm:$0xff]
      %v1977 = vld [vmem:[%s1964 + $0x60] sm:$0xff]
      %v1978 = vld [vmem:[%s1964 + $0x68] sm:$0xff]
      %v1979 = vld [vmem:[%s1964 + $0x70] sm:$0xff]
      %v1980 = vld [vmem:[%s1964 + $0x78] sm:$0xff]
      %v1981 = vld [vmem:[%s1964 + $0x80] sm:$0xff]
      %v1982 = vld [vmem:[%s1964 + $0x88] sm:$0xff]
      %v1983 = vld [vmem:[%s1964 + $0x90] sm:$0xff]
      %v1984 = vld [vmem:[%s1964 + $0x98] sm:$0xff]
      %v1985 = vld [vmem:[%s1964 + $0xa0] sm:$0xff]
      %v1986 = vld [vmem:[%s1964 + $0xa8] sm:$0xff]
      %v1987 = vld [vmem:[%s1964 + $0xb0] sm:$0xff]
      %v1988 = vld [vmem:[%s1964 + $0xb8] sm:$0xff]
      %v1989 = vld [vmem:[%s1964 + $0xc0] sm:$0xff]
      %v1990 = vld [vmem:[%s1964 + $0xc8] sm:$0xff]
      %v1991 = vld [vmem:[%s1964 + $0xd0] sm:$0xff]
      %v1992 = vld [vmem:[%s1964 + $0xd8] sm:$0xff]
      %v1993 = vld [vmem:[%s1964 + $0xe0] sm:$0xff]
      %v1994 = vld [vmem:[%s1964 + $0xe8] sm:$0xff]
      %v1995 = vld [vmem:[%s1964 + $0xf0] sm:$0xff]
      %v1996 = vld [vmem:[%s1964 + $0xf8] sm:$0xff]
      %v1997 = vld [vmem:[%s1964 + $0x100] sm:$0xff]
      %v1998 = vld [vmem:[%s1964 + $0x108] sm:$0xff]
      %v1999 = vld [vmem:[%s1964 + $0x110] sm:$0xff]
      %v2000 = vld [vmem:[%s1964 + $0x118] sm:$0xff]
      %s2001 = scalar_lea.vmem %s1, 28
      %v2002 = vld [vmem:[%s2001] sm:$0xf]
      %v2004 = vsel %vm273, %v1965, 0
      %v2007 = vsel %vm273, %v1966, 0
      %v2010 = vsel %vm273, %v1967, 0
      %v2013 = vsel %vm273, %v1968, 0
      %v2016 = vsel %vm273, %v1969, 0
      %v2019 = vsel %vm273, %v1970, 0
      %v2022 = vsel %vm273, %v1971, 0
      %v2025 = vsel %vm273, %v1972, 0
      %v2028 = vsel %vm273, %v1973, 0
      %v2031 = vsel %vm273, %v1974, 0
      %v2034 = vsel %vm273, %v1975, 0
      %v2037 = vsel %vm273, %v1976, 0
      %v2040 = vsel %vm273, %v1977, 0
      %v2043 = vsel %vm273, %v1978, 0
      %v2046 = vsel %vm273, %v1979, 0
      %v2049 = vsel %vm273, %v1980, 0
      %v2052 = vsel %vm273, %v1981, 0
      %v2055 = vsel %vm273, %v1982, 0
      %v2058 = vsel %vm273, %v1983, 0
      %v2061 = vsel %vm273, %v1984, 0
      %v2064 = vsel %vm273, %v1985, 0
      %v2067 = vsel %vm273, %v1986, 0
      %v2070 = vsel %vm273, %v1987, 0
      %v2073 = vsel %vm273, %v1988, 0
      %v2076 = vsel %vm273, %v1989, 0
      %v2079 = vsel %vm273, %v1990, 0
      %v2082 = vsel %vm273, %v1991, 0
      %v2085 = vsel %vm273, %v1992, 0
      %v2088 = vsel %vm273, %v1993, 0
      %v2091 = vsel %vm273, %v1994, 0
      %v2094 = vsel %vm273, %v1995, 0
      %v2097 = vsel %vm273, %v1996, 0
      %v2100 = vsel %vm273, %v1997, 0
      %v2103 = vsel %vm273, %v1998, 0
      %v2106 = vsel %vm273, %v1999, 0
      %v2109 = vsel %vm273, %v2000, 0
      %v2112 = vsel %vm382, %v2002, 0
      %2114 = vmatpush.msra.mxu0 0.0
      %2115 = vmatpush.msra.mxu0 0.0
      %2116 = vmatpush.msra.mxu0 0.0
      %2117 = vmatpush.msra.mxu0 0.0
      %2118 = vmatpush.msra.mxu0 0.0
      %2119 = vmatpush.msra.mxu0 0.0
      %2120 = vmatpush.msra.mxu0 0.0
      %2121 = vmatpush.msra.mxu0 0.0
      %2122 = vmatpush.msra.mxu0 0.0
      %2123 = vmatpush.msra.mxu0 0.0
      %2124 = vmatpush.msra.mxu0 0.0
      %2125 = vmatpush.msra.mxu0 0.0
      %2126 = vmatpush.msra.mxu0 0.0
      %2127 = vmatpush.msra.mxu0 0.0
      %2128 = vmatpush.msra.mxu0 0.0
      %2129 = vmatpush.msra.mxu0 %v2112
      %2130 = vmatmul.f32.gmra.mxu0 %v2004
      %v2131 = vpop.f32.mrf.mxu0
      %v2132 = vadd.f32 0.0, %v2131
      %2133 = vmatmul.f32.gmra.mxu0 %v2007
      %v2134 = vpop.f32.mrf.mxu0
      %v2135 = vadd.f32 0.0, %v2134
      %2136 = vmatmul.f32.gmra.mxu0 %v2010
      %v2137 = vpop.f32.mrf.mxu0
      %v2138 = vadd.f32 0.0, %v2137
      %2139 = vmatmul.f32.gmra.mxu0 %v2013
      %v2140 = vpop.f32.mrf.mxu0
      %v2141 = vadd.f32 0.0, %v2140
      %2142 = vmatmul.f32.gmra.mxu0 %v2016
      %v2143 = vpop.f32.mrf.mxu0
      %v2144 = vadd.f32 0.0, %v2143
      %2145 = vmatmul.f32.gmra.mxu0 %v2019
      %v2146 = vpop.f32.mrf.mxu0
      %v2147 = vadd.f32 0.0, %v2146
      %2148 = vmatmul.f32.gmra.mxu0 %v2022
      %v2149 = vpop.f32.mrf.mxu0
      %v2150 = vadd.f32 0.0, %v2149
      %2151 = vmatmul.f32.gmra.mxu0 %v2025
      %v2152 = vpop.f32.mrf.mxu0
      %v2153 = vadd.f32 0.0, %v2152
      %2154 = vmatmul.f32.gmra.mxu0 %v2028
      %v2155 = vpop.f32.mrf.mxu0
      %v2156 = vadd.f32 0.0, %v2155
      %2157 = vmatmul.f32.gmra.mxu0 %v2031
      %v2158 = vpop.f32.mrf.mxu0
      %v2159 = vadd.f32 0.0, %v2158
      %2160 = vmatmul.f32.gmra.mxu0 %v2034
      %v2161 = vpop.f32.mrf.mxu0
      %v2162 = vadd.f32 0.0, %v2161
      %2163 = vmatmul.f32.gmra.mxu0 %v2037
      %v2164 = vpop.f32.mrf.mxu0
      %v2165 = vadd.f32 0.0, %v2164
      %2166 = vmatmul.f32.gmra.mxu0 %v2040
      %v2167 = vpop.f32.mrf.mxu0
      %v2168 = vadd.f32 0.0, %v2167
      %2169 = vmatmul.f32.gmra.mxu0 %v2043
      %v2170 = vpop.f32.mrf.mxu0
      %v2171 = vadd.f32 0.0, %v2170
      %2172 = vmatmul.f32.gmra.mxu0 %v2046
      %v2173 = vpop.f32.mrf.mxu0
      %v2174 = vadd.f32 0.0, %v2173
      %2175 = vmatmul.f32.gmra.mxu0 %v2049
      %v2176 = vpop.f32.mrf.mxu0
      %v2177 = vadd.f32 0.0, %v2176
      %2178 = vmatmul.f32.gmra.mxu0 %v2052
      %v2179 = vpop.f32.mrf.mxu0
      %v2180 = vadd.f32 0.0, %v2179
      %2181 = vmatmul.f32.gmra.mxu0 %v2055
      %v2182 = vpop.f32.mrf.mxu0
      %v2183 = vadd.f32 0.0, %v2182
      %2184 = vmatmul.f32.gmra.mxu0 %v2058
      %v2185 = vpop.f32.mrf.mxu0
      %v2186 = vadd.f32 0.0, %v2185
      %2187 = vmatmul.f32.gmra.mxu0 %v2061
      %v2188 = vpop.f32.mrf.mxu0
      %v2189 = vadd.f32 0.0, %v2188
      %2190 = vmatmul.f32.gmra.mxu0 %v2064
      %v2191 = vpop.f32.mrf.mxu0
      %v2192 = vadd.f32 0.0, %v2191
      %2193 = vmatmul.f32.gmra.mxu0 %v2067
      %v2194 = vpop.f32.mrf.mxu0
      %v2195 = vadd.f32 0.0, %v2194
      %2196 = vmatmul.f32.gmra.mxu0 %v2070
      %v2197 = vpop.f32.mrf.mxu0
      %v2198 = vadd.f32 0.0, %v2197
      %2199 = vmatmul.f32.gmra.mxu0 %v2073
      %v2200 = vpop.f32.mrf.mxu0
      %v2201 = vadd.f32 0.0, %v2200
      %2202 = vmatmul.f32.gmra.mxu0 %v2076
      %v2203 = vpop.f32.mrf.mxu0
      %v2204 = vadd.f32 0.0, %v2203
      %2205 = vmatmul.f32.gmra.mxu0 %v2079
      %v2206 = vpop.f32.mrf.mxu0
      %v2207 = vadd.f32 0.0, %v2206
      %2208 = vmatmul.f32.gmra.mxu0 %v2082
      %v2209 = vpop.f32.mrf.mxu0
      %v2210 = vadd.f32 0.0, %v2209
      %2211 = vmatmul.f32.gmra.mxu0 %v2085
      %v2212 = vpop.f32.mrf.mxu0
      %v2213 = vadd.f32 0.0, %v2212
      %2214 = vmatmul.f32.gmra.mxu0 %v2088
      %v2215 = vpop.f32.mrf.mxu0
      %v2216 = vadd.f32 0.0, %v2215
      %2217 = vmatmul.f32.gmra.mxu0 %v2091
      %v2218 = vpop.f32.mrf.mxu0
      %v2219 = vadd.f32 0.0, %v2218
      %2220 = vmatmul.f32.gmra.mxu0 %v2094
      %v2221 = vpop.f32.mrf.mxu0
      %v2222 = vadd.f32 0.0, %v2221
      %2223 = vmatmul.f32.gmra.mxu0 %v2097
      %v2224 = vpop.f32.mrf.mxu0
      %v2225 = vadd.f32 0.0, %v2224
      %2226 = vmatmul.f32.gmra.mxu0 %v2100
      %v2227 = vpop.f32.mrf.mxu0
      %v2228 = vadd.f32 0.0, %v2227
      %2229 = vmatmul.f32.gmra.mxu0 %v2103
      %v2230 = vpop.f32.mrf.mxu0
      %v2231 = vadd.f32 0.0, %v2230
      %2232 = vmatmul.f32.gmra.mxu0 %v2106
      %v2233 = vpop.f32.mrf.mxu0
      %v2234 = vadd.f32 0.0, %v2233
      %2235 = vmatmul.f32.gmra.mxu0 %v2109
      %v2236 = vpop.f32.mrf.mxu0
      %v2237 = vadd.f32 0.0, %v2236
      %2238 = vdwg.mxu0
      %v2240 = vsel %vm273, %v1925, 0
      %v2243 = vsel %vm273, %v1926, 0
      %v2246 = vsel %vm273, %v1927, 0
      %v2249 = vsel %vm273, %v1928, 0
      %v2252 = vsel %vm273, %v1929, 0
      %v2255 = vsel %vm273, %v1930, 0
      %v2258 = vsel %vm273, %v1931, 0
      %v2261 = vsel %vm273, %v1932, 0
      %v2264 = vsel %vm273, %v1933, 0
      %v2267 = vsel %vm273, %v1934, 0
      %v2270 = vsel %vm273, %v1935, 0
      %v2273 = vsel %vm273, %v1936, 0
      %v2276 = vsel %vm273, %v1937, 0
      %v2279 = vsel %vm273, %v1938, 0
      %v2282 = vsel %vm273, %v1939, 0
      %v2285 = vsel %vm273, %v1940, 0
      %v2288 = vsel %vm273, %v1941, 0
      %v2291 = vsel %vm273, %v1942, 0
      %v2294 = vsel %vm273, %v1943, 0
      %v2297 = vsel %vm273, %v1944, 0
      %v2300 = vsel %vm273, %v1945, 0
      %v2303 = vsel %vm273, %v1946, 0
      %v2306 = vsel %vm273, %v1947, 0
      %v2309 = vsel %vm273, %v1948, 0
      %v2312 = vsel %vm273, %v1949, 0
      %v2315 = vsel %vm273, %v1950, 0
      %v2318 = vsel %vm273, %v1951, 0
      %v2321 = vsel %vm273, %v1952, 0
      %v2324 = vsel %vm273, %v1953, 0
      %v2327 = vsel %vm273, %v1954, 0
      %v2330 = vsel %vm273, %v1955, 0
      %v2333 = vsel %vm273, %v1956, 0
      %v2336 = vsel %vm273, %v1957, 0
      %v2339 = vsel %vm273, %v1958, 0
      %v2342 = vsel %vm273, %v1959, 0
      %v2345 = vsel %vm273, %v1960, 0
      %v2348 = vsel %vm382, %v1962, 0
      %2350 = vmatpush.msra.mxu0 0.0
      %2351 = vmatpush.msra.mxu0 0.0
      %2352 = vmatpush.msra.mxu0 0.0
      %2353 = vmatpush.msra.mxu0 0.0
      %2354 = vmatpush.msra.mxu0 0.0
      %2355 = vmatpush.msra.mxu0 0.0
      %2356 = vmatpush.msra.mxu0 0.0
      %2357 = vmatpush.msra.mxu0 0.0
      %2358 = vmatpush.msra.mxu0 0.0
      %2359 = vmatpush.msra.mxu0 0.0
      %2360 = vmatpush.msra.mxu0 0.0
      %2361 = vmatpush.msra.mxu0 0.0
      %2362 = vmatpush.msra.mxu0 0.0
      %2363 = vmatpush.msra.mxu0 0.0
      %2364 = vmatpush.msra.mxu0 0.0
      %2365 = vmatpush.msra.mxu0 %v2348
      %2366 = vmatmul.f32.gmra.mxu0 %v2240
      %v2367 = vpop.f32.mrf.mxu0
      %v2368 = vadd.f32 %v2132, %v2367
      %2369 = vmatmul.f32.gmra.mxu0 %v2243
      %v2370 = vpop.f32.mrf.mxu0
      %v2371 = vadd.f32 %v2135, %v2370
      %2372 = vmatmul.f32.gmra.mxu0 %v2246
      %v2373 = vpop.f32.mrf.mxu0
      %v2374 = vadd.f32 %v2138, %v2373
      %2375 = vmatmul.f32.gmra.mxu0 %v2249
      %v2376 = vpop.f32.mrf.mxu0
      %v2377 = vadd.f32 %v2141, %v2376
      %2378 = vmatmul.f32.gmra.mxu0 %v2252
      %v2379 = vpop.f32.mrf.mxu0
      %v2380 = vadd.f32 %v2144, %v2379
      %2381 = vmatmul.f32.gmra.mxu0 %v2255
      %v2382 = vpop.f32.mrf.mxu0
      %v2383 = vadd.f32 %v2147, %v2382
      %2384 = vmatmul.f32.gmra.mxu0 %v2258
      %v2385 = vpop.f32.mrf.mxu0
      %v2386 = vadd.f32 %v2150, %v2385
      %2387 = vmatmul.f32.gmra.mxu0 %v2261
      %v2388 = vpop.f32.mrf.mxu0
      %v2389 = vadd.f32 %v2153, %v2388
      %2390 = vmatmul.f32.gmra.mxu0 %v2264
      %v2391 = vpop.f32.mrf.mxu0
      %v2392 = vadd.f32 %v2156, %v2391
      %2393 = vmatmul.f32.gmra.mxu0 %v2267
      %v2394 = vpop.f32.mrf.mxu0
      %v2395 = vadd.f32 %v2159, %v2394
      %2396 = vmatmul.f32.gmra.mxu0 %v2270
      %v2397 = vpop.f32.mrf.mxu0
      %v2398 = vadd.f32 %v2162, %v2397
      %2399 = vmatmul.f32.gmra.mxu0 %v2273
      %v2400 = vpop.f32.mrf.mxu0
      %v2401 = vadd.f32 %v2165, %v2400
      %2402 = vmatmul.f32.gmra.mxu0 %v2276
      %v2403 = vpop.f32.mrf.mxu0
      %v2404 = vadd.f32 %v2168, %v2403
      %2405 = vmatmul.f32.gmra.mxu0 %v2279
      %v2406 = vpop.f32.mrf.mxu0
      %v2407 = vadd.f32 %v2171, %v2406
      %2408 = vmatmul.f32.gmra.mxu0 %v2282
      %v2409 = vpop.f32.mrf.mxu0
      %v2410 = vadd.f32 %v2174, %v2409
      %2411 = vmatmul.f32.gmra.mxu0 %v2285
      %v2412 = vpop.f32.mrf.mxu0
      %v2413 = vadd.f32 %v2177, %v2412
      %2414 = vmatmul.f32.gmra.mxu0 %v2288
      %v2415 = vpop.f32.mrf.mxu0
      %v2416 = vadd.f32 %v2180, %v2415
      %2417 = vmatmul.f32.gmra.mxu0 %v2291
      %v2418 = vpop.f32.mrf.mxu0
      %v2419 = vadd.f32 %v2183, %v2418
      %2420 = vmatmul.f32.gmra.mxu0 %v2294
      %v2421 = vpop.f32.mrf.mxu0
      %v2422 = vadd.f32 %v2186, %v2421
      %2423 = vmatmul.f32.gmra.mxu0 %v2297
      %v2424 = vpop.f32.mrf.mxu0
      %v2425 = vadd.f32 %v2189, %v2424
      %2426 = vmatmul.f32.gmra.mxu0 %v2300
      %v2427 = vpop.f32.mrf.mxu0
      %v2428 = vadd.f32 %v2192, %v2427
      %2429 = vmatmul.f32.gmra.mxu0 %v2303
      %v2430 = vpop.f32.mrf.mxu0
      %v2431 = vadd.f32 %v2195, %v2430
      %2432 = vmatmul.f32.gmra.mxu0 %v2306
      %v2433 = vpop.f32.mrf.mxu0
      %v2434 = vadd.f32 %v2198, %v2433
      %2435 = vmatmul.f32.gmra.mxu0 %v2309
      %v2436 = vpop.f32.mrf.mxu0
      %v2437 = vadd.f32 %v2201, %v2436
      %2438 = vmatmul.f32.gmra.mxu0 %v2312
      %v2439 = vpop.f32.mrf.mxu0
      %v2440 = vadd.f32 %v2204, %v2439
      %2441 = vmatmul.f32.gmra.mxu0 %v2315
      %v2442 = vpop.f32.mrf.mxu0
      %v2443 = vadd.f32 %v2207, %v2442
      %2444 = vmatmul.f32.gmra.mxu0 %v2318
      %v2445 = vpop.f32.mrf.mxu0
      %v2446 = vadd.f32 %v2210, %v2445
      %2447 = vmatmul.f32.gmra.mxu0 %v2321
      %v2448 = vpop.f32.mrf.mxu0
      %v2449 = vadd.f32 %v2213, %v2448
      %2450 = vmatmul.f32.gmra.mxu0 %v2324
      %v2451 = vpop.f32.mrf.mxu0
      %v2452 = vadd.f32 %v2216, %v2451
      %2453 = vmatmul.f32.gmra.mxu0 %v2327
      %v2454 = vpop.f32.mrf.mxu0
      %v2455 = vadd.f32 %v2219, %v2454
      %2456 = vmatmul.f32.gmra.mxu0 %v2330
      %v2457 = vpop.f32.mrf.mxu0
      %v2458 = vadd.f32 %v2222, %v2457
      %2459 = vmatmul.f32.gmra.mxu0 %v2333
      %v2460 = vpop.f32.mrf.mxu0
      %v2461 = vadd.f32 %v2225, %v2460
      %2462 = vmatmul.f32.gmra.mxu0 %v2336
      %v2463 = vpop.f32.mrf.mxu0
      %v2464 = vadd.f32 %v2228, %v2463
      %2465 = vmatmul.f32.gmra.mxu0 %v2339
      %v2466 = vpop.f32.mrf.mxu0
      %v2467 = vadd.f32 %v2231, %v2466
      %2468 = vmatmul.f32.gmra.mxu0 %v2342
      %v2469 = vpop.f32.mrf.mxu0
      %v2470 = vadd.f32 %v2234, %v2469
      %2471 = vmatmul.f32.gmra.mxu0 %v2345
      %v2472 = vpop.f32.mrf.mxu0
      %v2473 = vadd.f32 %v2237, %v2472
      %2474 = vdwg.mxu0
      %s2475 = sadd.s32 %s194, 38
      %s2476 = scalar_lea.vmem %s183, %s2475
      %v2477 = vld [vmem:[%s2476] sm:$0xff]
      %v2478 = vld [vmem:[%s2476 + $0x8] sm:$0xff]
      %v2479 = vld [vmem:[%s2476 + $0x10] sm:$0xff]
      %v2480 = vld [vmem:[%s2476 + $0x18] sm:$0xff]
      %v2481 = vld [vmem:[%s2476 + $0x20] sm:$0xff]
      %v2482 = vld [vmem:[%s2476 + $0x28] sm:$0xff]
      %v2483 = vld [vmem:[%s2476 + $0x30] sm:$0xff]
      %v2484 = vld [vmem:[%s2476 + $0x38] sm:$0xff]
      %v2485 = vld [vmem:[%s2476 + $0x40] sm:$0xff]
      %v2486 = vld [vmem:[%s2476 + $0x48] sm:$0xff]
      %v2487 = vld [vmem:[%s2476 + $0x50] sm:$0xff]
      %v2488 = vld [vmem:[%s2476 + $0x58] sm:$0xff]
      %v2489 = vld [vmem:[%s2476 + $0x60] sm:$0xff]
      %v2490 = vld [vmem:[%s2476 + $0x68] sm:$0xff]
      %v2491 = vld [vmem:[%s2476 + $0x70] sm:$0xff]
      %v2492 = vld [vmem:[%s2476 + $0x78] sm:$0xff]
      %v2493 = vld [vmem:[%s2476 + $0x80] sm:$0xff]
      %v2494 = vld [vmem:[%s2476 + $0x88] sm:$0xff]
      %v2495 = vld [vmem:[%s2476 + $0x90] sm:$0xff]
      %v2496 = vld [vmem:[%s2476 + $0x98] sm:$0xff]
      %v2497 = vld [vmem:[%s2476 + $0xa0] sm:$0xff]
      %v2498 = vld [vmem:[%s2476 + $0xa8] sm:$0xff]
      %v2499 = vld [vmem:[%s2476 + $0xb0] sm:$0xff]
      %v2500 = vld [vmem:[%s2476 + $0xb8] sm:$0xff]
      %v2501 = vld [vmem:[%s2476 + $0xc0] sm:$0xff]
      %v2502 = vld [vmem:[%s2476 + $0xc8] sm:$0xff]
      %v2503 = vld [vmem:[%s2476 + $0xd0] sm:$0xff]
      %v2504 = vld [vmem:[%s2476 + $0xd8] sm:$0xff]
      %v2505 = vld [vmem:[%s2476 + $0xe0] sm:$0xff]
      %v2506 = vld [vmem:[%s2476 + $0xe8] sm:$0xff]
      %v2507 = vld [vmem:[%s2476 + $0xf0] sm:$0xff]
      %v2508 = vld [vmem:[%s2476 + $0xf8] sm:$0xff]
      %v2509 = vld [vmem:[%s2476 + $0x100] sm:$0xff]
      %v2510 = vld [vmem:[%s2476 + $0x108] sm:$0xff]
      %v2511 = vld [vmem:[%s2476 + $0x110] sm:$0xff]
      %v2512 = vld [vmem:[%s2476 + $0x118] sm:$0xff]
      %s2513 = scalar_lea.vmem %s1, 32
      %v2514 = vld [vmem:[%s2513] sm:$0xf]
      %v2516 = vsel %vm273, %v2477, 0
      %v2519 = vsel %vm273, %v2478, 0
      %v2522 = vsel %vm273, %v2479, 0
      %v2525 = vsel %vm273, %v2480, 0
      %v2528 = vsel %vm273, %v2481, 0
      %v2531 = vsel %vm273, %v2482, 0
      %v2534 = vsel %vm273, %v2483, 0
      %v2537 = vsel %vm273, %v2484, 0
      %v2540 = vsel %vm273, %v2485, 0
      %v2543 = vsel %vm273, %v2486, 0
      %v2546 = vsel %vm273, %v2487, 0
      %v2549 = vsel %vm273, %v2488, 0
      %v2552 = vsel %vm273, %v2489, 0
      %v2555 = vsel %vm273, %v2490, 0
      %v2558 = vsel %vm273, %v2491, 0
      %v2561 = vsel %vm273, %v2492, 0
      %v2564 = vsel %vm273, %v2493, 0
      %v2567 = vsel %vm273, %v2494, 0
      %v2570 = vsel %vm273, %v2495, 0
      %v2573 = vsel %vm273, %v2496, 0
      %v2576 = vsel %vm273, %v2497, 0
      %v2579 = vsel %vm273, %v2498, 0
      %v2582 = vsel %vm273, %v2499, 0
      %v2585 = vsel %vm273, %v2500, 0
      %v2588 = vsel %vm273, %v2501, 0
      %v2591 = vsel %vm273, %v2502, 0
      %v2594 = vsel %vm273, %v2503, 0
      %v2597 = vsel %vm273, %v2504, 0
      %v2600 = vsel %vm273, %v2505, 0
      %v2603 = vsel %vm273, %v2506, 0
      %v2606 = vsel %vm273, %v2507, 0
      %v2609 = vsel %vm273, %v2508, 0
      %v2612 = vsel %vm273, %v2509, 0
      %v2615 = vsel %vm273, %v2510, 0
      %v2618 = vsel %vm273, %v2511, 0
      %v2621 = vsel %vm273, %v2512, 0
      %v2624 = vsel %vm382, %v2514, 0
      %2626 = vmatpush.msra.mxu0 0.0
      %2627 = vmatpush.msra.mxu0 0.0
      %2628 = vmatpush.msra.mxu0 0.0
      %2629 = vmatpush.msra.mxu0 0.0
      %2630 = vmatpush.msra.mxu0 0.0
      %2631 = vmatpush.msra.mxu0 0.0
      %2632 = vmatpush.msra.mxu0 0.0
      %2633 = vmatpush.msra.mxu0 0.0
      %2634 = vmatpush.msra.mxu0 0.0
      %2635 = vmatpush.msra.mxu0 0.0
      %2636 = vmatpush.msra.mxu0 0.0
      %2637 = vmatpush.msra.mxu0 0.0
      %2638 = vmatpush.msra.mxu0 0.0
      %2639 = vmatpush.msra.mxu0 0.0
      %2640 = vmatpush.msra.mxu0 0.0
      %2641 = vmatpush.msra.mxu0 %v2624
      %2642 = vmatmul.f32.gmra.mxu0 %v2516
      %v2643 = vpop.f32.mrf.mxu0
      %v2644 = vadd.f32 0.0, %v2643
      %2645 = vmatmul.f32.gmra.mxu0 %v2519
      %v2646 = vpop.f32.mrf.mxu0
      %v2647 = vadd.f32 0.0, %v2646
      %2648 = vmatmul.f32.gmra.mxu0 %v2522
      %v2649 = vpop.f32.mrf.mxu0
      %v2650 = vadd.f32 0.0, %v2649
      %2651 = vmatmul.f32.gmra.mxu0 %v2525
      %v2652 = vpop.f32.mrf.mxu0
      %v2653 = vadd.f32 0.0, %v2652
      %2654 = vmatmul.f32.gmra.mxu0 %v2528
      %v2655 = vpop.f32.mrf.mxu0
      %v2656 = vadd.f32 0.0, %v2655
      %2657 = vmatmul.f32.gmra.mxu0 %v2531
      %v2658 = vpop.f32.mrf.mxu0
      %v2659 = vadd.f32 0.0, %v2658
      %2660 = vmatmul.f32.gmra.mxu0 %v2534
      %v2661 = vpop.f32.mrf.mxu0
      %v2662 = vadd.f32 0.0, %v2661
      %2663 = vmatmul.f32.gmra.mxu0 %v2537
      %v2664 = vpop.f32.mrf.mxu0
      %v2665 = vadd.f32 0.0, %v2664
      %2666 = vmatmul.f32.gmra.mxu0 %v2540
      %v2667 = vpop.f32.mrf.mxu0
      %v2668 = vadd.f32 0.0, %v2667
      %2669 = vmatmul.f32.gmra.mxu0 %v2543
      %v2670 = vpop.f32.mrf.mxu0
      %v2671 = vadd.f32 0.0, %v2670
      %2672 = vmatmul.f32.gmra.mxu0 %v2546
      %v2673 = vpop.f32.mrf.mxu0
      %v2674 = vadd.f32 0.0, %v2673
      %2675 = vmatmul.f32.gmra.mxu0 %v2549
      %v2676 = vpop.f32.mrf.mxu0
      %v2677 = vadd.f32 0.0, %v2676
      %2678 = vmatmul.f32.gmra.mxu0 %v2552
      %v2679 = vpop.f32.mrf.mxu0
      %v2680 = vadd.f32 0.0, %v2679
      %2681 = vmatmul.f32.gmra.mxu0 %v2555
      %v2682 = vpop.f32.mrf.mxu0
      %v2683 = vadd.f32 0.0, %v2682
      %2684 = vmatmul.f32.gmra.mxu0 %v2558
      %v2685 = vpop.f32.mrf.mxu0
      %v2686 = vadd.f32 0.0, %v2685
      %2687 = vmatmul.f32.gmra.mxu0 %v2561
      %v2688 = vpop.f32.mrf.mxu0
      %v2689 = vadd.f32 0.0, %v2688
      %2690 = vmatmul.f32.gmra.mxu0 %v2564
      %v2691 = vpop.f32.mrf.mxu0
      %v2692 = vadd.f32 0.0, %v2691
      %2693 = vmatmul.f32.gmra.mxu0 %v2567
      %v2694 = vpop.f32.mrf.mxu0
      %v2695 = vadd.f32 0.0, %v2694
      %2696 = vmatmul.f32.gmra.mxu0 %v2570
      %v2697 = vpop.f32.mrf.mxu0
      %v2698 = vadd.f32 0.0, %v2697
      %2699 = vmatmul.f32.gmra.mxu0 %v2573
      %v2700 = vpop.f32.mrf.mxu0
      %v2701 = vadd.f32 0.0, %v2700
      %2702 = vmatmul.f32.gmra.mxu0 %v2576
      %v2703 = vpop.f32.mrf.mxu0
      %v2704 = vadd.f32 0.0, %v2703
      %2705 = vmatmul.f32.gmra.mxu0 %v2579
      %v2706 = vpop.f32.mrf.mxu0
      %v2707 = vadd.f32 0.0, %v2706
      %2708 = vmatmul.f32.gmra.mxu0 %v2582
      %v2709 = vpop.f32.mrf.mxu0
      %v2710 = vadd.f32 0.0, %v2709
      %2711 = vmatmul.f32.gmra.mxu0 %v2585
      %v2712 = vpop.f32.mrf.mxu0
      %v2713 = vadd.f32 0.0, %v2712
      %2714 = vmatmul.f32.gmra.mxu0 %v2588
      %v2715 = vpop.f32.mrf.mxu0
      %v2716 = vadd.f32 0.0, %v2715
      %2717 = vmatmul.f32.gmra.mxu0 %v2591
      %v2718 = vpop.f32.mrf.mxu0
      %v2719 = vadd.f32 0.0, %v2718
      %2720 = vmatmul.f32.gmra.mxu0 %v2594
      %v2721 = vpop.f32.mrf.mxu0
      %v2722 = vadd.f32 0.0, %v2721
      %2723 = vmatmul.f32.gmra.mxu0 %v2597
      %v2724 = vpop.f32.mrf.mxu0
      %v2725 = vadd.f32 0.0, %v2724
      %2726 = vmatmul.f32.gmra.mxu0 %v2600
      %v2727 = vpop.f32.mrf.mxu0
      %v2728 = vadd.f32 0.0, %v2727
      %2729 = vmatmul.f32.gmra.mxu0 %v2603
      %v2730 = vpop.f32.mrf.mxu0
      %v2731 = vadd.f32 0.0, %v2730
      %2732 = vmatmul.f32.gmra.mxu0 %v2606
      %v2733 = vpop.f32.mrf.mxu0
      %v2734 = vadd.f32 0.0, %v2733
      %2735 = vmatmul.f32.gmra.mxu0 %v2609
      %v2736 = vpop.f32.mrf.mxu0
      %v2737 = vadd.f32 0.0, %v2736
      %2738 = vmatmul.f32.gmra.mxu0 %v2612
      %v2739 = vpop.f32.mrf.mxu0
      %v2740 = vadd.f32 0.0, %v2739
      %2741 = vmatmul.f32.gmra.mxu0 %v2615
      %v2742 = vpop.f32.mrf.mxu0
      %v2743 = vadd.f32 0.0, %v2742
      %2744 = vmatmul.f32.gmra.mxu0 %v2618
      %v2745 = vpop.f32.mrf.mxu0
      %v2746 = vadd.f32 0.0, %v2745
      %2747 = vmatmul.f32.gmra.mxu0 %v2621
      %v2748 = vpop.f32.mrf.mxu0
      %v2749 = vadd.f32 0.0, %v2748
      %2750 = vdwg.mxu0
      %v2751 = vadd.f32 %v2368, %v2644
      %v2752 = vadd.f32 %v2371, %v2647
      %v2753 = vadd.f32 %v2374, %v2650
      %v2754 = vadd.f32 %v2377, %v2653
      %v2755 = vadd.f32 %v2380, %v2656
      %v2756 = vadd.f32 %v2383, %v2659
      %v2757 = vadd.f32 %v2386, %v2662
      %v2758 = vadd.f32 %v2389, %v2665
      %v2759 = vadd.f32 %v2392, %v2668
      %v2760 = vadd.f32 %v2395, %v2671
      %v2761 = vadd.f32 %v2398, %v2674
      %v2762 = vadd.f32 %v2401, %v2677
      %v2763 = vadd.f32 %v2404, %v2680
      %v2764 = vadd.f32 %v2407, %v2683
      %v2765 = vadd.f32 %v2410, %v2686
      %v2766 = vadd.f32 %v2413, %v2689
      %v2767 = vadd.f32 %v2416, %v2692
      %v2768 = vadd.f32 %v2419, %v2695
      %v2769 = vadd.f32 %v2422, %v2698
      %v2770 = vadd.f32 %v2425, %v2701
      %v2771 = vadd.f32 %v2428, %v2704
      %v2772 = vadd.f32 %v2431, %v2707
      %v2773 = vadd.f32 %v2434, %v2710
      %v2774 = vadd.f32 %v2437, %v2713
      %v2775 = vadd.f32 %v2440, %v2716
      %v2776 = vadd.f32 %v2443, %v2719
      %v2777 = vadd.f32 %v2446, %v2722
      %v2778 = vadd.f32 %v2449, %v2725
      %v2779 = vadd.f32 %v2452, %v2728
      %v2780 = vadd.f32 %v2455, %v2731
      %v2781 = vadd.f32 %v2458, %v2734
      %v2782 = vadd.f32 %v2461, %v2737
      %v2783 = vadd.f32 %v2464, %v2740
      %v2784 = vadd.f32 %v2467, %v2743
      %v2785 = vadd.f32 %v2470, %v2746
      %v2786 = vadd.f32 %v2473, %v2749
      %v2787 = vadd.f32 %v1023, %v1887
      %v2788 = vadd.f32 %v1024, %v1888
      %v2789 = vadd.f32 %v1025, %v1889
      %v2790 = vadd.f32 %v1026, %v1890
      %v2791 = vadd.f32 %v1027, %v1891
      %v2792 = vadd.f32 %v1028, %v1892
      %v2793 = vadd.f32 %v1029, %v1893
      %v2794 = vadd.f32 %v1030, %v1894
      %v2795 = vadd.f32 %v1031, %v1895
      %v2796 = vadd.f32 %v1032, %v1896
      %v2797 = vadd.f32 %v1033, %v1897
      %v2798 = vadd.f32 %v1034, %v1898
      %v2799 = vadd.f32 %v1035, %v1899
      %v2800 = vadd.f32 %v1036, %v1900
      %v2801 = vadd.f32 %v1037, %v1901
      %v2802 = vadd.f32 %v1038, %v1902
      %v2803 = vadd.f32 %v1039, %v1903
      %v2804 = vadd.f32 %v1040, %v1904
      %v2805 = vadd.f32 %v1041, %v1905
      %v2806 = vadd.f32 %v1042, %v1906
      %v2807 = vadd.f32 %v1043, %v1907
      %v2808 = vadd.f32 %v1044, %v1908
      %v2809 = vadd.f32 %v1045, %v1909
      %v2810 = vadd.f32 %v1046, %v1910
      %v2811 = vadd.f32 %v1047, %v1911
      %v2812 = vadd.f32 %v1048, %v1912
      %v2813 = vadd.f32 %v1049, %v1913
      %v2814 = vadd.f32 %v1050, %v1914
      %v2815 = vadd.f32 %v1051, %v1915
      %v2816 = vadd.f32 %v1052, %v1916
      %v2817 = vadd.f32 %v1053, %v1917
      %v2818 = vadd.f32 %v1054, %v1918
      %v2819 = vadd.f32 %v1055, %v1919
      %v2820 = vadd.f32 %v1056, %v1920
      %v2821 = vadd.f32 %v1057, %v1921
      %v2822 = vadd.f32 %v1058, %v1922
      %v2823 = vld [vmem:[%s2] sm:$0x1]
      %v2825 = vperm.slane %v2823, 0
      %v2827 = vadd.f32 %v2751, %v2825
      %v2828 = vadd.f32 %v2752, %v2825
      %v2829 = vadd.f32 %v2753, %v2825
      %v2830 = vadd.f32 %v2754, %v2825
      %v2831 = vadd.f32 %v2755, %v2825
      %v2832 = vadd.f32 %v2756, %v2825
      %v2833 = vadd.f32 %v2757, %v2825
      %v2834 = vadd.f32 %v2758, %v2825
      %v2835 = vadd.f32 %v2759, %v2825
      %v2836 = vadd.f32 %v2760, %v2825
      %v2837 = vadd.f32 %v2761, %v2825
      %v2838 = vadd.f32 %v2762, %v2825
      %v2839 = vadd.f32 %v2763, %v2825
      %v2840 = vadd.f32 %v2764, %v2825
      %v2841 = vadd.f32 %v2765, %v2825
      %v2842 = vadd.f32 %v2766, %v2825
      %v2843 = vadd.f32 %v2767, %v2825
      %v2844 = vadd.f32 %v2768, %v2825
      %v2845 = vadd.f32 %v2769, %v2825
      %v2846 = vadd.f32 %v2770, %v2825
      %v2847 = vadd.f32 %v2771, %v2825
      %v2848 = vadd.f32 %v2772, %v2825
      %v2849 = vadd.f32 %v2773, %v2825
      %v2850 = vadd.f32 %v2774, %v2825
      %v2851 = vadd.f32 %v2775, %v2825
      %v2852 = vadd.f32 %v2776, %v2825
      %v2853 = vadd.f32 %v2777, %v2825
      %v2854 = vadd.f32 %v2778, %v2825
      %v2855 = vadd.f32 %v2779, %v2825
      %v2856 = vadd.f32 %v2780, %v2825
      %v2857 = vadd.f32 %v2781, %v2825
      %v2858 = vadd.f32 %v2782, %v2825
      %v2859 = vadd.f32 %v2783, %v2825
      %v2860 = vadd.f32 %v2784, %v2825
      %v2861 = vadd.f32 %v2785, %v2825
      %v2862 = vadd.f32 %v2786, %v2825
      %v2863 = vadd.f32 %v2787, %v2827
      %v2864 = vadd.f32 %v2788, %v2828
      %v2865 = vadd.f32 %v2789, %v2829
      %v2866 = vadd.f32 %v2790, %v2830
      %v2867 = vadd.f32 %v2791, %v2831
      %v2868 = vadd.f32 %v2792, %v2832
      %v2869 = vadd.f32 %v2793, %v2833
      %v2870 = vadd.f32 %v2794, %v2834
      %v2871 = vadd.f32 %v2795, %v2835
      %v2872 = vadd.f32 %v2796, %v2836
      %v2873 = vadd.f32 %v2797, %v2837
      %v2874 = vadd.f32 %v2798, %v2838
      %v2875 = vadd.f32 %v2799, %v2839
      %v2876 = vadd.f32 %v2800, %v2840
      %v2877 = vadd.f32 %v2801, %v2841
      %v2878 = vadd.f32 %v2802, %v2842
      %v2879 = vadd.f32 %v2803, %v2843
      %v2880 = vadd.f32 %v2804, %v2844
      %v2881 = vadd.f32 %v2805, %v2845
      %v2882 = vadd.f32 %v2806, %v2846
      %v2883 = vadd.f32 %v2807, %v2847
      %v2884 = vadd.f32 %v2808, %v2848
      %v2885 = vadd.f32 %v2809, %v2849
      %v2886 = vadd.f32 %v2810, %v2850
      %v2887 = vadd.f32 %v2811, %v2851
      %v2888 = vadd.f32 %v2812, %v2852
      %v2889 = vadd.f32 %v2813, %v2853
      %v2890 = vadd.f32 %v2814, %v2854
      %v2891 = vadd.f32 %v2815, %v2855
      %v2892 = vadd.f32 %v2816, %v2856
      %v2893 = vadd.f32 %v2817, %v2857
      %v2894 = vadd.f32 %v2818, %v2858
      %v2895 = vadd.f32 %v2819, %v2859
      %v2896 = vadd.f32 %v2820, %v2860
      %v2897 = vadd.f32 %v2821, %v2861
      %v2898 = vadd.f32 %v2822, %v2862
      %v2899 = vxor.u32 %v2863, 2147483648
      %v2900 = vxor.u32 %v2864, 2147483648
      %v2901 = vxor.u32 %v2865, 2147483648
      %v2902 = vxor.u32 %v2866, 2147483648
      %v2903 = vxor.u32 %v2867, 2147483648
      %v2904 = vxor.u32 %v2868, 2147483648
      %v2905 = vxor.u32 %v2869, 2147483648
      %v2906 = vxor.u32 %v2870, 2147483648
      %v2907 = vxor.u32 %v2871, 2147483648
      %v2908 = vxor.u32 %v2872, 2147483648
      %v2909 = vxor.u32 %v2873, 2147483648
      %v2910 = vxor.u32 %v2874, 2147483648
      %v2911 = vxor.u32 %v2875, 2147483648
      %v2912 = vxor.u32 %v2876, 2147483648
      %v2913 = vxor.u32 %v2877, 2147483648
      %v2914 = vxor.u32 %v2878, 2147483648
      %v2915 = vxor.u32 %v2879, 2147483648
      %v2916 = vxor.u32 %v2880, 2147483648
      %v2917 = vxor.u32 %v2881, 2147483648
      %v2918 = vxor.u32 %v2882, 2147483648
      %v2919 = vxor.u32 %v2883, 2147483648
      %v2920 = vxor.u32 %v2884, 2147483648
      %v2921 = vxor.u32 %v2885, 2147483648
      %v2922 = vxor.u32 %v2886, 2147483648
      %v2923 = vxor.u32 %v2887, 2147483648
      %v2924 = vxor.u32 %v2888, 2147483648
      %v2925 = vxor.u32 %v2889, 2147483648
      %v2926 = vxor.u32 %v2890, 2147483648
      %v2927 = vxor.u32 %v2891, 2147483648
      %v2928 = vxor.u32 %v2892, 2147483648
      %v2929 = vxor.u32 %v2893, 2147483648
      %v2930 = vxor.u32 %v2894, 2147483648
      %v2931 = vxor.u32 %v2895, 2147483648
      %v2932 = vxor.u32 %v2896, 2147483648
      %v2933 = vxor.u32 %v2897, 2147483648
      %v2934 = vxor.u32 %v2898, 2147483648
      %v2935 = vmul.f32 %v2899, 1.442695
      %v2936 = vpow.pop %v2935
      %v2937 = vmul.f32 %v2900, 1.442695
      %v2938 = vpow.pop %v2937
      %v2939 = vmul.f32 %v2901, 1.442695
      %v2940 = vpow.pop %v2939
      %v2941 = vmul.f32 %v2902, 1.442695
      %v2942 = vpow.pop %v2941
      %v2943 = vmul.f32 %v2903, 1.442695
      %v2944 = vpow.pop %v2943
      %v2945 = vmul.f32 %v2904, 1.442695
      %v2946 = vpow.pop %v2945
      %v2947 = vmul.f32 %v2905, 1.442695
      %v2948 = vpow.pop %v2947
      %v2949 = vmul.f32 %v2906, 1.442695
      %v2950 = vpow.pop %v2949
      %v2951 = vmul.f32 %v2907, 1.442695
      %v2952 = vpow.pop %v2951
      %v2953 = vmul.f32 %v2908, 1.442695
      %v2954 = vpow.pop %v2953
      %v2955 = vmul.f32 %v2909, 1.442695
      %v2956 = vpow.pop %v2955
      %v2957 = vmul.f32 %v2910, 1.442695
      %v2958 = vpow.pop %v2957
      %v2959 = vmul.f32 %v2911, 1.442695
      %v2960 = vpow.pop %v2959
      %v2961 = vmul.f32 %v2912, 1.442695
      %v2962 = vpow.pop %v2961
      %v2963 = vmul.f32 %v2913, 1.442695
      %v2964 = vpow.pop %v2963
      %v2965 = vmul.f32 %v2914, 1.442695
      %v2966 = vpow.pop %v2965
      %v2967 = vmul.f32 %v2915, 1.442695
      %v2968 = vpow.pop %v2967
      %v2969 = vmul.f32 %v2916, 1.442695
      %v2970 = vpow.pop %v2969
      %v2971 = vmul.f32 %v2917, 1.442695
      %v2972 = vpow.pop %v2971
      %v2973 = vmul.f32 %v2918, 1.442695
      %v2974 = vpow.pop %v2973
      %v2975 = vmul.f32 %v2919, 1.442695
      %v2976 = vpow.pop %v2975
      %v2977 = vmul.f32 %v2920, 1.442695
      %v2978 = vpow.pop %v2977
      %v2979 = vmul.f32 %v2921, 1.442695
      %v2980 = vpow.pop %v2979
      %v2981 = vmul.f32 %v2922, 1.442695
      %v2982 = vpow.pop %v2981
      %v2983 = vmul.f32 %v2923, 1.442695
      %v2984 = vpow.pop %v2983
      %v2985 = vmul.f32 %v2924, 1.442695
      %v2986 = vpow.pop %v2985
      %v2987 = vmul.f32 %v2925, 1.442695
      %v2988 = vpow.pop %v2987
      %v2989 = vmul.f32 %v2926, 1.442695
      %v2990 = vpow.pop %v2989
      %v2991 = vmul.f32 %v2927, 1.442695
      %v2992 = vpow.pop %v2991
      %v2993 = vmul.f32 %v2928, 1.442695
      %v2994 = vpow.pop %v2993
      %v2995 = vmul.f32 %v2929, 1.442695
      %v2996 = vpow.pop %v2995
      %v2997 = vmul.f32 %v2930, 1.442695
      %v2998 = vpow.pop %v2997
      %v2999 = vmul.f32 %v2931, 1.442695
      %v3000 = vpow.pop %v2999
      %v3001 = vmul.f32 %v2932, 1.442695
      %v3002 = vpow.pop %v3001
      %v3003 = vmul.f32 %v2933, 1.442695
      %v3004 = vpow.pop %v3003
      %v3005 = vmul.f32 %v2934, 1.442695
      %v3006 = vpow.pop %v3005
      %v3007 = vadd.f32 %v2936, 1.0
      %v3008 = vadd.f32 %v2938, 1.0
      %v3009 = vadd.f32 %v2940, 1.0
      %v3010 = vadd.f32 %v2942, 1.0
      %v3011 = vadd.f32 %v2944, 1.0
      %v3012 = vadd.f32 %v2946, 1.0
      %v3013 = vadd.f32 %v2948, 1.0
      %v3014 = vadd.f32 %v2950, 1.0
      %v3015 = vadd.f32 %v2952, 1.0
      %v3016 = vadd.f32 %v2954, 1.0
      %v3017 = vadd.f32 %v2956, 1.0
      %v3018 = vadd.f32 %v2958, 1.0
      %v3019 = vadd.f32 %v2960, 1.0
      %v3020 = vadd.f32 %v2962, 1.0
      %v3021 = vadd.f32 %v2964, 1.0
      %v3022 = vadd.f32 %v2966, 1.0
      %v3023 = vadd.f32 %v2968, 1.0
      %v3024 = vadd.f32 %v2970, 1.0
      %v3025 = vadd.f32 %v2972, 1.0
      %v3026 = vadd.f32 %v2974, 1.0
      %v3027 = vadd.f32 %v2976, 1.0
      %v3028 = vadd.f32 %v2978, 1.0
      %v3029 = vadd.f32 %v2980, 1.0
      %v3030 = vadd.f32 %v2982, 1.0
      %v3031 = vadd.f32 %v2984, 1.0
      %v3032 = vadd.f32 %v2986, 1.0
      %v3033 = vadd.f32 %v2988, 1.0
      %v3034 = vadd.f32 %v2990, 1.0
      %v3035 = vadd.f32 %v2992, 1.0
      %v3036 = vadd.f32 %v2994, 1.0
      %v3037 = vadd.f32 %v2996, 1.0
      %v3038 = vadd.f32 %v2998, 1.0
      %v3039 = vadd.f32 %v3000, 1.0
      %v3040 = vadd.f32 %v3002, 1.0
      %v3041 = vadd.f32 %v3004, 1.0
      %v3042 = vadd.f32 %v3006, 1.0
      %v3043 = vrcp.pop %v3007
      %v3044 = vmul.f32 %v3007, %v3043
      %v3045 = vsub.f32 1.0, %v3044
      %v3046 = vmul.f32 %v3043, %v3045
      %v3047 = vadd.f32 %v3043, %v3046
      %vm3048 = vweird.f32 %v3007
      %vm3049 = vweird.f32 %v3043
      %vm3050 = vmor %vm3048, %vm3049
      %v3051 = vsel %vm3050, %v3043, %v3047
      %v3052 = vand.u32 2147483647, %v3007
      %vm3053 = vcmp.eq.f32.partialorder %v3052, 8.507059e+37
      %v3054 = vand.u32 %v3007, 2147483648
      %v3055 = vor.u32 1.1754944e-38, %v3054
      %v3056 = vsel %vm3053, %v3055, %v3051
      %v3057 = vmul.f32 1.0, %v3056
      %v3058 = vrcp.pop %v3008
      %v3059 = vmul.f32 %v3008, %v3058
      %v3060 = vsub.f32 1.0, %v3059
      %v3061 = vmul.f32 %v3058, %v3060
      %v3062 = vadd.f32 %v3058, %v3061
      %vm3063 = vweird.f32 %v3008
      %vm3064 = vweird.f32 %v3058
      %vm3065 = vmor %vm3063, %vm3064
      %v3066 = vsel %vm3065, %v3058, %v3062
      %v3067 = vand.u32 2147483647, %v3008
      %vm3068 = vcmp.eq.f32.partialorder %v3067, 8.507059e+37
      %v3069 = vand.u32 %v3008, 2147483648
      %v3070 = vor.u32 1.1754944e-38, %v3069
      %v3071 = vsel %vm3068, %v3070, %v3066
      %v3072 = vmul.f32 1.0, %v3071
      %v3073 = vrcp.pop %v3009
      %v3074 = vmul.f32 %v3009, %v3073
      %v3075 = vsub.f32 1.0, %v3074
      %v3076 = vmul.f32 %v3073, %v3075
      %v3077 = vadd.f32 %v3073, %v3076
      %vm3078 = vweird.f32 %v3009
      %vm3079 = vweird.f32 %v3073
      %vm3080 = vmor %vm3078, %vm3079
      %v3081 = vsel %vm3080, %v3073, %v3077
      %v3082 = vand.u32 2147483647, %v3009
      %vm3083 = vcmp.eq.f32.partialorder %v3082, 8.507059e+37
      %v3084 = vand.u32 %v3009, 2147483648
      %v3085 = vor.u32 1.1754944e-38, %v3084
      %v3086 = vsel %vm3083, %v3085, %v3081
      %v3087 = vmul.f32 1.0, %v3086
      %v3088 = vrcp.pop %v3010
      %v3089 = vmul.f32 %v3010, %v3088
      %v3090 = vsub.f32 1.0, %v3089
      %v3091 = vmul.f32 %v3088, %v3090
      %v3092 = vadd.f32 %v3088, %v3091
      %vm3093 = vweird.f32 %v3010
      %vm3094 = vweird.f32 %v3088
      %vm3095 = vmor %vm3093, %vm3094
      %v3096 = vsel %vm3095, %v3088, %v3092
      %v3097 = vand.u32 2147483647, %v3010
      %vm3098 = vcmp.eq.f32.partialorder %v3097, 8.507059e+37
      %v3099 = vand.u32 %v3010, 2147483648
      %v3100 = vor.u32 1.1754944e-38, %v3099
      %v3101 = vsel %vm3098, %v3100, %v3096
      %v3102 = vmul.f32 1.0, %v3101
      %v3103 = vrcp.pop %v3011
      %v3104 = vmul.f32 %v3011, %v3103
      %v3105 = vsub.f32 1.0, %v3104
      %v3106 = vmul.f32 %v3103, %v3105
      %v3107 = vadd.f32 %v3103, %v3106
      %vm3108 = vweird.f32 %v3011
      %vm3109 = vweird.f32 %v3103
      %vm3110 = vmor %vm3108, %vm3109
      %v3111 = vsel %vm3110, %v3103, %v3107
      %v3112 = vand.u32 2147483647, %v3011
      %vm3113 = vcmp.eq.f32.partialorder %v3112, 8.507059e+37
      %v3114 = vand.u32 %v3011, 2147483648
      %v3115 = vor.u32 1.1754944e-38, %v3114
      %v3116 = vsel %vm3113, %v3115, %v3111
      %v3117 = vmul.f32 1.0, %v3116
      %v3118 = vrcp.pop %v3012
      %v3119 = vmul.f32 %v3012, %v3118
      %v3120 = vsub.f32 1.0, %v3119
      %v3121 = vmul.f32 %v3118, %v3120
      %v3122 = vadd.f32 %v3118, %v3121
      %vm3123 = vweird.f32 %v3012
      %vm3124 = vweird.f32 %v3118
      %vm3125 = vmor %vm3123, %vm3124
      %v3126 = vsel %vm3125, %v3118, %v3122
      %v3127 = vand.u32 2147483647, %v3012
      %vm3128 = vcmp.eq.f32.partialorder %v3127, 8.507059e+37
      %v3129 = vand.u32 %v3012, 2147483648
      %v3130 = vor.u32 1.1754944e-38, %v3129
      %v3131 = vsel %vm3128, %v3130, %v3126
      %v3132 = vmul.f32 1.0, %v3131
      %v3133 = vrcp.pop %v3013
      %v3134 = vmul.f32 %v3013, %v3133
      %v3135 = vsub.f32 1.0, %v3134
      %v3136 = vmul.f32 %v3133, %v3135
      %v3137 = vadd.f32 %v3133, %v3136
      %vm3138 = vweird.f32 %v3013
      %vm3139 = vweird.f32 %v3133
      %vm3140 = vmor %vm3138, %vm3139
      %v3141 = vsel %vm3140, %v3133, %v3137
      %v3142 = vand.u32 2147483647, %v3013
      %vm3143 = vcmp.eq.f32.partialorder %v3142, 8.507059e+37
      %v3144 = vand.u32 %v3013, 2147483648
      %v3145 = vor.u32 1.1754944e-38, %v3144
      %v3146 = vsel %vm3143, %v3145, %v3141
      %v3147 = vmul.f32 1.0, %v3146
      %v3148 = vrcp.pop %v3014
      %v3149 = vmul.f32 %v3014, %v3148
      %v3150 = vsub.f32 1.0, %v3149
      %v3151 = vmul.f32 %v3148, %v3150
      %v3152 = vadd.f32 %v3148, %v3151
      %vm3153 = vweird.f32 %v3014
      %vm3154 = vweird.f32 %v3148
      %vm3155 = vmor %vm3153, %vm3154
      %v3156 = vsel %vm3155, %v3148, %v3152
      %v3157 = vand.u32 2147483647, %v3014
      %vm3158 = vcmp.eq.f32.partialorder %v3157, 8.507059e+37
      %v3159 = vand.u32 %v3014, 2147483648
      %v3160 = vor.u32 1.1754944e-38, %v3159
      %v3161 = vsel %vm3158, %v3160, %v3156
      %v3162 = vmul.f32 1.0, %v3161
      %v3163 = vrcp.pop %v3015
      %v3164 = vmul.f32 %v3015, %v3163
      %v3165 = vsub.f32 1.0, %v3164
      %v3166 = vmul.f32 %v3163, %v3165
      %v3167 = vadd.f32 %v3163, %v3166
      %vm3168 = vweird.f32 %v3015
      %vm3169 = vweird.f32 %v3163
      %vm3170 = vmor %vm3168, %vm3169
      %v3171 = vsel %vm3170, %v3163, %v3167
      %v3172 = vand.u32 2147483647, %v3015
      %vm3173 = vcmp.eq.f32.partialorder %v3172, 8.507059e+37
      %v3174 = vand.u32 %v3015, 2147483648
      %v3175 = vor.u32 1.1754944e-38, %v3174
      %v3176 = vsel %vm3173, %v3175, %v3171
      %v3177 = vmul.f32 1.0, %v3176
      %v3178 = vrcp.pop %v3016
      %v3179 = vmul.f32 %v3016, %v3178
      %v3180 = vsub.f32 1.0, %v3179
      %v3181 = vmul.f32 %v3178, %v3180
      %v3182 = vadd.f32 %v3178, %v3181
      %vm3183 = vweird.f32 %v3016
      %vm3184 = vweird.f32 %v3178
      %vm3185 = vmor %vm3183, %vm3184
      %v3186 = vsel %vm3185, %v3178, %v3182
      %v3187 = vand.u32 2147483647, %v3016
      %vm3188 = vcmp.eq.f32.partialorder %v3187, 8.507059e+37
      %v3189 = vand.u32 %v3016, 2147483648
      %v3190 = vor.u32 1.1754944e-38, %v3189
      %v3191 = vsel %vm3188, %v3190, %v3186
      %v3192 = vmul.f32 1.0, %v3191
      %v3193 = vrcp.pop %v3017
      %v3194 = vmul.f32 %v3017, %v3193
      %v3195 = vsub.f32 1.0, %v3194
      %v3196 = vmul.f32 %v3193, %v3195
      %v3197 = vadd.f32 %v3193, %v3196
      %vm3198 = vweird.f32 %v3017
      %vm3199 = vweird.f32 %v3193
      %vm3200 = vmor %vm3198, %vm3199
      %v3201 = vsel %vm3200, %v3193, %v3197
      %v3202 = vand.u32 2147483647, %v3017
      %vm3203 = vcmp.eq.f32.partialorder %v3202, 8.507059e+37
      %v3204 = vand.u32 %v3017, 2147483648
      %v3205 = vor.u32 1.1754944e-38, %v3204
      %v3206 = vsel %vm3203, %v3205, %v3201
      %v3207 = vmul.f32 1.0, %v3206
      %v3208 = vrcp.pop %v3018
      %v3209 = vmul.f32 %v3018, %v3208
      %v3210 = vsub.f32 1.0, %v3209
      %v3211 = vmul.f32 %v3208, %v3210
      %v3212 = vadd.f32 %v3208, %v3211
      %vm3213 = vweird.f32 %v3018
      %vm3214 = vweird.f32 %v3208
      %vm3215 = vmor %vm3213, %vm3214
      %v3216 = vsel %vm3215, %v3208, %v3212
      %v3217 = vand.u32 2147483647, %v3018
      %vm3218 = vcmp.eq.f32.partialorder %v3217, 8.507059e+37
      %v3219 = vand.u32 %v3018, 2147483648
      %v3220 = vor.u32 1.1754944e-38, %v3219
      %v3221 = vsel %vm3218, %v3220, %v3216
      %v3222 = vmul.f32 1.0, %v3221
      %v3223 = vrcp.pop %v3019
      %v3224 = vmul.f32 %v3019, %v3223
      %v3225 = vsub.f32 1.0, %v3224
      %v3226 = vmul.f32 %v3223, %v3225
      %v3227 = vadd.f32 %v3223, %v3226
      %vm3228 = vweird.f32 %v3019
      %vm3229 = vweird.f32 %v3223
      %vm3230 = vmor %vm3228, %vm3229
      %v3231 = vsel %vm3230, %v3223, %v3227
      %v3232 = vand.u32 2147483647, %v3019
      %vm3233 = vcmp.eq.f32.partialorder %v3232, 8.507059e+37
      %v3234 = vand.u32 %v3019, 2147483648
      %v3235 = vor.u32 1.1754944e-38, %v3234
      %v3236 = vsel %vm3233, %v3235, %v3231
      %v3237 = vmul.f32 1.0, %v3236
      %v3238 = vrcp.pop %v3020
      %v3239 = vmul.f32 %v3020, %v3238
      %v3240 = vsub.f32 1.0, %v3239
      %v3241 = vmul.f32 %v3238, %v3240
      %v3242 = vadd.f32 %v3238, %v3241
      %vm3243 = vweird.f32 %v3020
      %vm3244 = vweird.f32 %v3238
      %vm3245 = vmor %vm3243, %vm3244
      %v3246 = vsel %vm3245, %v3238, %v3242
      %v3247 = vand.u32 2147483647, %v3020
      %vm3248 = vcmp.eq.f32.partialorder %v3247, 8.507059e+37
      %v3249 = vand.u32 %v3020, 2147483648
      %v3250 = vor.u32 1.1754944e-38, %v3249
      %v3251 = vsel %vm3248, %v3250, %v3246
      %v3252 = vmul.f32 1.0, %v3251
      %v3253 = vrcp.pop %v3021
      %v3254 = vmul.f32 %v3021, %v3253
      %v3255 = vsub.f32 1.0, %v3254
      %v3256 = vmul.f32 %v3253, %v3255
      %v3257 = vadd.f32 %v3253, %v3256
      %vm3258 = vweird.f32 %v3021
      %vm3259 = vweird.f32 %v3253
      %vm3260 = vmor %vm3258, %vm3259
      %v3261 = vsel %vm3260, %v3253, %v3257
      %v3262 = vand.u32 2147483647, %v3021
      %vm3263 = vcmp.eq.f32.partialorder %v3262, 8.507059e+37
      %v3264 = vand.u32 %v3021, 2147483648
      %v3265 = vor.u32 1.1754944e-38, %v3264
      %v3266 = vsel %vm3263, %v3265, %v3261
      %v3267 = vmul.f32 1.0, %v3266
      %v3268 = vrcp.pop %v3022
      %v3269 = vmul.f32 %v3022, %v3268
      %v3270 = vsub.f32 1.0, %v3269
      %v3271 = vmul.f32 %v3268, %v3270
      %v3272 = vadd.f32 %v3268, %v3271
      %vm3273 = vweird.f32 %v3022
      %vm3274 = vweird.f32 %v3268
      %vm3275 = vmor %vm3273, %vm3274
      %v3276 = vsel %vm3275, %v3268, %v3272
      %v3277 = vand.u32 2147483647, %v3022
      %vm3278 = vcmp.eq.f32.partialorder %v3277, 8.507059e+37
      %v3279 = vand.u32 %v3022, 2147483648
      %v3280 = vor.u32 1.1754944e-38, %v3279
      %v3281 = vsel %vm3278, %v3280, %v3276
      %v3282 = vmul.f32 1.0, %v3281
      %v3283 = vrcp.pop %v3023
      %v3284 = vmul.f32 %v3023, %v3283
      %v3285 = vsub.f32 1.0, %v3284
      %v3286 = vmul.f32 %v3283, %v3285
      %v3287 = vadd.f32 %v3283, %v3286
      %vm3288 = vweird.f32 %v3023
      %vm3289 = vweird.f32 %v3283
      %vm3290 = vmor %vm3288, %vm3289
      %v3291 = vsel %vm3290, %v3283, %v3287
      %v3292 = vand.u32 2147483647, %v3023
      %vm3293 = vcmp.eq.f32.partialorder %v3292, 8.507059e+37
      %v3294 = vand.u32 %v3023, 2147483648
      %v3295 = vor.u32 1.1754944e-38, %v3294
      %v3296 = vsel %vm3293, %v3295, %v3291
      %v3297 = vmul.f32 1.0, %v3296
      %v3298 = vrcp.pop %v3024
      %v3299 = vmul.f32 %v3024, %v3298
      %v3300 = vsub.f32 1.0, %v3299
      %v3301 = vmul.f32 %v3298, %v3300
      %v3302 = vadd.f32 %v3298, %v3301
      %vm3303 = vweird.f32 %v3024
      %vm3304 = vweird.f32 %v3298
      %vm3305 = vmor %vm3303, %vm3304
      %v3306 = vsel %vm3305, %v3298, %v3302
      %v3307 = vand.u32 2147483647, %v3024
      %vm3308 = vcmp.eq.f32.partialorder %v3307, 8.507059e+37
      %v3309 = vand.u32 %v3024, 2147483648
      %v3310 = vor.u32 1.1754944e-38, %v3309
      %v3311 = vsel %vm3308, %v3310, %v3306
      %v3312 = vmul.f32 1.0, %v3311
      %v3313 = vrcp.pop %v3025
      %v3314 = vmul.f32 %v3025, %v3313
      %v3315 = vsub.f32 1.0, %v3314
      %v3316 = vmul.f32 %v3313, %v3315
      %v3317 = vadd.f32 %v3313, %v3316
      %vm3318 = vweird.f32 %v3025
      %vm3319 = vweird.f32 %v3313
      %vm3320 = vmor %vm3318, %vm3319
      %v3321 = vsel %vm3320, %v3313, %v3317
      %v3322 = vand.u32 2147483647, %v3025
      %vm3323 = vcmp.eq.f32.partialorder %v3322, 8.507059e+37
      %v3324 = vand.u32 %v3025, 2147483648
      %v3325 = vor.u32 1.1754944e-38, %v3324
      %v3326 = vsel %vm3323, %v3325, %v3321
      %v3327 = vmul.f32 1.0, %v3326
      %v3328 = vrcp.pop %v3026
      %v3329 = vmul.f32 %v3026, %v3328
      %v3330 = vsub.f32 1.0, %v3329
      %v3331 = vmul.f32 %v3328, %v3330
      %v3332 = vadd.f32 %v3328, %v3331
      %vm3333 = vweird.f32 %v3026
      %vm3334 = vweird.f32 %v3328
      %vm3335 = vmor %vm3333, %vm3334
      %v3336 = vsel %vm3335, %v3328, %v3332
      %v3337 = vand.u32 2147483647, %v3026
      %vm3338 = vcmp.eq.f32.partialorder %v3337, 8.507059e+37
      %v3339 = vand.u32 %v3026, 2147483648
      %v3340 = vor.u32 1.1754944e-38, %v3339
      %v3341 = vsel %vm3338, %v3340, %v3336
      %v3342 = vmul.f32 1.0, %v3341
      %v3343 = vrcp.pop %v3027
      %v3344 = vmul.f32 %v3027, %v3343
      %v3345 = vsub.f32 1.0, %v3344
      %v3346 = vmul.f32 %v3343, %v3345
      %v3347 = vadd.f32 %v3343, %v3346
      %vm3348 = vweird.f32 %v3027
      %vm3349 = vweird.f32 %v3343
      %vm3350 = vmor %vm3348, %vm3349
      %v3351 = vsel %vm3350, %v3343, %v3347
      %v3352 = vand.u32 2147483647, %v3027
      %vm3353 = vcmp.eq.f32.partialorder %v3352, 8.507059e+37
      %v3354 = vand.u32 %v3027, 2147483648
      %v3355 = vor.u32 1.1754944e-38, %v3354
      %v3356 = vsel %vm3353, %v3355, %v3351
      %v3357 = vmul.f32 1.0, %v3356
      %v3358 = vrcp.pop %v3028
      %v3359 = vmul.f32 %v3028, %v3358
      %v3360 = vsub.f32 1.0, %v3359
      %v3361 = vmul.f32 %v3358, %v3360
      %v3362 = vadd.f32 %v3358, %v3361
      %vm3363 = vweird.f32 %v3028
      %vm3364 = vweird.f32 %v3358
      %vm3365 = vmor %vm3363, %vm3364
      %v3366 = vsel %vm3365, %v3358, %v3362
      %v3367 = vand.u32 2147483647, %v3028
      %vm3368 = vcmp.eq.f32.partialorder %v3367, 8.507059e+37
      %v3369 = vand.u32 %v3028, 2147483648
      %v3370 = vor.u32 1.1754944e-38, %v3369
      %v3371 = vsel %vm3368, %v3370, %v3366
      %v3372 = vmul.f32 1.0, %v3371
      %v3373 = vrcp.pop %v3029
      %v3374 = vmul.f32 %v3029, %v3373
      %v3375 = vsub.f32 1.0, %v3374
      %v3376 = vmul.f32 %v3373, %v3375
      %v3377 = vadd.f32 %v3373, %v3376
      %vm3378 = vweird.f32 %v3029
      %vm3379 = vweird.f32 %v3373
      %vm3380 = vmor %vm3378, %vm3379
      %v3381 = vsel %vm3380, %v3373, %v3377
      %v3382 = vand.u32 2147483647, %v3029
      %vm3383 = vcmp.eq.f32.partialorder %v3382, 8.507059e+37
      %v3384 = vand.u32 %v3029, 2147483648
      %v3385 = vor.u32 1.1754944e-38, %v3384
      %v3386 = vsel %vm3383, %v3385, %v3381
      %v3387 = vmul.f32 1.0, %v3386
      %v3388 = vrcp.pop %v3030
      %v3389 = vmul.f32 %v3030, %v3388
      %v3390 = vsub.f32 1.0, %v3389
      %v3391 = vmul.f32 %v3388, %v3390
      %v3392 = vadd.f32 %v3388, %v3391
      %vm3393 = vweird.f32 %v3030
      %vm3394 = vweird.f32 %v3388
      %vm3395 = vmor %vm3393, %vm3394
      %v3396 = vsel %vm3395, %v3388, %v3392
      %v3397 = vand.u32 2147483647, %v3030
      %vm3398 = vcmp.eq.f32.partialorder %v3397, 8.507059e+37
      %v3399 = vand.u32 %v3030, 2147483648
      %v3400 = vor.u32 1.1754944e-38, %v3399
      %v3401 = vsel %vm3398, %v3400, %v3396
      %v3402 = vmul.f32 1.0, %v3401
      %v3403 = vrcp.pop %v3031
      %v3404 = vmul.f32 %v3031, %v3403
      %v3405 = vsub.f32 1.0, %v3404
      %v3406 = vmul.f32 %v3403, %v3405
      %v3407 = vadd.f32 %v3403, %v3406
      %vm3408 = vweird.f32 %v3031
      %vm3409 = vweird.f32 %v3403
      %vm3410 = vmor %vm3408, %vm3409
      %v3411 = vsel %vm3410, %v3403, %v3407
      %v3412 = vand.u32 2147483647, %v3031
      %vm3413 = vcmp.eq.f32.partialorder %v3412, 8.507059e+37
      %v3414 = vand.u32 %v3031, 2147483648
      %v3415 = vor.u32 1.1754944e-38, %v3414
      %v3416 = vsel %vm3413, %v3415, %v3411
      %v3417 = vmul.f32 1.0, %v3416
      %v3418 = vrcp.pop %v3032
      %v3419 = vmul.f32 %v3032, %v3418
      %v3420 = vsub.f32 1.0, %v3419
      %v3421 = vmul.f32 %v3418, %v3420
      %v3422 = vadd.f32 %v3418, %v3421
      %vm3423 = vweird.f32 %v3032
      %vm3424 = vweird.f32 %v3418
      %vm3425 = vmor %vm3423, %vm3424
      %v3426 = vsel %vm3425, %v3418, %v3422
      %v3427 = vand.u32 2147483647, %v3032
      %vm3428 = vcmp.eq.f32.partialorder %v3427, 8.507059e+37
      %v3429 = vand.u32 %v3032, 2147483648
      %v3430 = vor.u32 1.1754944e-38, %v3429
      %v3431 = vsel %vm3428, %v3430, %v3426
      %v3432 = vmul.f32 1.0, %v3431
      %v3433 = vrcp.pop %v3033
      %v3434 = vmul.f32 %v3033, %v3433
      %v3435 = vsub.f32 1.0, %v3434
      %v3436 = vmul.f32 %v3433, %v3435
      %v3437 = vadd.f32 %v3433, %v3436
      %vm3438 = vweird.f32 %v3033
      %vm3439 = vweird.f32 %v3433
      %vm3440 = vmor %vm3438, %vm3439
      %v3441 = vsel %vm3440, %v3433, %v3437
      %v3442 = vand.u32 2147483647, %v3033
      %vm3443 = vcmp.eq.f32.partialorder %v3442, 8.507059e+37
      %v3444 = vand.u32 %v3033, 2147483648
      %v3445 = vor.u32 1.1754944e-38, %v3444
      %v3446 = vsel %vm3443, %v3445, %v3441
      %v3447 = vmul.f32 1.0, %v3446
      %v3448 = vrcp.pop %v3034
      %v3449 = vmul.f32 %v3034, %v3448
      %v3450 = vsub.f32 1.0, %v3449
      %v3451 = vmul.f32 %v3448, %v3450
      %v3452 = vadd.f32 %v3448, %v3451
      %vm3453 = vweird.f32 %v3034
      %vm3454 = vweird.f32 %v3448
      %vm3455 = vmor %vm3453, %vm3454
      %v3456 = vsel %vm3455, %v3448, %v3452
      %v3457 = vand.u32 2147483647, %v3034
      %vm3458 = vcmp.eq.f32.partialorder %v3457, 8.507059e+37
      %v3459 = vand.u32 %v3034, 2147483648
      %v3460 = vor.u32 1.1754944e-38, %v3459
      %v3461 = vsel %vm3458, %v3460, %v3456
      %v3462 = vmul.f32 1.0, %v3461
      %v3463 = vrcp.pop %v3035
      %v3464 = vmul.f32 %v3035, %v3463
      %v3465 = vsub.f32 1.0, %v3464
      %v3466 = vmul.f32 %v3463, %v3465
      %v3467 = vadd.f32 %v3463, %v3466
      %vm3468 = vweird.f32 %v3035
      %vm3469 = vweird.f32 %v3463
      %vm3470 = vmor %vm3468, %vm3469
      %v3471 = vsel %vm3470, %v3463, %v3467
      %v3472 = vand.u32 2147483647, %v3035
      %vm3473 = vcmp.eq.f32.partialorder %v3472, 8.507059e+37
      %v3474 = vand.u32 %v3035, 2147483648
      %v3475 = vor.u32 1.1754944e-38, %v3474
      %v3476 = vsel %vm3473, %v3475, %v3471
      %v3477 = vmul.f32 1.0, %v3476
      %v3478 = vrcp.pop %v3036
      %v3479 = vmul.f32 %v3036, %v3478
      %v3480 = vsub.f32 1.0, %v3479
      %v3481 = vmul.f32 %v3478, %v3480
      %v3482 = vadd.f32 %v3478, %v3481
      %vm3483 = vweird.f32 %v3036
      %vm3484 = vweird.f32 %v3478
      %vm3485 = vmor %vm3483, %vm3484
      %v3486 = vsel %vm3485, %v3478, %v3482
      %v3487 = vand.u32 2147483647, %v3036
      %vm3488 = vcmp.eq.f32.partialorder %v3487, 8.507059e+37
      %v3489 = vand.u32 %v3036, 2147483648
      %v3490 = vor.u32 1.1754944e-38, %v3489
      %v3491 = vsel %vm3488, %v3490, %v3486
      %v3492 = vmul.f32 1.0, %v3491
      %v3493 = vrcp.pop %v3037
      %v3494 = vmul.f32 %v3037, %v3493
      %v3495 = vsub.f32 1.0, %v3494
      %v3496 = vmul.f32 %v3493, %v3495
      %v3497 = vadd.f32 %v3493, %v3496
      %vm3498 = vweird.f32 %v3037
      %vm3499 = vweird.f32 %v3493
      %vm3500 = vmor %vm3498, %vm3499
      %v3501 = vsel %vm3500, %v3493, %v3497
      %v3502 = vand.u32 2147483647, %v3037
      %vm3503 = vcmp.eq.f32.partialorder %v3502, 8.507059e+37
      %v3504 = vand.u32 %v3037, 2147483648
      %v3505 = vor.u32 1.1754944e-38, %v3504
      %v3506 = vsel %vm3503, %v3505, %v3501
      %v3507 = vmul.f32 1.0, %v3506
      %v3508 = vrcp.pop %v3038
      %v3509 = vmul.f32 %v3038, %v3508
      %v3510 = vsub.f32 1.0, %v3509
      %v3511 = vmul.f32 %v3508, %v3510
      %v3512 = vadd.f32 %v3508, %v3511
      %vm3513 = vweird.f32 %v3038
      %vm3514 = vweird.f32 %v3508
      %vm3515 = vmor %vm3513, %vm3514
      %v3516 = vsel %vm3515, %v3508, %v3512
      %v3517 = vand.u32 2147483647, %v3038
      %vm3518 = vcmp.eq.f32.partialorder %v3517, 8.507059e+37
      %v3519 = vand.u32 %v3038, 2147483648
      %v3520 = vor.u32 1.1754944e-38, %v3519
      %v3521 = vsel %vm3518, %v3520, %v3516
      %v3522 = vmul.f32 1.0, %v3521
      %v3523 = vrcp.pop %v3039
      %v3524 = vmul.f32 %v3039, %v3523
      %v3525 = vsub.f32 1.0, %v3524
      %v3526 = vmul.f32 %v3523, %v3525
      %v3527 = vadd.f32 %v3523, %v3526
      %vm3528 = vweird.f32 %v3039
      %vm3529 = vweird.f32 %v3523
      %vm3530 = vmor %vm3528, %vm3529
      %v3531 = vsel %vm3530, %v3523, %v3527
      %v3532 = vand.u32 2147483647, %v3039
      %vm3533 = vcmp.eq.f32.partialorder %v3532, 8.507059e+37
      %v3534 = vand.u32 %v3039, 2147483648
      %v3535 = vor.u32 1.1754944e-38, %v3534
      %v3536 = vsel %vm3533, %v3535, %v3531
      %v3537 = vmul.f32 1.0, %v3536
      %v3538 = vrcp.pop %v3040
      %v3539 = vmul.f32 %v3040, %v3538
      %v3540 = vsub.f32 1.0, %v3539
      %v3541 = vmul.f32 %v3538, %v3540
      %v3542 = vadd.f32 %v3538, %v3541
      %vm3543 = vweird.f32 %v3040
      %vm3544 = vweird.f32 %v3538
      %vm3545 = vmor %vm3543, %vm3544
      %v3546 = vsel %vm3545, %v3538, %v3542
      %v3547 = vand.u32 2147483647, %v3040
      %vm3548 = vcmp.eq.f32.partialorder %v3547, 8.507059e+37
      %v3549 = vand.u32 %v3040, 2147483648
      %v3550 = vor.u32 1.1754944e-38, %v3549
      %v3551 = vsel %vm3548, %v3550, %v3546
      %v3552 = vmul.f32 1.0, %v3551
      %v3553 = vrcp.pop %v3041
      %v3554 = vmul.f32 %v3041, %v3553
      %v3555 = vsub.f32 1.0, %v3554
      %v3556 = vmul.f32 %v3553, %v3555
      %v3557 = vadd.f32 %v3553, %v3556
      %vm3558 = vweird.f32 %v3041
      %vm3559 = vweird.f32 %v3553
      %vm3560 = vmor %vm3558, %vm3559
      %v3561 = vsel %vm3560, %v3553, %v3557
      %v3562 = vand.u32 2147483647, %v3041
      %vm3563 = vcmp.eq.f32.partialorder %v3562, 8.507059e+37
      %v3564 = vand.u32 %v3041, 2147483648
      %v3565 = vor.u32 1.1754944e-38, %v3564
      %v3566 = vsel %vm3563, %v3565, %v3561
      %v3567 = vmul.f32 1.0, %v3566
      %v3568 = vrcp.pop %v3042
      %v3569 = vmul.f32 %v3042, %v3568
      %v3570 = vsub.f32 1.0, %v3569
      %v3571 = vmul.f32 %v3568, %v3570
      %v3572 = vadd.f32 %v3568, %v3571
      %vm3573 = vweird.f32 %v3042
      %vm3574 = vweird.f32 %v3568
      %vm3575 = vmor %vm3573, %vm3574
      %v3576 = vsel %vm3575, %v3568, %v3572
      %v3577 = vand.u32 2147483647, %v3042
      %vm3578 = vcmp.eq.f32.partialorder %v3577, 8.507059e+37
      %v3579 = vand.u32 %v3042, 2147483648
      %v3580 = vor.u32 1.1754944e-38, %v3579
      %v3581 = vsel %vm3578, %v3580, %v3576
      %v3582 = vmul.f32 1.0, %v3581
      %v3583 = vmul.f32 %v2863, %v3057
      %v3584 = vmul.f32 %v2864, %v3072
      %v3585 = vmul.f32 %v2865, %v3087
      %v3586 = vmul.f32 %v2866, %v3102
      %v3587 = vmul.f32 %v2867, %v3117
      %v3588 = vmul.f32 %v2868, %v3132
      %v3589 = vmul.f32 %v2869, %v3147
      %v3590 = vmul.f32 %v2870, %v3162
      %v3591 = vmul.f32 %v2871, %v3177
      %v3592 = vmul.f32 %v2872, %v3192
      %v3593 = vmul.f32 %v2873, %v3207
      %v3594 = vmul.f32 %v2874, %v3222
      %v3595 = vmul.f32 %v2875, %v3237
      %v3596 = vmul.f32 %v2876, %v3252
      %v3597 = vmul.f32 %v2877, %v3267
      %v3598 = vmul.f32 %v2878, %v3282
      %v3599 = vmul.f32 %v2879, %v3297
      %v3600 = vmul.f32 %v2880, %v3312
      %v3601 = vmul.f32 %v2881, %v3327
      %v3602 = vmul.f32 %v2882, %v3342
      %v3603 = vmul.f32 %v2883, %v3357
      %v3604 = vmul.f32 %v2884, %v3372
      %v3605 = vmul.f32 %v2885, %v3387
      %v3606 = vmul.f32 %v2886, %v3402
      %v3607 = vmul.f32 %v2887, %v3417
      %v3608 = vmul.f32 %v2888, %v3432
      %v3609 = vmul.f32 %v2889, %v3447
      %v3610 = vmul.f32 %v2890, %v3462
      %v3611 = vmul.f32 %v2891, %v3477
      %v3612 = vmul.f32 %v2892, %v3492
      %v3613 = vmul.f32 %v2893, %v3507
      %v3614 = vmul.f32 %v2894, %v3522
      %v3615 = vmul.f32 %v2895, %v3537
      %v3616 = vmul.f32 %v2896, %v3552
      %v3617 = vmul.f32 %v2897, %v3567
      %v3618 = vmul.f32 %v2898, %v3582
      %vm3619 = vcmask 64512
      %3620 = vst.msk [vmem:[%s192] sm:$0xff] %vm3619, %v3583
      %3621 = vst.msk [vmem:[%s192 + $0x8] sm:$0xff] %vm3619, %v3584
      %3622 = vst.msk [vmem:[%s192 + $0x10] sm:$0xff] %vm3619, %v3585
      %3623 = vst.msk [vmem:[%s192 + $0x18] sm:$0xff] %vm3619, %v3586
      %3624 = vst.msk [vmem:[%s192 + $0x20] sm:$0xff] %vm3619, %v3587
      %3625 = vst.msk [vmem:[%s192 + $0x28] sm:$0xff] %vm3619, %v3588
      %3626 = vst.msk [vmem:[%s192 + $0x30] sm:$0xff] %vm3619, %v3589
      %3627 = vst.msk [vmem:[%s192 + $0x38] sm:$0xff] %vm3619, %v3590
      %3628 = vst.msk [vmem:[%s192 + $0x40] sm:$0xff] %vm3619, %v3591
      %3629 = vst.msk [vmem:[%s192 + $0x48] sm:$0xff] %vm3619, %v3592
      %3630 = vst.msk [vmem:[%s192 + $0x50] sm:$0xff] %vm3619, %v3593
      %3631 = vst.msk [vmem:[%s192 + $0x58] sm:$0xff] %vm3619, %v3594
      %3632 = vst.msk [vmem:[%s192 + $0x60] sm:$0xff] %vm3619, %v3595
      %3633 = vst.msk [vmem:[%s192 + $0x68] sm:$0xff] %vm3619, %v3596
      %3634 = vst.msk [vmem:[%s192 + $0x70] sm:$0xff] %vm3619, %v3597
      %3635 = vst.msk [vmem:[%s192 + $0x78] sm:$0xff] %vm3619, %v3598
      %3636 = vst.msk [vmem:[%s192 + $0x80] sm:$0xff] %vm3619, %v3599
      %3637 = vst.msk [vmem:[%s192 + $0x88] sm:$0xff] %vm3619, %v3600
      %3638 = vst.msk [vmem:[%s192 + $0x90] sm:$0xff] %vm3619, %v3601
      %3639 = vst.msk [vmem:[%s192 + $0x98] sm:$0xff] %vm3619, %v3602
      %3640 = vst.msk [vmem:[%s192 + $0xa0] sm:$0xff] %vm3619, %v3603
      %3641 = vst.msk [vmem:[%s192 + $0xa8] sm:$0xff] %vm3619, %v3604
      %3642 = vst.msk [vmem:[%s192 + $0xb0] sm:$0xff] %vm3619, %v3605
      %3643 = vst.msk [vmem:[%s192 + $0xb8] sm:$0xff] %vm3619, %v3606
      %3644 = vst.msk [vmem:[%s192 + $0xc0] sm:$0xff] %vm3619, %v3607
      %3645 = vst.msk [vmem:[%s192 + $0xc8] sm:$0xff] %vm3619, %v3608
      %3646 = vst.msk [vmem:[%s192 + $0xd0] sm:$0xff] %vm3619, %v3609
      %3647 = vst.msk [vmem:[%s192 + $0xd8] sm:$0xff] %vm3619, %v3610
      %3648 = vst.msk [vmem:[%s192 + $0xe0] sm:$0xff] %vm3619, %v3611
      %3649 = vst.msk [vmem:[%s192 + $0xe8] sm:$0xff] %vm3619, %v3612
      %3650 = vst.msk [vmem:[%s192 + $0xf0] sm:$0xff] %vm3619, %v3613
      %3651 = vst.msk [vmem:[%s192 + $0xf8] sm:$0xff] %vm3619, %v3614
      %3652 = vst.msk [vmem:[%s192 + $0x100] sm:$0xff] %vm3619, %v3615
      %3653 = vst.msk [vmem:[%s192 + $0x108] sm:$0xff] %vm3619, %v3616
      %3654 = vst.msk [vmem:[%s192 + $0x110] sm:$0xff] %vm3619, %v3617
      %3655 = vst.msk [vmem:[%s192 + $0x118] sm:$0xff] %vm3619, %v3618
      %s3656 = smul.u32 36, %s19
      %p3657 = scmp.lt.s32.totalorder %s18, 1
      %s3658 = scalar_select %p3657, %s18, 1
      %p3659 = scmp.lt.s32.totalorder %s3656, 35
      %s3660 = scalar_select %p3659, %s3656, 35
      %s3661 = smul.addr %s3658, 36
      %s3662 = sadd.s32 %s3660, %s3661
      %s3663 = smul.addr %s3662, 8
      %s3664 = scalar_lea.vmem %s3, %s3663
      // Predicated region
      $region33: #{tpu_custom_call.1} parent=31 // pred_check
        %p3665 = pneg %p114
      $region34: #{tpu_custom_call.1} parent=31 // pred_check_branch
        %3667 = sbr.rel (%p3665) target = $region36
      $region35: #{tpu_custom_call.1} parent=31 // pred_region
        %s3668 = smul.u32 36, %s19
      $region36: #{tpu_custom_call.1} parent=31 // pred_fallthru
        _
    $region32: #{tpu_custom_call.1} parent=5 // pred_fallthru
      _
    %p3669 = scmp.le.s32.totalorder 2, %s9
    // Predicated region
    $region37: #{tpu_custom_call.1} parent=5 // pred_check
      %p3670 = pneg %p3669
    $region38: #{tpu_custom_call.1} parent=5 // pred_check_branch
      %3672 = sbr.rel (%p3670) target = $region40
    $region39: #{tpu_custom_call.1} parent=5 // pred_region
      %s3673 = ssub.s32 %s9, 2
      // Predicated region
      $region41: #{tpu_custom_call.1} parent=39 // pred_check
        %p3674 = pneg %p120
      $region42: #{tpu_custom_call.1} parent=39 // pred_check_branch
        %3676 = sbr.rel (%p3674) target = $region44
      $region43: #{tpu_custom_call.1} parent=39 // pred_region
        %s3677 = smul.u32 36, %s21
        %p3678 = scmp.lt.s32.totalorder %s20, 1
        %s3679 = scalar_select %p3678, %s20, 1
        %p3680 = scmp.lt.s32.totalorder %s3677, 35
        %s3681 = scalar_select %p3680, %s3677, 35
        %s3682 = smul.addr %s3679, 36
        %s3683 = sadd.s32 %s3681, %s3682
        %s3684 = smul.addr %s3683, 8
        %s3685 = scalar_lea.vmem %s3, %s3684
      $region44: #{tpu_custom_call.1} parent=39 // pred_fallthru
        _
    $region40: #{tpu_custom_call.1} parent=5 // pred_fallthru
      _
  $region6: #{tpu_custom_call.1} parent=0 // loop_footer
    %s13 = sadd.s32 1, %s9
  $region7: #{tpu_custom_call.1} parent=0 // loop_footer_branch
    %8 = sbr.rel target = $region3
  $region8: #{tpu_custom_call.1} parent=0 // loop_exit
    _

</llo_original>
